<compile_context>
chip_gen: v6e
topology: v6e:2x2x1
jax: 0.10.0
libtpu: 0.0.40
codegen_flags: <defaults>
</compile_context>

<pallas_src>
import functools

import jax
import jax.numpy as jnp
from jax import lax
from jax.experimental import pallas as pl
from jax.experimental.pallas import tpu as pltpu


def _pick_tile_hw(hw, batch, target=32768):
    """Largest lane-dense tile (multiple of 128) that divides hw, capped at target.

    Both kernels are HBM-bound, so big tiles amortize the ~0.35us/step pipeline
    overhead (target raised to 32768 per review; ~10.5 MB/step for kernel 2 at
    T=32768 stays well inside every chip's scoped VMEM).  When batch == 1 we
    cap the tile so the grid keeps >= 2 parallel steps for v7x's two cores.
    """
    if batch == 1 and hw >= 256:
        half = (hw // 2 // 128) * 128
        if half >= 128:
            target = min(target, half)
    if hw <= target:
        return hw
    t = (target // 128) * 128
    while t >= 128:
        if hw % t == 0:
            return t
        t -= 128
    return hw  # full axis is always a legal block


# ----------------------------------------------------------------------------
# Kernel 1: conv1(1x1) -> ReLU -> conv2(1x1); channels on sublanes, flattened
#           spatial on lanes.
# ----------------------------------------------------------------------------
def _stem_kernel(x_ref, w1_ref, b1_ref, w2_ref, b2_ref, o_ref):
    x = x_ref[...]                                                    # (Cin, T)
    h = jnp.dot(w1_ref[...], x, preferred_element_type=jnp.float32) + b1_ref[...]
    h = jnp.maximum(h, 0.0)                                           # ReLU
    y = jnp.dot(w2_ref[...], h, preferred_element_type=jnp.float32) + b2_ref[...]
    o_ref[...] = y.astype(o_ref.dtype)


def stem_conv(x, w1, b1, w2, b2, *, tile_hw=None):
    b, cin, hw = x.shape
    cout = w1.shape[0]
    t = _pick_tile_hw(hw, b) if tile_hw is None else tile_hw
    assert hw % t == 0
    return pl.pallas_call(
        _stem_kernel,
        out_shape=jax.ShapeDtypeStruct((b, cout, hw), jnp.float32),
        grid_spec=pltpu.PrefetchScalarGridSpec(
            num_scalar_prefetch=0,
            grid=(b, hw // t),
            in_specs=[
                pl.BlockSpec((pl.Squeezed(), cin, t), lambda bi, si: (bi, 0, si)),
                pl.BlockSpec((cout, cin), lambda bi, si: (0, 0)),
                pl.BlockSpec((cout, 1), lambda bi, si: (0, 0)),
                pl.BlockSpec((cout, cout), lambda bi, si: (0, 0)),
                pl.BlockSpec((cout, 1), lambda bi, si: (0, 0)),
            ],
            out_specs=pl.BlockSpec((pl.Squeezed(), cout, t),
                                   lambda bi, si: (bi, 0, si)),
        ),
        compiler_params=pltpu.CompilerParams(
            dimension_semantics=("parallel", "parallel")),
    )(x, w1, b1, w2, b2)


# ----------------------------------------------------------------------------
# Kernel 2: |fft2(x)| from (re, im), in-register 4-corner low-pass mask
#           (un-shifted frequency coordinates), attention 1x1 convs, channel
#           softmax (approx reciprocal), recombination and cos/sin phase
#           modulation.  The low-pass branch is skipped on tiles that cannot
#           intersect the box.
# ----------------------------------------------------------------------------
def _afa_kernel(re_ref, im_ref, ph_ref, wl_ref, wh_ref, real_ref, imag_ref,
                *, h, w, rh, rw, tile, box_mode, k_lo, k_hi):
    re = re_ref[...]                                                  # (C, T)
    im = im_ref[...]
    mag = jnp.sqrt(re * re + im * im)          # |fft2(x)| (un-shifted coords)

    def _softmax_ch(logits):                   # channel axis = sublane axis 0
        m = jnp.max(logits, axis=0, keepdims=True)
        e = jnp.exp(logits - m)
        return e * pl.reciprocal(jnp.sum(e, axis=0, keepdims=True), approx=True)

    def _epilogue(mag_out):
        ph = ph_ref[...]
        real_ref[...] = (mag_out * jnp.cos(ph)).astype(real_ref.dtype)
        imag_ref[...] = (mag_out * jnp.sin(ph)).astype(imag_ref.dtype)

    def _high_only():
        # low_pass == 0 on this tile -> mag_out == softmax(wh@mag) * mag exactly.
        ha = _softmax_ch(jnp.dot(wh_ref[...], mag,
                                 preferred_element_type=jnp.float32))
        return ha * mag

    def _with_box():
        flat = (pl.program_id(1) * tile
                + lax.broadcasted_iota(jnp.int32, (1, tile), 1))
        if (w & (w - 1)) == 0:
            # Power-of-two W: constant-cost 4-corner test (a handful of VPU ops
            # regardless of rh/rw).
            row_sel = (flat < rh * w) | (flat >= (h - rh) * w)
            col = flat & (w - 1)
            col_sel = (col < rw) | (col >= w - rw)
            inside = row_sel & col_sel
        else:
            # Non-pow2 fallback: unrolled per-row run compares (trace-time
            # constants, no div/mod needed in-kernel).
            runs = []
            for r in list(range(rh)) + list(range(h - rh, h)):
                runs.append((r * w, rw))
                runs.append((r * w + w - rw, rw))
            inside = functools.reduce(
                lambda a, b: a | b,
                [(flat >= s) & (flat < s + n) for s, n in runs])
        low = mag * inside.astype(jnp.float32)
        high = mag - low
        la = _softmax_ch(jnp.dot(wl_ref[...], low,
                                 preferred_element_type=jnp.float32))
        ha = _softmax_ch(jnp.dot(wh_ref[...], high,
                                 preferred_element_type=jnp.float32))
        return la * low + ha * high

    if box_mode == "never":            # empty cut-on box
        _epilogue(_high_only())
    elif box_mode == "always":         # every tile intersects the box
        _epilogue(_with_box())
    else:                              # "mixed": runtime-skip the low branch
        si = pl.program_id(1)
        in_box = (si < k_lo) | (si >= k_hi)

        @pl.when(in_box)
        def _():
            _epilogue(_with_box())

        @pl.when(jnp.logical_not(in_box))
        def _():
            _epilogue(_high_only())


def afa_attend(re, im, phase, wl, wh, *, h, w, rh, rw, tile_hw=None):
    b, c, hw = re.shape
    assert hw == h * w
    t = _pick_tile_hw(hw, b) if tile_hw is None else tile_hw
    assert hw % t == 0
    n_tiles = hw // t

    # Which spatial tiles can intersect the (un-shifted) 4-corner box?  Only
    # tiles touching the first rh rows (flat < rh*w) or the last rh rows
    # (flat >= (h-rh)*w).  All python ints -> baked into the kernel.
    if rh > 0 and rw > 0:
        k_lo = -(-(rh * w) // t)              # tiles si < k_lo touch the top rows
        k_hi = ((h - rh) * w) // t            # tiles si >= k_hi touch the bottom rows
        box_mode = "always" if min(k_hi, n_tiles) <= max(k_lo, 0) else "mixed"
    else:
        box_mode, k_lo, k_hi = "never", 0, 0

    kern = functools.partial(_afa_kernel, h=h, w=w, rh=rh, rw=rw, tile=t,
                             box_mode=box_mode, k_lo=k_lo, k_hi=k_hi)
    data_spec = pl.BlockSpec((pl.Squeezed(), c, t), lambda bi, si: (bi, 0, si))
    w_spec = pl.BlockSpec((c, c), lambda bi, si: (0, 0))
    return pl.pallas_call(
        kern,
        out_shape=(jax.ShapeDtypeStruct((b, c, hw), jnp.float32),
                   jax.ShapeDtypeStruct((b, c, hw), jnp.float32)),
        grid_spec=pltpu.PrefetchScalarGridSpec(
            num_scalar_prefetch=0,
            grid=(b, n_tiles),
            in_specs=[data_spec, data_spec, data_spec, w_spec, w_spec],
            out_specs=[data_spec, data_spec],
        ),
        compiler_params=pltpu.CompilerParams(
            dimension_semantics=("parallel", "parallel")),
    )(re, im, phase, wl, wh)


# ----------------------------------------------------------------------------
# Full forward (wrapper).  FFT ops stay in plain JAX.
# ----------------------------------------------------------------------------
def init_params(key, in_channels, out_channels):
    ks = jax.random.split(key, 6)
    return {
        "conv1_w": jax.random.normal(ks[0], (out_channels, in_channels, 1, 1), jnp.float32) * 0.5,
        "conv1_b": jax.random.normal(ks[1], (out_channels,), jnp.float32) * 0.1,
        "conv2_w": jax.random.normal(ks[2], (out_channels, out_channels, 1, 1), jnp.float32) * 0.5,
        "conv2_b": jax.random.normal(ks[3], (out_channels,), jnp.float32) * 0.1,
        "low_attention_weight": jax.random.normal(ks[4], (out_channels, out_channels, 1, 1), jnp.float32),
        "high_attention_weight": jax.random.normal(ks[5], (out_channels, out_channels, 1, 1), jnp.float32),
    }


@jax.jit
def phase_afa_forward(student_feature, teacher_phase, params):
    # student_feature: (B, Cin, H, W) NCHW; teacher_phase: (B, Cout, H, W) NCHW
    b, cin, h, w = student_feature.shape
    cout = params["conv1_w"].shape[0]
    cuton = 0.1

    # Weights in (Cout, Cin) orientation: matmul is W @ X (channels on sublanes).
    w1 = params["conv1_w"][:, :, 0, 0]
    b1 = params["conv1_b"][:, None]
    w2 = params["conv2_w"][:, :, 0, 0]
    b2 = params["conv2_b"][:, None]
    wl = params["low_attention_weight"][:, :, 0, 0]
    wh = params["high_attention_weight"][:, :, 0, 0]

    # ---- conv1 -> relu -> conv2 (Pallas kernel 1), NCHW kept: (B, C, H*W) ----
    x_flat = student_feature.reshape(b, cin, h * w)
    y_flat = stem_conv(x_flat, w1, b1, w2, b2)
    y = y_flat.reshape(b, cout, h, w)

    # ---- FFT ----
    # TODO(synk): fft2/ifft2 and the complex (de)interleave have no Pallas TPU
    # equivalent; they run in plain JAX.
    x_ft = jnp.fft.fft2(y, norm="ortho")

    # The torch module does fftshift(ALL axes) -> mask/attn/phase -> ifftshift.
    # Those two complex64 roll passes are folded away exactly by working in
    # un-shifted frequency coordinates:
    #   * centred box  -> 4-corner mask (built in-register inside kernel 2),
    #   * (C,C) attention weights rolled by C//2 on both indices (accounts for
    #     the channel roll of the all-axes shift),
    #   * teacher_phase gets a single f32 ifftshift instead (one HBM pass
    #     instead of two complex passes).
    re = jnp.real(x_ft).reshape(b, cout, h * w)
    im = jnp.imag(x_ft).reshape(b, cout, h * w)

    s_c = cout // 2
    wl_r = jnp.roll(wl, shift=(-s_c, -s_c), axis=(0, 1))
    wh_r = jnp.roll(wh, shift=(-s_c, -s_c), axis=(0, 1))
    ph_flat = jnp.fft.ifftshift(teacher_phase).reshape(b, cout, h * w)

    cy, cx = int(h / 2), int(w / 2)
    rh, rw = int(cuton * cy), int(cuton * cx)

    # ---- mask + attention + recombination + phase modulation (kernel 2) ----
    real_flat, imag_flat = afa_attend(re, im, ph_flat, wl_r, wh_r,
                                      h=h, w=w, rh=rh, rw=rw)

    x_fft = lax.complex(real_flat, imag_flat).reshape(b, cout, h, w)

    # ---- inverse FFT (no ifftshift needed: already in un-shifted coords) ----
    return jnp.fft.ifft2(x_fft, s=(h, w), norm="ortho").real   # already NCHW


# ----------------------------------------------------------------------------
# Pure-JAX reference of the same forward, faithful to the torch module
# (explicit all-axes fftshift / ifftshift).  Used as correctness oracle.
# ----------------------------------------------------------------------------
def phase_afa_reference(student_feature, teacher_phase, params):
    b, cin, h, w = student_feature.shape
    cuton = 0.1
    hp = jax.lax.Precision.HIGHEST

    x = jnp.einsum("bchw,oc->bohw", student_feature, params["conv1_w"][:, :, 0, 0],
                   precision=hp) + params["conv1_b"][None, :, None, None]
    x = jnp.maximum(x, 0.0)
    x = jnp.einsum("bchw,oc->bohw", x, params["conv2_w"][:, :, 0, 0],
                   precision=hp) + params["conv2_b"][None, :, None, None]

    x_ft = jnp.fft.fft2(x, norm="ortho")
    x_shift = jnp.fft.fftshift(x_ft)
    magnitude = jnp.abs(x_shift)
    cy, cx = int(h / 2), int(w / 2)
    rh, rw = int(cuton * cy), int(cuton * cx)
    low_pass = jnp.zeros_like(magnitude)
    low_pass = low_pass.at[:, :, cy - rh:cy + rh, cx - rw:cx + rw].set(
        magnitude[:, :, cy - rh:cy + rh, cx - rw:cx + rw])
    high_pass = magnitude - low_pass
    low_attn = jnp.einsum("bchw,oc->bohw", low_pass,
                          params["low_attention_weight"][:, :, 0, 0], precision=hp)
    high_attn = jnp.einsum("bchw,oc->bohw", high_pass,
                           params["high_attention_weight"][:, :, 0, 0], precision=hp)
    low_attn = jax.nn.softmax(low_attn, axis=1)
    high_attn = jax.nn.softmax(high_attn, axis=1)
    mag_out = low_attn * low_pass + high_attn * high_pass
    real = mag_out * jnp.cos(teacher_phase)
    imag = mag_out * jnp.sin(teacher_phase)
    fre_out = lax.complex(real, imag)
    x_fft = jnp.fft.ifftshift(fre_out)
    return jnp.fft.ifft2(x_fft, s=(h, w), norm="ortho").real


if __name__ == "__main__":
    B, Cin, Cout, H, W = 2, 4, 8, 32, 32

    key = jax.random.PRNGKey(0)
    k_param, k_x, k_p = jax.random.split(key, 3)
    params = init_params(k_param, Cin, Cout)
    student_feature = jax.random.normal(k_x, (B, Cin, H, W), jnp.float32)
    teacher_phase = jax.random.uniform(k_p, (B, Cout, H, W), jnp.float32,
                                       minval=-3.14159, maxval=3.14159)

    out = jax.block_until_ready(phase_afa_forward(student_feature, teacher_phase, params))
    ref = jax.block_until_ready(phase_afa_reference(student_feature, teacher_phase, params))

    assert out.shape == (B, Cout, H, W)
    assert bool(jnp.all(jnp.isfinite(out)))
    assert bool(jnp.allclose(out, ref, rtol=2e-2, atol=2e-2)), "mismatch vs reference"

    print("KERNEL_OK")
</pallas_src>

<mosaic_0001>
module attributes {stable_mosaic.version = 11 : i64} {
  func.func @_stem_kernel(%arg0: i32, %arg1: i32, %arg2: memref<1x4x1024xf32, #tpu.memory_space<vmem>>, %arg3: memref<8x4xf32, #tpu.memory_space<vmem>>, %arg4: memref<8x1xf32, #tpu.memory_space<vmem>>, %arg5: memref<8x8xf32, #tpu.memory_space<vmem>>, %arg6: memref<8x1xf32, #tpu.memory_space<vmem>>, %arg7: memref<1x8x1024xf32, #tpu.memory_space<vmem>>) attributes {dimension_semantics = [#tpu.dimension_semantics<parallel>, #tpu.dimension_semantics<parallel>], iteration_bounds = array<i64: 2, 1>, scalar_prefetch = 0 : i64, scratch_operands = 0 : i64, tpu.core_type = #tpu.core_type<tc>, window_params = [{transform_indices = @transform_0, window_bounds = array<i64: 1, 4, 1024>}, {pipeline_mode = #tpu.pipeline_mode<synchronous>, transform_indices = @transform_1, window_bounds = array<i64: 8, 4>}, {pipeline_mode = #tpu.pipeline_mode<synchronous>, transform_indices = @transform_2, window_bounds = array<i64: 8, 1>}, {pipeline_mode = #tpu.pipeline_mode<synchronous>, transform_indices = @transform_3, window_bounds = array<i64: 8, 8>}, {pipeline_mode = #tpu.pipeline_mode<synchronous>, transform_indices = @transform_4, window_bounds = array<i64: 8, 1>}, {transform_indices = @transform_5, window_bounds = array<i64: 1, 8, 1024>}]} {
    %c0 = arith.constant 0 : index
    %c0_0 = arith.constant 0 : index
    %c0_1 = arith.constant 0 : index
    %0 = vector.load %arg2[%c0, %c0_0, %c0_1] : memref<1x4x1024xf32, #tpu.memory_space<vmem>>, vector<1x4x1024xf32>
    %1 = vector.shape_cast %0 : vector<1x4x1024xf32> to vector<4x1024xf32>
    %c0_2 = arith.constant 0 : index
    %c0_3 = arith.constant 0 : index
    %2 = vector.load %arg3[%c0_2, %c0_3] : memref<8x4xf32, #tpu.memory_space<vmem>>, vector<8x4xf32>
    %cst = arith.constant dense<0.000000e+00> : vector<8x1024xf32>
    %3 = tpu.matmul %2, %1, %cst {dimension_numbers = #tpu.dot_dimension_numbers<[1], [0], [0], [1], [0, 0, 1, 1], [], []>} : vector<8x4xf32>, vector<4x1024xf32>, vector<8x1024xf32> -> vector<8x1024xf32>
    %c0_4 = arith.constant 0 : index
    %c0_5 = arith.constant 0 : index
    %4 = vector.load %arg4[%c0_4, %c0_5] : memref<8x1xf32, #tpu.memory_space<vmem>>, vector<8x1xf32>
    %5 = vector.broadcast %4 : vector<8x1xf32> to vector<8x1024xf32>
    %6 = arith.addf %3, %5 : vector<8x1024xf32>
    %cst_6 = arith.constant 0.000000e+00 : f32
    %7 = vector.broadcast %cst_6 : f32 to vector<8x1024xf32>
    %8 = arith.maximumf %6, %7 : vector<8x1024xf32>
    %c0_7 = arith.constant 0 : index
    %c0_8 = arith.constant 0 : index
    %9 = vector.load %arg5[%c0_7, %c0_8] : memref<8x8xf32, #tpu.memory_space<vmem>>, vector<8x8xf32>
    %cst_9 = arith.constant dense<0.000000e+00> : vector<8x1024xf32>
    %10 = tpu.matmul %9, %8, %cst_9 {dimension_numbers = #tpu.dot_dimension_numbers<[1], [0], [0], [1], [0, 0, 1, 1], [], []>} : vector<8x8xf32>, vector<8x1024xf32>, vector<8x1024xf32> -> vector<8x1024xf32>
    %c0_10 = arith.constant 0 : index
    %c0_11 = arith.constant 0 : index
    %11 = vector.load %arg6[%c0_10, %c0_11] : memref<8x1xf32, #tpu.memory_space<vmem>>, vector<8x1xf32>
    %12 = vector.broadcast %11 : vector<8x1xf32> to vector<8x1024xf32>
    %13 = arith.addf %10, %12 : vector<8x1024xf32>
    %c0_12 = arith.constant 0 : index
    %c0_13 = arith.constant 0 : index
    %c0_14 = arith.constant 0 : index
    %14 = vector.load %arg7[%c0_12, %c0_13, %c0_14] : memref<1x8x1024xf32, #tpu.memory_space<vmem>>, vector<1x8x1024xf32>
    %15 = vector.shape_cast %14 : vector<1x8x1024xf32> to vector<8x1024xf32>
    %16 = vector.shape_cast %13 : vector<8x1024xf32> to vector<1x8x1024xf32>
    tpu.vector_store %arg7[%c0_12, %c0_13, %c0_14], %16 {strides = array<i32>} : memref<1x8x1024xf32, #tpu.memory_space<vmem>>, vector<1x8x1024xf32>,
    return
  }
  func.func @transform_0(%arg0: i32, %arg1: i32) -> (i32, i32, i32) {
    %c0_i32 = arith.constant 0 : i32
    %c0_i32_0 = arith.constant 0 : i32
    return %arg0, %c0_i32, %arg1 : i32, i32, i32
  }
  func.func @transform_1(%arg0: i32, %arg1: i32) -> (i32, i32) {
    %c0_i32 = arith.constant 0 : i32
    %c0_i32_0 = arith.constant 0 : i32
    %c0_i32_1 = arith.constant 0 : i32
    return %c0_i32, %c0_i32_0 : i32, i32
  }
  func.func @transform_2(%arg0: i32, %arg1: i32) -> (i32, i32) {
    %c0_i32 = arith.constant 0 : i32
    %c0_i32_0 = arith.constant 0 : i32
    %c0_i32_1 = arith.constant 0 : i32
    return %c0_i32, %c0_i32_0 : i32, i32
  }
  func.func @transform_3(%arg0: i32, %arg1: i32) -> (i32, i32) {
    %c0_i32 = arith.constant 0 : i32
    %c0_i32_0 = arith.constant 0 : i32
    %c0_i32_1 = arith.constant 0 : i32
    return %c0_i32, %c0_i32_0 : i32, i32
  }
  func.func @transform_4(%arg0: i32, %arg1: i32) -> (i32, i32) {
    %c0_i32 = arith.constant 0 : i32
    %c0_i32_0 = arith.constant 0 : i32
    %c0_i32_1 = arith.constant 0 : i32
    return %c0_i32, %c0_i32_0 : i32, i32
  }
  func.func @transform_5(%arg0: i32, %arg1: i32) -> (i32, i32, i32) {
    %c0_i32 = arith.constant 0 : i32
    %c0_i32_0 = arith.constant 0 : i32
    return %arg0, %c0_i32, %arg1 : i32, i32, i32
  }
}

module attributes {stable_mosaic.version = 11 : i64} {
  func.func @_afa_kernel(%arg0: i32, %arg1: i32, %arg2: memref<1x8x1024xf32, #tpu.memory_space<vmem>>, %arg3: memref<1x8x1024xf32, #tpu.memory_space<vmem>>, %arg4: memref<1x8x1024xf32, #tpu.memory_space<vmem>>, %arg5: memref<8x8xf32, #tpu.memory_space<vmem>>, %arg6: memref<8x8xf32, #tpu.memory_space<vmem>>, %arg7: memref<1x8x1024xf32, #tpu.memory_space<vmem>>, %arg8: memref<1x8x1024xf32, #tpu.memory_space<vmem>>) attributes {dimension_semantics = [#tpu.dimension_semantics<parallel>, #tpu.dimension_semantics<parallel>], iteration_bounds = array<i64: 2, 1>, scalar_prefetch = 0 : i64, scratch_operands = 0 : i64, tpu.core_type = #tpu.core_type<tc>, window_params = [{transform_indices = @transform_0, window_bounds = array<i64: 1, 8, 1024>}, {transform_indices = @transform_1, window_bounds = array<i64: 1, 8, 1024>}, {transform_indices = @transform_2, window_bounds = array<i64: 1, 8, 1024>}, {pipeline_mode = #tpu.pipeline_mode<synchronous>, transform_indices = @transform_3, window_bounds = array<i64: 8, 8>}, {pipeline_mode = #tpu.pipeline_mode<synchronous>, transform_indices = @transform_4, window_bounds = array<i64: 8, 8>}, {transform_indices = @transform_5, window_bounds = array<i64: 1, 8, 1024>}, {transform_indices = @transform_6, window_bounds = array<i64: 1, 8, 1024>}]} {
    %c0 = arith.constant 0 : index
    %c0_0 = arith.constant 0 : index
    %c0_1 = arith.constant 0 : index
    %0 = vector.load %arg2[%c0, %c0_0, %c0_1] : memref<1x8x1024xf32, #tpu.memory_space<vmem>>, vector<1x8x1024xf32>
    %1 = vector.shape_cast %0 : vector<1x8x1024xf32> to vector<8x1024xf32>
    %c0_2 = arith.constant 0 : index
    %c0_3 = arith.constant 0 : index
    %c0_4 = arith.constant 0 : index
    %2 = vector.load %arg3[%c0_2, %c0_3, %c0_4] : memref<1x8x1024xf32, #tpu.memory_space<vmem>>, vector<1x8x1024xf32>
    %3 = vector.shape_cast %2 : vector<1x8x1024xf32> to vector<8x1024xf32>
    %4 = arith.mulf %1, %1 : vector<8x1024xf32>
    %5 = arith.mulf %3, %3 : vector<8x1024xf32>
    %6 = arith.addf %4, %5 : vector<8x1024xf32>
    %7 = math.sqrt %6 : vector<8x1024xf32>
    %c1024_i32 = arith.constant 1024 : i32
    %8 = arith.muli %arg1, %c1024_i32 : i32
    %9 = tpu.iota {dimensions = array<i32: 1>} : vector<1x1024xi32>
    %10 = vector.broadcast %8 : i32 to vector<1x1024xi32>
    %11 = arith.addi %10, %9 : vector<1x1024xi32>
    %c32_i32 = arith.constant 32 : i32
    %12 = vector.broadcast %c32_i32 : i32 to vector<1x1024xi32>
    %13 = arith.cmpi slt, %11, %12 : vector<1x1024xi32>
    %c992_i32 = arith.constant 992 : i32
    %14 = vector.broadcast %c992_i32 : i32 to vector<1x1024xi32>
    %15 = arith.cmpi sge, %11, %14 : vector<1x1024xi32>
    %16 = arith.ori %13, %15 : vector<1x1024xi1>
    %c31_i32 = arith.constant 31 : i32
    %17 = vector.broadcast %c31_i32 : i32 to vector<1x1024xi32>
    %18 = arith.andi %11, %17 : vector<1x1024xi32>
    %c1_i32 = arith.constant 1 : i32
    %19 = vector.broadcast %c1_i32 : i32 to vector<1x1024xi32>
    %20 = arith.cmpi slt, %18, %19 : vector<1x1024xi32>
    %c31_i32_5 = arith.constant 31 : i32
    %21 = vector.broadcast %c31_i32_5 : i32 to vector<1x1024xi32>
    %22 = arith.cmpi sge, %18, %21 : vector<1x1024xi32>
    %23 = arith.ori %20, %22 : vector<1x1024xi1>
    %24 = arith.andi %16, %23 : vector<1x1024xi1>
    %25 = arith.extui %24 : vector<1x1024xi1> to vector<1x1024xi32>
    %26 = arith.sitofp %25 : vector<1x1024xi32> to vector<1x1024xf32>
    %27 = vector.broadcast %26 : vector<1x1024xf32> to vector<8x1024xf32>
    %28 = arith.mulf %7, %27 : vector<8x1024xf32>
    %29 = arith.subf %7, %28 : vector<8x1024xf32>
    %c0_6 = arith.constant 0 : index
    %c0_7 = arith.constant 0 : index
    %30 = vector.load %arg5[%c0_6, %c0_7] : memref<8x8xf32, #tpu.memory_space<vmem>>, vector<8x8xf32>
    %cst = arith.constant dense<0.000000e+00> : vector<8x1024xf32>
    %31 = tpu.matmul %30, %28, %cst {dimension_numbers = #tpu.dot_dimension_numbers<[1], [0], [0], [1], [0, 0, 1, 1], [], []>} : vector<8x8xf32>, vector<8x1024xf32>, vector<8x1024xf32> -> vector<8x1024xf32>
    %cst_8 = arith.constant dense<0xFF800000> : vector<1024xf32>
    %32 = vector.multi_reduction <maximumf>, %31, %cst_8 [0] : vector<8x1024xf32> to vector<1024xf32>
    %33 = vector.shape_cast %32 : vector<1024xf32> to vector<1x1024xf32>
    %34 = vector.broadcast %33 : vector<1x1024xf32> to vector<8x1024xf32>
    %35 = arith.subf %31, %34 : vector<8x1024xf32>
    %36 = math.exp %35 : vector<8x1024xf32>
    %cst_9 = arith.constant dense<0.000000e+00> : vector<1024xf32>
    %37 = vector.multi_reduction <add>, %36, %cst_9 [0] : vector<8x1024xf32> to vector<1024xf32>
    %38 = vector.shape_cast %37 : vector<1024xf32> to vector<1x1024xf32>
    %39 = tpu.reciprocal %38 {approx = true} : vector<1x1024xf32> -> vector<1x1024xf32>
    %40 = vector.broadcast %39 : vector<1x1024xf32> to vector<8x1024xf32>
    %41 = arith.mulf %36, %40 : vector<8x1024xf32>
    %c0_10 = arith.constant 0 : index
    %c0_11 = arith.constant 0 : index
    %42 = vector.load %arg6[%c0_10, %c0_11] : memref<8x8xf32, #tpu.memory_space<vmem>>, vector<8x8xf32>
    %cst_12 = arith.constant dense<0.000000e+00> : vector<8x1024xf32>
    %43 = tpu.matmul %42, %29, %cst_12 {dimension_numbers = #tpu.dot_dimension_numbers<[1], [0], [0], [1], [0, 0, 1, 1], [], []>} : vector<8x8xf32>, vector<8x1024xf32>, vector<8x1024xf32> -> vector<8x1024xf32>
    %cst_13 = arith.constant dense<0xFF800000> : vector<1024xf32>
    %44 = vector.multi_reduction <maximumf>, %43, %cst_13 [0] : vector<8x1024xf32> to vector<1024xf32>
    %45 = vector.shape_cast %44 : vector<1024xf32> to vector<1x1024xf32>
    %46 = vector.broadcast %45 : vector<1x1024xf32> to vector<8x1024xf32>
    %47 = arith.subf %43, %46 : vector<8x1024xf32>
    %48 = math.exp %47 : vector<8x1024xf32>
    %cst_14 = arith.constant dense<0.000000e+00> : vector<1024xf32>
    %49 = vector.multi_reduction <add>, %48, %cst_14 [0] : vector<8x1024xf32> to vector<1024xf32>
    %50 = vector.shape_cast %49 : vector<1024xf32> to vector<1x1024xf32>
    %51 = tpu.reciprocal %50 {approx = true} : vector<1x1024xf32> -> vector<1x1024xf32>
    %52 = vector.broadcast %51 : vector<1x1024xf32> to vector<8x1024xf32>
    %53 = arith.mulf %48, %52 : vector<8x1024xf32>
    %54 = arith.mulf %41, %28 : vector<8x1024xf32>
    %55 = arith.mulf %53, %29 : vector<8x1024xf32>
    %56 = arith.addf %54, %55 : vector<8x1024xf32>
    %c0_15 = arith.constant 0 : index
    %c0_16 = arith.constant 0 : index
    %c0_17 = arith.constant 0 : index
    %57 = vector.load %arg4[%c0_15, %c0_16, %c0_17] : memref<1x8x1024xf32, #tpu.memory_space<vmem>>, vector<1x8x1024xf32>
    %58 = vector.shape_cast %57 : vector<1x8x1024xf32> to vector<8x1024xf32>
    %59 = math.cos %58 : vector<8x1024xf32>
    %60 = arith.mulf %56, %59 : vector<8x1024xf32>
    %c0_18 = arith.constant 0 : index
    %c0_19 = arith.constant 0 : index
    %c0_20 = arith.constant 0 : index
    %61 = vector.load %arg7[%c0_18, %c0_19, %c0_20] : memref<1x8x1024xf32, #tpu.memory_space<vmem>>, vector<1x8x1024xf32>
    %62 = vector.shape_cast %61 : vector<1x8x1024xf32> to vector<8x1024xf32>
    %63 = vector.shape_cast %60 : vector<8x1024xf32> to vector<1x8x1024xf32>
    tpu.vector_store %arg7[%c0_18, %c0_19, %c0_20], %63 {strides = array<i32>} : memref<1x8x1024xf32, #tpu.memory_space<vmem>>, vector<1x8x1024xf32>,
    %64 = math.sin %58 : vector<8x1024xf32>
    %65 = arith.mulf %56, %64 : vector<8x1024xf32>
    %c0_21 = arith.constant 0 : index
    %c0_22 = arith.constant 0 : index
    %c0_23 = arith.constant 0 : index
    %66 = vector.load %arg8[%c0_21, %c0_22, %c0_23] : memref<1x8x1024xf32, #tpu.memory_space<vmem>>, vector<1x8x1024xf32>
    %67 = vector.shape_cast %66 : vector<1x8x1024xf32> to vector<8x1024xf32>
    %68 = vector.shape_cast %65 : vector<8x1024xf32> to vector<1x8x1024xf32>
    tpu.vector_store %arg8[%c0_21, %c0_22, %c0_23], %68 {strides = array<i32>} : memref<1x8x1024xf32, #tpu.memory_space<vmem>>, vector<1x8x1024xf32>,
    return
  }
  func.func @transform_0(%arg0: i32, %arg1: i32) -> (i32, i32, i32) {
    %c0_i32 = arith.constant 0 : i32
    %c0_i32_0 = arith.constant 0 : i32
    return %arg0, %c0_i32, %arg1 : i32, i32, i32
  }
  func.func @transform_1(%arg0: i32, %arg1: i32) -> (i32, i32, i32) {
    %c0_i32 = arith.constant 0 : i32
    %c0_i32_0 = arith.constant 0 : i32
    return %arg0, %c0_i32, %arg1 : i32, i32, i32
  }
  func.func @transform_2(%arg0: i32, %arg1: i32) -> (i32, i32, i32) {
    %c0_i32 = arith.constant 0 : i32
    %c0_i32_0 = arith.constant 0 : i32
    return %arg0, %c0_i32, %arg1 : i32, i32, i32
  }
  func.func @transform_3(%arg0: i32, %arg1: i32) -> (i32, i32) {
    %c0_i32 = arith.constant 0 : i32
    %c0_i32_0 = arith.constant 0 : i32
    %c0_i32_1 = arith.constant 0 : i32
    return %c0_i32, %c0_i32_0 : i32, i32
  }
  func.func @transform_4(%arg0: i32, %arg1: i32) -> (i32, i32) {
    %c0_i32 = arith.constant 0 : i32
    %c0_i32_0 = arith.constant 0 : i32
    %c0_i32_1 = arith.constant 0 : i32
    return %c0_i32, %c0_i32_0 : i32, i32
  }
  func.func @transform_5(%arg0: i32, %arg1: i32) -> (i32, i32, i32) {
    %c0_i32 = arith.constant 0 : i32
    %c0_i32_0 = arith.constant 0 : i32
    return %arg0, %c0_i32, %arg1 : i32, i32, i32
  }
  func.func @transform_6(%arg0: i32, %arg1: i32) -> (i32, i32, i32) {
    %c0_i32 = arith.constant 0 : i32
    %c0_i32_0 = arith.constant 0 : i32
    return %arg0, %c0_i32, %arg1 : i32, i32, i32
  }
}

</mosaic_0001>

<llo_original>
// kernel: phase_afa_forward.2
$region0: #{phase_afa_forward.2}
  #allocation0 [shape = 'u32[]', space=smem, size = 0x4, offset = 0x4, fixed_abs, tag = 'smem constant byte address 0x4 - core index']
  #allocation1 [shape = 'u32[144,128]{1,0:T(1,128)}', space=vmem, size = 0x12000, scoped, tag = 'internal scratch']
  %s0 = inlined_call_operand.vmem [shape: f32[2,4,1024], index: 0, kind: input, shape index: {}]
  %s1 = inlined_call_operand.vmem [shape: f32[8,4], index: 1, kind: input, shape index: {}]
  %s2 = inlined_call_operand.vmem [shape: f32[8,1], index: 2, kind: input, shape index: {}]
  %s3 = inlined_call_operand.vmem [shape: f32[8,8], index: 3, kind: input, shape index: {}]
  %s4 = inlined_call_operand.vmem [shape: f32[8,1], index: 4, kind: input, shape index: {}]
  %s5 = inlined_call_operand.vmem [shape: f32[2,8,1024], index: 5, kind: output, shape index: {}]
  %s6 = sld [smem:[#allocation0]]
  $region53: #{phase_afa_forward.2} parent=0
    _
  %s8 = ssub.s32 1, %s6
  %s9 = scalar_select 0, %s8, %s6
  loop: start=0, step=1, limit=4
  $region2: #{phase_afa_forward.2} parent=0 // loop_pre_header
    _
  $region3: #{phase_afa_forward.2} parent=0 // loop_header
    %s11 = sphi 0, %s15
    %p12 = scmp.ge.s32.totalorder %s11, 4
    %s18 = sphi 0, %s30
    %s19 = sphi 0, %s26
    %s20 = sphi 0, %s18
    %s21 = sphi 0, %s19
    %s22 = sphi 0, %s20
    %s23 = sphi 0, %s21
    %s35 = sphi 0, %s37
    %s38 = sphi 0, %s35
    %s39 = sphi 0, %s38
    %s55 = sphi 0, %s39
    %s59 = sphi 0, %s59
    %s61 = sphi 0, %s59
    %s62 = sphi 0, %s61
    %s76 = sphi 0, %s62
    %s80 = sphi 0, %s80
    %s82 = sphi 0, %s80
    %s83 = sphi 0, %s82
    %s97 = sphi 0, %s83
    %s101 = sphi 0, %s101
    %s103 = sphi 0, %s101
    %s104 = sphi 0, %s103
    %s118 = sphi 0, %s104
    %s122 = sphi 0, %s122
    %s124 = sphi 0, %s122
    %s125 = sphi 0, %s124
    %s139 = sphi 0, %s125
    %s147 = sphi 0, %s149
    %s150 = sphi 0, %s147
    %s151 = sphi 0, %s150
    %s167 = sphi 0, %s151
  $region4: #{phase_afa_forward.2} parent=0 // loop_header_branch
    %14 = sbr.rel (%p12) target = $region8
  $region5: #{phase_afa_forward.2} parent=0 // loop_body
    %s16 = ssub.s32 %s11, 1
    %s17 = ssub.s32 %s11, 2
    %s24 = sadd.s32 1, %s19
    %p25 = scmp.ge.s32.totalorder %s24, 1
    %s26 = scalar_select %p25, 0, %s24
    %s27 = sadd.s32 1, %s18
    %s28 = scalar_select %p25, %s27, %s18
    %p29 = scmp.ge.s32.totalorder %s28, 2
    %s30 = scalar_select %p29, 0, %s28
    %s31 = ssub.s32 %s18, %s30
    %s32 = ssub.s32 %s19, %s26
    %s33 = sor.u32 %s31, %s32
    %p34 = scmp.eq.s32.totalorder %s33, 0
    %s36 = sadd.s32 %s35, 1
    %s37 = scalar_select %p34, %s35, %s36
    %p40 = pneg %p34
    %p41 = scmp.eq.s32.totalorder %s11, 1
    %p42 = por %p40, %p41
    %p43 = scmp.ne.s32.totalorder %s35, %s38
    %p44 = scmp.eq.s32.totalorder %s11, 0
    %p45 = por %p43, %p44
    %p46 = scmp.ne.s32.totalorder %s35, %s38
    %p47 = scmp.eq.s32.totalorder %s16, 1
    %p48 = por %p46, %p47
    %p49 = scmp.ne.s32.totalorder %s38, %s39
    %p50 = scmp.eq.s32.totalorder %s16, 0
    %p51 = por %p49, %p50
    %p52 = scmp.ne.s32.totalorder %s38, %s39
    %p53 = scmp.eq.s32.totalorder %s17, 1
    %p54 = por %p52, %p53
    %p56 = scmp.ne.s32.totalorder %s39, %s55
    %p57 = scmp.eq.s32.totalorder %s17, 0
    %p58 = por %p56, %p57
    %s60 = sadd.s32 %s59, 1
    %p63 = scmp.eq.s32.totalorder %s11, 1
    %p64 = scmp.ne.s32.totalorder %s59, %s61
    %p65 = scmp.eq.s32.totalorder %s11, 0
    %p66 = por %p64, %p65
    %p67 = scmp.ne.s32.totalorder %s59, %s61
    %p68 = scmp.eq.s32.totalorder %s16, 1
    %p69 = por %p67, %p68
    %p70 = scmp.ne.s32.totalorder %s61, %s62
    %p71 = scmp.eq.s32.totalorder %s16, 0
    %p72 = por %p70, %p71
    %p73 = scmp.ne.s32.totalorder %s61, %s62
    %p74 = scmp.eq.s32.totalorder %s17, 1
    %p75 = por %p73, %p74
    %p77 = scmp.ne.s32.totalorder %s62, %s76
    %p78 = scmp.eq.s32.totalorder %s17, 0
    %p79 = por %p77, %p78
    %s81 = sadd.s32 %s80, 1
    %p84 = scmp.eq.s32.totalorder %s11, 1
    %p85 = scmp.ne.s32.totalorder %s80, %s82
    %p86 = scmp.eq.s32.totalorder %s11, 0
    %p87 = por %p85, %p86
    %p88 = scmp.ne.s32.totalorder %s80, %s82
    %p89 = scmp.eq.s32.totalorder %s16, 1
    %p90 = por %p88, %p89
    %p91 = scmp.ne.s32.totalorder %s82, %s83
    %p92 = scmp.eq.s32.totalorder %s16, 0
    %p93 = por %p91, %p92
    %p94 = scmp.ne.s32.totalorder %s82, %s83
    %p95 = scmp.eq.s32.totalorder %s17, 1
    %p96 = por %p94, %p95
    %p98 = scmp.ne.s32.totalorder %s83, %s97
    %p99 = scmp.eq.s32.totalorder %s17, 0
    %p100 = por %p98, %p99
    %s102 = sadd.s32 %s101, 1
    %p105 = scmp.eq.s32.totalorder %s11, 1
    %p106 = scmp.ne.s32.totalorder %s101, %s103
    %p107 = scmp.eq.s32.totalorder %s11, 0
    %p108 = por %p106, %p107
    %p109 = scmp.ne.s32.totalorder %s101, %s103
    %p110 = scmp.eq.s32.totalorder %s16, 1
    %p111 = por %p109, %p110
    %p112 = scmp.ne.s32.totalorder %s103, %s104
    %p113 = scmp.eq.s32.totalorder %s16, 0
    %p114 = por %p112, %p113
    %p115 = scmp.ne.s32.totalorder %s103, %s104
    %p116 = scmp.eq.s32.totalorder %s17, 1
    %p117 = por %p115, %p116
    %p119 = scmp.ne.s32.totalorder %s104, %s118
    %p120 = scmp.eq.s32.totalorder %s17, 0
    %p121 = por %p119, %p120
    %s123 = sadd.s32 %s122, 1
    %p126 = scmp.eq.s32.totalorder %s11, 1
    %p127 = scmp.ne.s32.totalorder %s122, %s124
    %p128 = scmp.eq.s32.totalorder %s11, 0
    %p129 = por %p127, %p128
    %p130 = scmp.ne.s32.totalorder %s122, %s124
    %p131 = scmp.eq.s32.totalorder %s16, 1
    %p132 = por %p130, %p131
    %p133 = scmp.ne.s32.totalorder %s124, %s125
    %p134 = scmp.eq.s32.totalorder %s16, 0
    %p135 = por %p133, %p134
    %p136 = scmp.ne.s32.totalorder %s124, %s125
    %p137 = scmp.eq.s32.totalorder %s17, 1
    %p138 = por %p136, %p137
    %p140 = scmp.ne.s32.totalorder %s125, %s139
    %p141 = scmp.eq.s32.totalorder %s17, 0
    %p142 = por %p140, %p141
    %s143 = ssub.s32 %s18, %s30
    %s144 = ssub.s32 %s19, %s26
    %s145 = sor.u32 %s143, %s144
    %p146 = scmp.eq.s32.totalorder %s145, 0
    %s148 = sadd.s32 %s147, 1
    %s149 = scalar_select %p146, %s147, %s148
    %p152 = pneg %p146
    %p153 = scmp.eq.s32.totalorder %s11, 1
    %p154 = por %p152, %p153
    %p155 = scmp.ne.s32.totalorder %s147, %s150
    %p156 = scmp.eq.s32.totalorder %s11, 0
    %p157 = por %p155, %p156
    %p158 = scmp.ne.s32.totalorder %s147, %s150
    %p159 = scmp.eq.s32.totalorder %s16, 1
    %p160 = por %p158, %p159
    %p161 = scmp.ne.s32.totalorder %s150, %s151
    %p162 = scmp.eq.s32.totalorder %s16, 0
    %p163 = por %p161, %p162
    %p164 = scmp.ne.s32.totalorder %s150, %s151
    %p165 = scmp.eq.s32.totalorder %s17, 1
    %p166 = por %p164, %p165
    %p168 = scmp.ne.s32.totalorder %s151, %s167
    %p169 = scmp.eq.s32.totalorder %s17, 0
    %p170 = por %p168, %p169
    %p171 = scmp.le.s32.totalorder 1, %s11
    %p172 = scmp.lt.s32.totalorder %s11, 3
    %p173 = pnand %p171, %p172
    %p174 = pneg %p173
    // Predicated region
    $region9: #{phase_afa_forward.2} parent=5 // pred_check
      _
    $region10: #{phase_afa_forward.2} parent=5 // pred_check_branch
      %176 = sbr.rel (%p173) target = $region12
    $region11: #{phase_afa_forward.2} parent=5 // pred_region
      %s177 = ssub.s32 %s11, 1
      // Predicated region
      $region13: #{phase_afa_forward.2} parent=11 // pred_check
        %p178 = pneg %p72
      $region14: #{phase_afa_forward.2} parent=11 // pred_check_branch
        %180 = sbr.rel (%p178) target = $region16
      $region15: #{phase_afa_forward.2} parent=11 // pred_region
        _
      $region16: #{phase_afa_forward.2} parent=11 // pred_fallthru
        _
      // Predicated region
      $region17: #{phase_afa_forward.2} parent=11 // pred_check
        %p181 = pneg %p93
      $region18: #{phase_afa_forward.2} parent=11 // pred_check_branch
        %183 = sbr.rel (%p181) target = $region20
      $region19: #{phase_afa_forward.2} parent=11 // pred_region
        _
      $region20: #{phase_afa_forward.2} parent=11 // pred_fallthru
        _
      // Predicated region
      $region21: #{phase_afa_forward.2} parent=11 // pred_check
        %p184 = pneg %p114
      $region22: #{phase_afa_forward.2} parent=11 // pred_check_branch
        %186 = sbr.rel (%p184) target = $region24
      $region23: #{phase_afa_forward.2} parent=11 // pred_region
        _
      $region24: #{phase_afa_forward.2} parent=11 // pred_fallthru
        _
      // Predicated region
      $region25: #{phase_afa_forward.2} parent=11 // pred_check
        %p187 = pneg %p135
      $region26: #{phase_afa_forward.2} parent=11 // pred_check_branch
        %189 = sbr.rel (%p187) target = $region28
      $region27: #{phase_afa_forward.2} parent=11 // pred_region
        _
      $region28: #{phase_afa_forward.2} parent=11 // pred_fallthru
        _
    $region12: #{phase_afa_forward.2} parent=5 // pred_fallthru
      _
    %p190 = scmp.lt.s32.totalorder %s11, 2
    // Predicated region
    $region29: #{phase_afa_forward.2} parent=5 // pred_check
      %p191 = pneg %p190
    $region30: #{phase_afa_forward.2} parent=5 // pred_check_branch
      %193 = sbr.rel (%p191) target = $region32
    $region31: #{phase_afa_forward.2} parent=5 // pred_region
      // Predicated region
      $region33: #{phase_afa_forward.2} parent=31 // pred_check
        %p194 = pneg %p45
      $region34: #{phase_afa_forward.2} parent=31 // pred_check_branch
        %196 = sbr.rel (%p194) target = $region36
      $region35: #{phase_afa_forward.2} parent=31 // pred_region
        %s197 = smul.u32 8, %s19
        %p198 = scmp.lt.s32.totalorder %s18, 1
        %s199 = scalar_select %p198, %s18, 1
        %p200 = scmp.lt.s32.totalorder %s197, 7
        %s201 = scalar_select %p200, %s197, 7
        %s202 = smul.addr %s199, 8
        %s203 = sadd.s32 %s201, %s202
        %s204 = smul.addr %s203, 4
        %s205 = scalar_lea.vmem %s0, %s204
        %s206 = smul.u32 8, %s19
      $region36: #{phase_afa_forward.2} parent=31 // pred_fallthru
        _
    $region32: #{phase_afa_forward.2} parent=5 // pred_fallthru
      _
    %p207 = scmp.le.s32.totalorder 1, %s11
    %p208 = scmp.lt.s32.totalorder %s11, 3
    %p209 = pnand %p207, %p208
    %p210 = pneg %p209
    // Predicated region
    $region37: #{phase_afa_forward.2} parent=5 // pred_check
      _
    $region38: #{phase_afa_forward.2} parent=5 // pred_check_branch
      %212 = sbr.rel (%p209) target = $region40
    $region39: #{phase_afa_forward.2} parent=5 // pred_region
      %s213 = ssub.s32 %s11, 1
      %s214 = smul.u32 8, %s21
      %p215 = scmp.lt.s32.totalorder %s20, 1
      %s216 = scalar_select %p215, %s20, 1
      %p217 = scmp.lt.s32.totalorder %s214, 7
      %s218 = scalar_select %p217, %s214, 7
      %s219 = smul.addr %s216, 8
      %s220 = sadd.s32 %s218, %s219
      %s221 = smul.addr %s220, 4
      %s222 = scalar_lea.vmem %s0, %s221
      %p223 = pneg %p51
      %p224 = pneg %p48
      %p225 = pneg %p72
      %p226 = pneg %p69
      %p227 = pneg %p93
      %p228 = pneg %p90
      %p229 = pneg %p114
      %p230 = pneg %p111
      %p231 = pneg %p135
      %p232 = pneg %p132
      %p233 = pneg %p163
      %p234 = pneg %p160
      %s235 = smul.u32 8, %s21
      %p236 = scmp.lt.s32.totalorder %s20, 1
      %s237 = scalar_select %p236, %s20, 1
      %p238 = scmp.lt.s32.totalorder %s235, 7
      %s239 = scalar_select %p238, %s235, 7
      %s240 = smul.addr %s237, 8
      %s241 = sadd.s32 %s239, %s240
      %s242 = smul.addr %s241, 8
      %s243 = scalar_lea.vmem %s5, %s242
      %s244 = smul.u32 8, %s21
      %p245 = scmp.lt.s32.totalorder %s20, 1
      %s246 = scalar_select %p245, %s20, 1
      %p247 = scmp.lt.s32.totalorder %s244, 7
      %s248 = scalar_select %p247, %s244, 7
      %s249 = smul.addr %s246, 8
      %s250 = sadd.s32 %s248, %s249
      %s251 = smul.addr %s250, 4
      %s252 = scalar_lea.vmem %s0, %s251
      %s253 = smul.u32 8, %s21
      %s254 = smul.u32 8, %s21
      %p255 = scmp.lt.s32.totalorder %s20, 1
      %s256 = scalar_select %p255, %s20, 1
      %p257 = scmp.lt.s32.totalorder %s254, 7
      %s258 = scalar_select %p257, %s254, 7
      %s259 = smul.addr %s256, 8
      %s260 = sadd.s32 %s258, %s259
      %s261 = smul.addr %s260, 8
      %s262 = scalar_lea.vmem %s5, %s261
      %s263 = smul.u32 8, %s21
      %v264 = vld [vmem:[%s252] sm:$0xff]
      %v265 = vld [vmem:[%s252 + $0x8] sm:$0xff]
      %v266 = vld [vmem:[%s252 + $0x10] sm:$0xff]
      %v267 = vld [vmem:[%s252 + $0x18] sm:$0xff]
      %v268 = vld [vmem:[%s1] sm:$0xff]
      %v269 = vld [vmem:[%s2] sm:$0xff]
      %271 = vset.pattern.permute.xlu0 0
      %272 = vperm.xlu0 %271, %v269
      %v273 = vpop.permute.xlu0 %272
      %v279 = vcombine.high %v264, %v264
      %v280 = vcombine.high %v265, %v265
      %v281 = vcombine.high %v266, %v266
      %v282 = vcombine.high %v267, %v267
      %vm283 = vcmask 31744
      %v285 = vsel %vm283, %v268, 0
      %vm287 = vcmask 1043456
      %v288 = vsel %vm287, %v264, 0
      %v290 = vsel %vm287, %v279, 0
      %v292 = vsel %vm287, %v265, 0
      %v294 = vsel %vm287, %v280, 0
      %v296 = vsel %vm287, %v266, 0
      %v298 = vsel %vm287, %v281, 0
      %v300 = vsel %vm287, %v267, 0
      %v302 = vsel %vm287, %v282, 0
      %304 = vmatprep.subr.mxu0 0.0
      %305 = vmatpush1.msra.mxu0 0.0
      %306 = vmatprep.subr.mxu0 0.0
      %307 = vmatpush1.msra.mxu0 0.0
      %308 = vmatprep.subr.mxu0 0.0
      %309 = vmatpush1.msra.mxu0 0.0
      %310 = vmatprep.subr.mxu0 0.0
      %311 = vmatpush1.msra.mxu0 0.0
      %312 = vmatprep.subr.mxu0 0.0
      %313 = vmatpush1.msra.mxu0 0.0
      %314 = vmatprep.subr.mxu0 0.0
      %315 = vmatpush1.msra.mxu0 0.0
      %316 = vmatprep.subr.mxu0 0.0
      %317 = vmatpush1.msra.mxu0 0.0
      %318 = vmatprep.subr.mxu0 0.0
      %319 = vmatpush1.msra.mxu0 0.0
      %320 = vmatprep.subr.mxu0 0.0
      %321 = vmatpush1.msra.mxu0 0.0
      %322 = vmatprep.subr.mxu0 0.0
      %323 = vmatpush1.msra.mxu0 0.0
      %324 = vmatprep.subr.mxu0 0.0
      %325 = vmatpush1.msra.mxu0 0.0
      %326 = vmatprep.subr.mxu0 0.0
      %327 = vmatpush1.msra.mxu0 0.0
      %328 = vmatprep.subr.mxu0 0.0
      %329 = vmatpush1.msra.mxu0 0.0
      %330 = vmatprep.subr.mxu0 0.0
      %331 = vmatpush1.msra.mxu0 0.0
      %332 = vmatprep.subr.mxu0 0.0
      %333 = vmatpush1.msra.mxu0 0.0
      %334 = vmatprep.subr.mxu0 %v290
      %335 = vmatpush1.msra.mxu0 %v288
      %336 = vmatprep.subr.mxu0 0.0
      %337 = vmatpush2.msra.mxu0 0.0
      %338 = vmatprep.subr.mxu0 0.0
      %339 = vmatpush2.msra.mxu0 0.0
      %340 = vmatprep.subr.mxu0 0.0
      %341 = vmatpush2.msra.mxu0 0.0
      %342 = vmatprep.subr.mxu0 0.0
      %343 = vmatpush2.msra.mxu0 0.0
      %344 = vmatprep.subr.mxu0 0.0
      %345 = vmatpush2.msra.mxu0 0.0
      %346 = vmatprep.subr.mxu0 0.0
      %347 = vmatpush2.msra.mxu0 0.0
      %348 = vmatprep.subr.mxu0 0.0
      %349 = vmatpush2.msra.mxu0 0.0
      %350 = vmatprep.subr.mxu0 0.0
      %351 = vmatpush2.msra.mxu0 0.0
      %352 = vmatprep.subr.mxu0 0.0
      %353 = vmatpush2.msra.mxu0 0.0
      %354 = vmatprep.subr.mxu0 0.0
      %355 = vmatpush2.msra.mxu0 0.0
      %356 = vmatprep.subr.mxu0 0.0
      %357 = vmatpush2.msra.mxu0 0.0
      %358 = vmatprep.subr.mxu0 0.0
      %359 = vmatpush2.msra.mxu0 0.0
      %360 = vmatprep.subr.mxu0 0.0
      %361 = vmatpush2.msra.mxu0 0.0
      %362 = vmatprep.subr.mxu0 0.0
      %363 = vmatpush2.msra.mxu0 0.0
      %364 = vmatprep.subr.mxu0 0.0
      %365 = vmatpush2.msra.mxu0 0.0
      %366 = vmatprep.subr.mxu0 0.0
      %367 = vmatpush2.msra.mxu0 0.0
      %368 = vmatprep.mubr.f32.mxu0 0.0
      %369 = vmatmul.mubr.f32.gmra.mxu0 %v285
      %v370 = vpop.f32.mrf.mxu0
      %v371 = vadd.f32 %v273, %v370
      %v372 = vpop.f32.mrf.mxu0
      %v373 = vadd.f32 %v273, %v372
      %374 = vdwg.mxu0
      %375 = vmatprep.subr.mxu0 0.0
      %376 = vmatpush1.msra.mxu0 0.0
      %377 = vmatprep.subr.mxu0 0.0
      %378 = vmatpush1.msra.mxu0 0.0
      %379 = vmatprep.subr.mxu0 0.0
      %380 = vmatpush1.msra.mxu0 0.0
      %381 = vmatprep.subr.mxu0 0.0
      %382 = vmatpush1.msra.mxu0 0.0
      %383 = vmatprep.subr.mxu0 0.0
      %384 = vmatpush1.msra.mxu0 0.0
      %385 = vmatprep.subr.mxu0 0.0
      %386 = vmatpush1.msra.mxu0 0.0
      %387 = vmatprep.subr.mxu0 0.0
      %388 = vmatpush1.msra.mxu0 0.0
      %389 = vmatprep.subr.mxu0 0.0
      %390 = vmatpush1.msra.mxu0 0.0
      %391 = vmatprep.subr.mxu0 0.0
      %392 = vmatpush1.msra.mxu0 0.0
      %393 = vmatprep.subr.mxu0 0.0
      %394 = vmatpush1.msra.mxu0 0.0
      %395 = vmatprep.subr.mxu0 0.0
      %396 = vmatpush1.msra.mxu0 0.0
      %397 = vmatprep.subr.mxu0 0.0
      %398 = vmatpush1.msra.mxu0 0.0
      %399 = vmatprep.subr.mxu0 0.0
      %400 = vmatpush1.msra.mxu0 0.0
      %401 = vmatprep.subr.mxu0 0.0
      %402 = vmatpush1.msra.mxu0 0.0
      %403 = vmatprep.subr.mxu0 0.0
      %404 = vmatpush1.msra.mxu0 0.0
      %405 = vmatprep.subr.mxu0 %v294
      %406 = vmatpush1.msra.mxu0 %v292
      %407 = vmatprep.subr.mxu0 0.0
      %408 = vmatpush2.msra.mxu0 0.0
      %409 = vmatprep.subr.mxu0 0.0
      %410 = vmatpush2.msra.mxu0 0.0
      %411 = vmatprep.subr.mxu0 0.0
      %412 = vmatpush2.msra.mxu0 0.0
      %413 = vmatprep.subr.mxu0 0.0
      %414 = vmatpush2.msra.mxu0 0.0
      %415 = vmatprep.subr.mxu0 0.0
      %416 = vmatpush2.msra.mxu0 0.0
      %417 = vmatprep.subr.mxu0 0.0
      %418 = vmatpush2.msra.mxu0 0.0
      %419 = vmatprep.subr.mxu0 0.0
      %420 = vmatpush2.msra.mxu0 0.0
      %421 = vmatprep.subr.mxu0 0.0
      %422 = vmatpush2.msra.mxu0 0.0
      %423 = vmatprep.subr.mxu0 0.0
      %424 = vmatpush2.msra.mxu0 0.0
      %425 = vmatprep.subr.mxu0 0.0
      %426 = vmatpush2.msra.mxu0 0.0
      %427 = vmatprep.subr.mxu0 0.0
      %428 = vmatpush2.msra.mxu0 0.0
      %429 = vmatprep.subr.mxu0 0.0
      %430 = vmatpush2.msra.mxu0 0.0
      %431 = vmatprep.subr.mxu0 0.0
      %432 = vmatpush2.msra.mxu0 0.0
      %433 = vmatprep.subr.mxu0 0.0
      %434 = vmatpush2.msra.mxu0 0.0
      %435 = vmatprep.subr.mxu0 0.0
      %436 = vmatpush2.msra.mxu0 0.0
      %437 = vmatprep.subr.mxu0 0.0
      %438 = vmatpush2.msra.mxu0 0.0
      %439 = vmatprep.mubr.f32.mxu0 0.0
      %440 = vmatmul.mubr.f32.gmra.mxu0 %v285
      %v441 = vpop.f32.mrf.mxu0
      %v442 = vadd.f32 %v273, %v441
      %v443 = vpop.f32.mrf.mxu0
      %v444 = vadd.f32 %v273, %v443
      %445 = vdwg.mxu0
      %446 = vmatprep.subr.mxu0 0.0
      %447 = vmatpush1.msra.mxu0 0.0
      %448 = vmatprep.subr.mxu0 0.0
      %449 = vmatpush1.msra.mxu0 0.0
      %450 = vmatprep.subr.mxu0 0.0
      %451 = vmatpush1.msra.mxu0 0.0
      %452 = vmatprep.subr.mxu0 0.0
      %453 = vmatpush1.msra.mxu0 0.0
      %454 = vmatprep.subr.mxu0 0.0
      %455 = vmatpush1.msra.mxu0 0.0
      %456 = vmatprep.subr.mxu0 0.0
      %457 = vmatpush1.msra.mxu0 0.0
      %458 = vmatprep.subr.mxu0 0.0
      %459 = vmatpush1.msra.mxu0 0.0
      %460 = vmatprep.subr.mxu0 0.0
      %461 = vmatpush1.msra.mxu0 0.0
      %462 = vmatprep.subr.mxu0 0.0
      %463 = vmatpush1.msra.mxu0 0.0
      %464 = vmatprep.subr.mxu0 0.0
      %465 = vmatpush1.msra.mxu0 0.0
      %466 = vmatprep.subr.mxu0 0.0
      %467 = vmatpush1.msra.mxu0 0.0
      %468 = vmatprep.subr.mxu0 0.0
      %469 = vmatpush1.msra.mxu0 0.0
      %470 = vmatprep.subr.mxu0 0.0
      %471 = vmatpush1.msra.mxu0 0.0
      %472 = vmatprep.subr.mxu0 0.0
      %473 = vmatpush1.msra.mxu0 0.0
      %474 = vmatprep.subr.mxu0 0.0
      %475 = vmatpush1.msra.mxu0 0.0
      %476 = vmatprep.subr.mxu0 %v298
      %477 = vmatpush1.msra.mxu0 %v296
      %478 = vmatprep.subr.mxu0 0.0
      %479 = vmatpush2.msra.mxu0 0.0
      %480 = vmatprep.subr.mxu0 0.0
      %481 = vmatpush2.msra.mxu0 0.0
      %482 = vmatprep.subr.mxu0 0.0
      %483 = vmatpush2.msra.mxu0 0.0
      %484 = vmatprep.subr.mxu0 0.0
      %485 = vmatpush2.msra.mxu0 0.0
      %486 = vmatprep.subr.mxu0 0.0
      %487 = vmatpush2.msra.mxu0 0.0
      %488 = vmatprep.subr.mxu0 0.0
      %489 = vmatpush2.msra.mxu0 0.0
      %490 = vmatprep.subr.mxu0 0.0
      %491 = vmatpush2.msra.mxu0 0.0
      %492 = vmatprep.subr.mxu0 0.0
      %493 = vmatpush2.msra.mxu0 0.0
      %494 = vmatprep.subr.mxu0 0.0
      %495 = vmatpush2.msra.mxu0 0.0
      %496 = vmatprep.subr.mxu0 0.0
      %497 = vmatpush2.msra.mxu0 0.0
      %498 = vmatprep.subr.mxu0 0.0
      %499 = vmatpush2.msra.mxu0 0.0
      %500 = vmatprep.subr.mxu0 0.0
      %501 = vmatpush2.msra.mxu0 0.0
      %502 = vmatprep.subr.mxu0 0.0
      %503 = vmatpush2.msra.mxu0 0.0
      %504 = vmatprep.subr.mxu0 0.0
      %505 = vmatpush2.msra.mxu0 0.0
      %506 = vmatprep.subr.mxu0 0.0
      %507 = vmatpush2.msra.mxu0 0.0
      %508 = vmatprep.subr.mxu0 0.0
      %509 = vmatpush2.msra.mxu0 0.0
      %510 = vmatprep.mubr.f32.mxu0 0.0
      %511 = vmatmul.mubr.f32.gmra.mxu0 %v285
      %v512 = vpop.f32.mrf.mxu0
      %v513 = vadd.f32 %v273, %v512
      %v514 = vpop.f32.mrf.mxu0
      %v515 = vadd.f32 %v273, %v514
      %516 = vdwg.mxu0
      %517 = vmatprep.subr.mxu0 0.0
      %518 = vmatpush1.msra.mxu0 0.0
      %519 = vmatprep.subr.mxu0 0.0
      %520 = vmatpush1.msra.mxu0 0.0
      %521 = vmatprep.subr.mxu0 0.0
      %522 = vmatpush1.msra.mxu0 0.0
      %523 = vmatprep.subr.mxu0 0.0
      %524 = vmatpush1.msra.mxu0 0.0
      %525 = vmatprep.subr.mxu0 0.0
      %526 = vmatpush1.msra.mxu0 0.0
      %527 = vmatprep.subr.mxu0 0.0
      %528 = vmatpush1.msra.mxu0 0.0
      %529 = vmatprep.subr.mxu0 0.0
      %530 = vmatpush1.msra.mxu0 0.0
      %531 = vmatprep.subr.mxu0 0.0
      %532 = vmatpush1.msra.mxu0 0.0
      %533 = vmatprep.subr.mxu0 0.0
      %534 = vmatpush1.msra.mxu0 0.0
      %535 = vmatprep.subr.mxu0 0.0
      %536 = vmatpush1.msra.mxu0 0.0
      %537 = vmatprep.subr.mxu0 0.0
      %538 = vmatpush1.msra.mxu0 0.0
      %539 = vmatprep.subr.mxu0 0.0
      %540 = vmatpush1.msra.mxu0 0.0
      %541 = vmatprep.subr.mxu0 0.0
      %542 = vmatpush1.msra.mxu0 0.0
      %543 = vmatprep.subr.mxu0 0.0
      %544 = vmatpush1.msra.mxu0 0.0
      %545 = vmatprep.subr.mxu0 0.0
      %546 = vmatpush1.msra.mxu0 0.0
      %547 = vmatprep.subr.mxu0 %v302
      %548 = vmatpush1.msra.mxu0 %v300
      %549 = vmatprep.subr.mxu0 0.0
      %550 = vmatpush2.msra.mxu0 0.0
      %551 = vmatprep.subr.mxu0 0.0
      %552 = vmatpush2.msra.mxu0 0.0
      %553 = vmatprep.subr.mxu0 0.0
      %554 = vmatpush2.msra.mxu0 0.0
      %555 = vmatprep.subr.mxu0 0.0
      %556 = vmatpush2.msra.mxu0 0.0
      %557 = vmatprep.subr.mxu0 0.0
      %558 = vmatpush2.msra.mxu0 0.0
      %559 = vmatprep.subr.mxu0 0.0
      %560 = vmatpush2.msra.mxu0 0.0
      %561 = vmatprep.subr.mxu0 0.0
      %562 = vmatpush2.msra.mxu0 0.0
      %563 = vmatprep.subr.mxu0 0.0
      %564 = vmatpush2.msra.mxu0 0.0
      %565 = vmatprep.subr.mxu0 0.0
      %566 = vmatpush2.msra.mxu0 0.0
      %567 = vmatprep.subr.mxu0 0.0
      %568 = vmatpush2.msra.mxu0 0.0
      %569 = vmatprep.subr.mxu0 0.0
      %570 = vmatpush2.msra.mxu0 0.0
      %571 = vmatprep.subr.mxu0 0.0
      %572 = vmatpush2.msra.mxu0 0.0
      %573 = vmatprep.subr.mxu0 0.0
      %574 = vmatpush2.msra.mxu0 0.0
      %575 = vmatprep.subr.mxu0 0.0
      %576 = vmatpush2.msra.mxu0 0.0
      %577 = vmatprep.subr.mxu0 0.0
      %578 = vmatpush2.msra.mxu0 0.0
      %579 = vmatprep.subr.mxu0 0.0
      %580 = vmatpush2.msra.mxu0 0.0
      %581 = vmatprep.mubr.f32.mxu0 0.0
      %582 = vmatmul.mubr.f32.gmra.mxu0 %v285
      %v583 = vpop.f32.mrf.mxu0
      %v584 = vadd.f32 %v273, %v583
      %v585 = vpop.f32.mrf.mxu0
      %v586 = vadd.f32 %v273, %v585
      %587 = vdwg.mxu0
      %v588 = vmax.f32 %v371, 0.0
      %v589 = vmax.f32 %v373, 0.0
      %v590 = vmax.f32 %v442, 0.0
      %v591 = vmax.f32 %v444, 0.0
      %v592 = vmax.f32 %v513, 0.0
      %v593 = vmax.f32 %v515, 0.0
      %v594 = vmax.f32 %v584, 0.0
      %v595 = vmax.f32 %v586, 0.0
      %v596 = vld [vmem:[%s3] sm:$0xff]
      %v597 = vld [vmem:[%s4] sm:$0xff]
      %599 = vset.pattern.permute.xlu0 0
      %600 = vperm.xlu0 %599, %v597
      %v601 = vpop.permute.xlu0 %600
      %vm603 = vcmask 64512
      %v605 = vsel %vm603, %v596, 0
      %607 = vmatprep.subr.mxu0 0.0
      %608 = vmatpush1.msra.mxu0 0.0
      %609 = vmatprep.subr.mxu0 0.0
      %610 = vmatpush1.msra.mxu0 0.0
      %611 = vmatprep.subr.mxu0 0.0
      %612 = vmatpush1.msra.mxu0 0.0
      %613 = vmatprep.subr.mxu0 0.0
      %614 = vmatpush1.msra.mxu0 0.0
      %615 = vmatprep.subr.mxu0 0.0
      %616 = vmatpush1.msra.mxu0 0.0
      %617 = vmatprep.subr.mxu0 0.0
      %618 = vmatpush1.msra.mxu0 0.0
      %619 = vmatprep.subr.mxu0 0.0
      %620 = vmatpush1.msra.mxu0 0.0
      %621 = vmatprep.subr.mxu0 0.0
      %622 = vmatpush1.msra.mxu0 0.0
      %623 = vmatprep.subr.mxu0 0.0
      %624 = vmatpush1.msra.mxu0 0.0
      %625 = vmatprep.subr.mxu0 0.0
      %626 = vmatpush1.msra.mxu0 0.0
      %627 = vmatprep.subr.mxu0 0.0
      %628 = vmatpush1.msra.mxu0 0.0
      %629 = vmatprep.subr.mxu0 0.0
      %630 = vmatpush1.msra.mxu0 0.0
      %631 = vmatprep.subr.mxu0 0.0
      %632 = vmatpush1.msra.mxu0 0.0
      %633 = vmatprep.subr.mxu0 0.0
      %634 = vmatpush1.msra.mxu0 0.0
      %635 = vmatprep.subr.mxu0 0.0
      %636 = vmatpush1.msra.mxu0 0.0
      %637 = vmatprep.subr.mxu0 %v589
      %638 = vmatpush1.msra.mxu0 %v588
      %639 = vmatprep.subr.mxu0 0.0
      %640 = vmatpush2.msra.mxu0 0.0
      %641 = vmatprep.subr.mxu0 0.0
      %642 = vmatpush2.msra.mxu0 0.0
      %643 = vmatprep.subr.mxu0 0.0
      %644 = vmatpush2.msra.mxu0 0.0
      %645 = vmatprep.subr.mxu0 0.0
      %646 = vmatpush2.msra.mxu0 0.0
      %647 = vmatprep.subr.mxu0 0.0
      %648 = vmatpush2.msra.mxu0 0.0
      %649 = vmatprep.subr.mxu0 0.0
      %650 = vmatpush2.msra.mxu0 0.0
      %651 = vmatprep.subr.mxu0 0.0
      %652 = vmatpush2.msra.mxu0 0.0
      %653 = vmatprep.subr.mxu0 0.0
      %654 = vmatpush2.msra.mxu0 0.0
      %655 = vmatprep.subr.mxu0 0.0
      %656 = vmatpush2.msra.mxu0 0.0
      %657 = vmatprep.subr.mxu0 0.0
      %658 = vmatpush2.msra.mxu0 0.0
      %659 = vmatprep.subr.mxu0 0.0
      %660 = vmatpush2.msra.mxu0 0.0
      %661 = vmatprep.subr.mxu0 0.0
      %662 = vmatpush2.msra.mxu0 0.0
      %663 = vmatprep.subr.mxu0 0.0
      %664 = vmatpush2.msra.mxu0 0.0
      %665 = vmatprep.subr.mxu0 0.0
      %666 = vmatpush2.msra.mxu0 0.0
      %667 = vmatprep.subr.mxu0 0.0
      %668 = vmatpush2.msra.mxu0 0.0
      %669 = vmatprep.subr.mxu0 0.0
      %670 = vmatpush2.msra.mxu0 0.0
      %671 = vmatprep.mubr.f32.mxu0 0.0
      %672 = vmatmul.mubr.f32.gmra.mxu0 %v605
      %v673 = vpop.f32.mrf.mxu0
      %v674 = vadd.f32 %v601, %v673
      %v675 = vpop.f32.mrf.mxu0
      %v676 = vadd.f32 %v601, %v675
      %677 = vdwg.mxu0
      %678 = vmatprep.subr.mxu0 0.0
      %679 = vmatpush1.msra.mxu0 0.0
      %680 = vmatprep.subr.mxu0 0.0
      %681 = vmatpush1.msra.mxu0 0.0
      %682 = vmatprep.subr.mxu0 0.0
      %683 = vmatpush1.msra.mxu0 0.0
      %684 = vmatprep.subr.mxu0 0.0
      %685 = vmatpush1.msra.mxu0 0.0
      %686 = vmatprep.subr.mxu0 0.0
      %687 = vmatpush1.msra.mxu0 0.0
      %688 = vmatprep.subr.mxu0 0.0
      %689 = vmatpush1.msra.mxu0 0.0
      %690 = vmatprep.subr.mxu0 0.0
      %691 = vmatpush1.msra.mxu0 0.0
      %692 = vmatprep.subr.mxu0 0.0
      %693 = vmatpush1.msra.mxu0 0.0
      %694 = vmatprep.subr.mxu0 0.0
      %695 = vmatpush1.msra.mxu0 0.0
      %696 = vmatprep.subr.mxu0 0.0
      %697 = vmatpush1.msra.mxu0 0.0
      %698 = vmatprep.subr.mxu0 0.0
      %699 = vmatpush1.msra.mxu0 0.0
      %700 = vmatprep.subr.mxu0 0.0
      %701 = vmatpush1.msra.mxu0 0.0
      %702 = vmatprep.subr.mxu0 0.0
      %703 = vmatpush1.msra.mxu0 0.0
      %704 = vmatprep.subr.mxu0 0.0
      %705 = vmatpush1.msra.mxu0 0.0
      %706 = vmatprep.subr.mxu0 0.0
      %707 = vmatpush1.msra.mxu0 0.0
      %708 = vmatprep.subr.mxu0 %v591
      %709 = vmatpush1.msra.mxu0 %v590
      %710 = vmatprep.subr.mxu0 0.0
      %711 = vmatpush2.msra.mxu0 0.0
      %712 = vmatprep.subr.mxu0 0.0
      %713 = vmatpush2.msra.mxu0 0.0
      %714 = vmatprep.subr.mxu0 0.0
      %715 = vmatpush2.msra.mxu0 0.0
      %716 = vmatprep.subr.mxu0 0.0
      %717 = vmatpush2.msra.mxu0 0.0
      %718 = vmatprep.subr.mxu0 0.0
      %719 = vmatpush2.msra.mxu0 0.0
      %720 = vmatprep.subr.mxu0 0.0
      %721 = vmatpush2.msra.mxu0 0.0
      %722 = vmatprep.subr.mxu0 0.0
      %723 = vmatpush2.msra.mxu0 0.0
      %724 = vmatprep.subr.mxu0 0.0
      %725 = vmatpush2.msra.mxu0 0.0
      %726 = vmatprep.subr.mxu0 0.0
      %727 = vmatpush2.msra.mxu0 0.0
      %728 = vmatprep.subr.mxu0 0.0
      %729 = vmatpush2.msra.mxu0 0.0
      %730 = vmatprep.subr.mxu0 0.0
      %731 = vmatpush2.msra.mxu0 0.0
      %732 = vmatprep.subr.mxu0 0.0
      %733 = vmatpush2.msra.mxu0 0.0
      %734 = vmatprep.subr.mxu0 0.0
      %735 = vmatpush2.msra.mxu0 0.0
      %736 = vmatprep.subr.mxu0 0.0
      %737 = vmatpush2.msra.mxu0 0.0
      %738 = vmatprep.subr.mxu0 0.0
      %739 = vmatpush2.msra.mxu0 0.0
      %740 = vmatprep.subr.mxu0 0.0
      %741 = vmatpush2.msra.mxu0 0.0
      %742 = vmatprep.mubr.f32.mxu0 0.0
      %743 = vmatmul.mubr.f32.gmra.mxu0 %v605
      %v744 = vpop.f32.mrf.mxu0
      %v745 = vadd.f32 %v601, %v744
      %v746 = vpop.f32.mrf.mxu0
      %v747 = vadd.f32 %v601, %v746
      %748 = vdwg.mxu0
      %749 = vmatprep.subr.mxu0 0.0
      %750 = vmatpush1.msra.mxu0 0.0
      %751 = vmatprep.subr.mxu0 0.0
      %752 = vmatpush1.msra.mxu0 0.0
      %753 = vmatprep.subr.mxu0 0.0
      %754 = vmatpush1.msra.mxu0 0.0
      %755 = vmatprep.subr.mxu0 0.0
      %756 = vmatpush1.msra.mxu0 0.0
      %757 = vmatprep.subr.mxu0 0.0
      %758 = vmatpush1.msra.mxu0 0.0
      %759 = vmatprep.subr.mxu0 0.0
      %760 = vmatpush1.msra.mxu0 0.0
      %761 = vmatprep.subr.mxu0 0.0
      %762 = vmatpush1.msra.mxu0 0.0
      %763 = vmatprep.subr.mxu0 0.0
      %764 = vmatpush1.msra.mxu0 0.0
      %765 = vmatprep.subr.mxu0 0.0
      %766 = vmatpush1.msra.mxu0 0.0
      %767 = vmatprep.subr.mxu0 0.0
      %768 = vmatpush1.msra.mxu0 0.0
      %769 = vmatprep.subr.mxu0 0.0
      %770 = vmatpush1.msra.mxu0 0.0
      %771 = vmatprep.subr.mxu0 0.0
      %772 = vmatpush1.msra.mxu0 0.0
      %773 = vmatprep.subr.mxu0 0.0
      %774 = vmatpush1.msra.mxu0 0.0
      %775 = vmatprep.subr.mxu0 0.0
      %776 = vmatpush1.msra.mxu0 0.0
      %777 = vmatprep.subr.mxu0 0.0
      %778 = vmatpush1.msra.mxu0 0.0
      %779 = vmatprep.subr.mxu0 %v593
      %780 = vmatpush1.msra.mxu0 %v592
      %781 = vmatprep.subr.mxu0 0.0
      %782 = vmatpush2.msra.mxu0 0.0
      %783 = vmatprep.subr.mxu0 0.0
      %784 = vmatpush2.msra.mxu0 0.0
      %785 = vmatprep.subr.mxu0 0.0
      %786 = vmatpush2.msra.mxu0 0.0
      %787 = vmatprep.subr.mxu0 0.0
      %788 = vmatpush2.msra.mxu0 0.0
      %789 = vmatprep.subr.mxu0 0.0
      %790 = vmatpush2.msra.mxu0 0.0
      %791 = vmatprep.subr.mxu0 0.0
      %792 = vmatpush2.msra.mxu0 0.0
      %793 = vmatprep.subr.mxu0 0.0
      %794 = vmatpush2.msra.mxu0 0.0
      %795 = vmatprep.subr.mxu0 0.0
      %796 = vmatpush2.msra.mxu0 0.0
      %797 = vmatprep.subr.mxu0 0.0
      %798 = vmatpush2.msra.mxu0 0.0
      %799 = vmatprep.subr.mxu0 0.0
      %800 = vmatpush2.msra.mxu0 0.0
      %801 = vmatprep.subr.mxu0 0.0
      %802 = vmatpush2.msra.mxu0 0.0
      %803 = vmatprep.subr.mxu0 0.0
      %804 = vmatpush2.msra.mxu0 0.0
      %805 = vmatprep.subr.mxu0 0.0
      %806 = vmatpush2.msra.mxu0 0.0
      %807 = vmatprep.subr.mxu0 0.0
      %808 = vmatpush2.msra.mxu0 0.0
      %809 = vmatprep.subr.mxu0 0.0
      %810 = vmatpush2.msra.mxu0 0.0
      %811 = vmatprep.subr.mxu0 0.0
      %812 = vmatpush2.msra.mxu0 0.0
      %813 = vmatprep.mubr.f32.mxu0 0.0
      %814 = vmatmul.mubr.f32.gmra.mxu0 %v605
      %v815 = vpop.f32.mrf.mxu0
      %v816 = vadd.f32 %v601, %v815
      %v817 = vpop.f32.mrf.mxu0
      %v818 = vadd.f32 %v601, %v817
      %819 = vdwg.mxu0
      %820 = vmatprep.subr.mxu0 0.0
      %821 = vmatpush1.msra.mxu0 0.0
      %822 = vmatprep.subr.mxu0 0.0
      %823 = vmatpush1.msra.mxu0 0.0
      %824 = vmatprep.subr.mxu0 0.0
      %825 = vmatpush1.msra.mxu0 0.0
      %826 = vmatprep.subr.mxu0 0.0
      %827 = vmatpush1.msra.mxu0 0.0
      %828 = vmatprep.subr.mxu0 0.0
      %829 = vmatpush1.msra.mxu0 0.0
      %830 = vmatprep.subr.mxu0 0.0
      %831 = vmatpush1.msra.mxu0 0.0
      %832 = vmatprep.subr.mxu0 0.0
      %833 = vmatpush1.msra.mxu0 0.0
      %834 = vmatprep.subr.mxu0 0.0
      %835 = vmatpush1.msra.mxu0 0.0
      %836 = vmatprep.subr.mxu0 0.0
      %837 = vmatpush1.msra.mxu0 0.0
      %838 = vmatprep.subr.mxu0 0.0
      %839 = vmatpush1.msra.mxu0 0.0
      %840 = vmatprep.subr.mxu0 0.0
      %841 = vmatpush1.msra.mxu0 0.0
      %842 = vmatprep.subr.mxu0 0.0
      %843 = vmatpush1.msra.mxu0 0.0
      %844 = vmatprep.subr.mxu0 0.0
      %845 = vmatpush1.msra.mxu0 0.0
      %846 = vmatprep.subr.mxu0 0.0
      %847 = vmatpush1.msra.mxu0 0.0
      %848 = vmatprep.subr.mxu0 0.0
      %849 = vmatpush1.msra.mxu0 0.0
      %850 = vmatprep.subr.mxu0 %v595
      %851 = vmatpush1.msra.mxu0 %v594
      %852 = vmatprep.subr.mxu0 0.0
      %853 = vmatpush2.msra.mxu0 0.0
      %854 = vmatprep.subr.mxu0 0.0
      %855 = vmatpush2.msra.mxu0 0.0
      %856 = vmatprep.subr.mxu0 0.0
      %857 = vmatpush2.msra.mxu0 0.0
      %858 = vmatprep.subr.mxu0 0.0
      %859 = vmatpush2.msra.mxu0 0.0
      %860 = vmatprep.subr.mxu0 0.0
      %861 = vmatpush2.msra.mxu0 0.0
      %862 = vmatprep.subr.mxu0 0.0
      %863 = vmatpush2.msra.mxu0 0.0
      %864 = vmatprep.subr.mxu0 0.0
      %865 = vmatpush2.msra.mxu0 0.0
      %866 = vmatprep.subr.mxu0 0.0
      %867 = vmatpush2.msra.mxu0 0.0
      %868 = vmatprep.subr.mxu0 0.0
      %869 = vmatpush2.msra.mxu0 0.0
      %870 = vmatprep.subr.mxu0 0.0
      %871 = vmatpush2.msra.mxu0 0.0
      %872 = vmatprep.subr.mxu0 0.0
      %873 = vmatpush2.msra.mxu0 0.0
      %874 = vmatprep.subr.mxu0 0.0
      %875 = vmatpush2.msra.mxu0 0.0
      %876 = vmatprep.subr.mxu0 0.0
      %877 = vmatpush2.msra.mxu0 0.0
      %878 = vmatprep.subr.mxu0 0.0
      %879 = vmatpush2.msra.mxu0 0.0
      %880 = vmatprep.subr.mxu0 0.0
      %881 = vmatpush2.msra.mxu0 0.0
      %882 = vmatprep.subr.mxu0 0.0
      %883 = vmatpush2.msra.mxu0 0.0
      %884 = vmatprep.mubr.f32.mxu0 0.0
      %885 = vmatmul.mubr.f32.gmra.mxu0 %v605
      %v886 = vpop.f32.mrf.mxu0
      %v887 = vadd.f32 %v601, %v886
      %v888 = vpop.f32.mrf.mxu0
      %v889 = vadd.f32 %v601, %v888
      %890 = vdwg.mxu0
      %891 = vst [vmem:[%s262] sm:$0xff] %v674
      %892 = vst [vmem:[%s262 + $0x8] sm:$0xff] %v676
      %893 = vst [vmem:[%s262 + $0x10] sm:$0xff] %v745
      %894 = vst [vmem:[%s262 + $0x18] sm:$0xff] %v747
      %895 = vst [vmem:[%s262 + $0x20] sm:$0xff] %v816
      %896 = vst [vmem:[%s262 + $0x28] sm:$0xff] %v818
      %897 = vst [vmem:[%s262 + $0x30] sm:$0xff] %v887
      %898 = vst [vmem:[%s262 + $0x38] sm:$0xff] %v889
      %s899 = smul.u32 8, %s21
      %p900 = scmp.lt.s32.totalorder %s20, 1
      %s901 = scalar_select %p900, %s20, 1
      %p902 = scmp.lt.s32.totalorder %s899, 7
      %s903 = scalar_select %p902, %s899, 7
      %s904 = smul.addr %s901, 8
      %s905 = sadd.s32 %s903, %s904
      %s906 = smul.addr %s905, 8
      %s907 = scalar_lea.vmem %s5, %s906
      // Predicated region
      $region41: #{phase_afa_forward.2} parent=39 // pred_check
        %p908 = pneg %p160
      $region42: #{phase_afa_forward.2} parent=39 // pred_check_branch
        %910 = sbr.rel (%p908) target = $region44
      $region43: #{phase_afa_forward.2} parent=39 // pred_region
        %s911 = smul.u32 8, %s21
      $region44: #{phase_afa_forward.2} parent=39 // pred_fallthru
        _
    $region40: #{phase_afa_forward.2} parent=5 // pred_fallthru
      _
    %p912 = scmp.le.s32.totalorder 2, %s11
    // Predicated region
    $region45: #{phase_afa_forward.2} parent=5 // pred_check
      %p913 = pneg %p912
    $region46: #{phase_afa_forward.2} parent=5 // pred_check_branch
      %915 = sbr.rel (%p913) target = $region48
    $region47: #{phase_afa_forward.2} parent=5 // pred_region
      %s916 = ssub.s32 %s11, 2
      // Predicated region
      $region49: #{phase_afa_forward.2} parent=47 // pred_check
        %p917 = pneg %p166
      $region50: #{phase_afa_forward.2} parent=47 // pred_check_branch
        %919 = sbr.rel (%p917) target = $region52
      $region51: #{phase_afa_forward.2} parent=47 // pred_region
        %s920 = smul.u32 8, %s23
        %p921 = scmp.lt.s32.totalorder %s22, 1
        %s922 = scalar_select %p921, %s22, 1
        %p923 = scmp.lt.s32.totalorder %s920, 7
        %s924 = scalar_select %p923, %s920, 7
        %s925 = smul.addr %s922, 8
        %s926 = sadd.s32 %s924, %s925
        %s927 = smul.addr %s926, 8
        %s928 = scalar_lea.vmem %s5, %s927
      $region52: #{phase_afa_forward.2} parent=47 // pred_fallthru
        _
    $region48: #{phase_afa_forward.2} parent=5 // pred_fallthru
      _
  $region6: #{phase_afa_forward.2} parent=0 // loop_footer
    %s15 = sadd.s32 1, %s11
  $region7: #{phase_afa_forward.2} parent=0 // loop_footer_branch
    %10 = sbr.rel target = $region3
  $region8: #{phase_afa_forward.2} parent=0 // loop_exit
    _

// kernel: phase_afa_forward.3
$region0: #{phase_afa_forward.3}
  #allocation0 [shape = 'u32[]', space=smem, size = 0x4, offset = 0x4, fixed_abs, tag = 'smem constant byte address 0x4 - core index']
  #allocation1 [shape = 'u32[144,128]{1,0:T(1,128)}', space=vmem, size = 0x12000, scoped, tag = 'internal scratch']
  %s0 = inlined_call_operand.vmem [shape: f32[2,8,1024], index: 0, kind: input, shape index: {}]
  %s1 = inlined_call_operand.vmem [shape: f32[2,8,1024], index: 1, kind: input, shape index: {}]
  %s2 = inlined_call_operand.vmem [shape: f32[2,8,1024], index: 2, kind: input, shape index: {}]
  %s3 = inlined_call_operand.vmem [shape: f32[8,8], index: 3, kind: input, shape index: {}]
  %s4 = inlined_call_operand.vmem [shape: f32[8,8], index: 4, kind: input, shape index: {}]
  %s5 = inlined_call_operand.vmem [shape: f32[2,8,1024], index: 5, kind: output, shape index: {0}]
  %s6 = inlined_call_operand.vmem [shape: f32[2,8,1024], index: 6, kind: output, shape index: {1}]
  %7 = xla_tuple %s5, %s6
  %s8 = sld [smem:[#allocation0]]
  $region61: #{phase_afa_forward.3} parent=0
    _
  %s10 = ssub.s32 1, %s8
  %s11 = scalar_select 0, %s10, %s8
  loop: start=0, step=1, limit=4
  $region2: #{phase_afa_forward.3} parent=0 // loop_pre_header
    _
  $region3: #{phase_afa_forward.3} parent=0 // loop_header
    %s13 = sphi 0, %s17
    %p14 = scmp.ge.s32.totalorder %s13, 4
    %s20 = sphi 0, %s32
    %s21 = sphi 0, %s28
    %s22 = sphi 0, %s20
    %s23 = sphi 0, %s21
    %s24 = sphi 0, %s22
    %s25 = sphi 0, %s23
    %s37 = sphi 0, %s39
    %s40 = sphi 0, %s37
    %s41 = sphi 0, %s40
    %s57 = sphi 0, %s41
    %s65 = sphi 0, %s67
    %s68 = sphi 0, %s65
    %s69 = sphi 0, %s68
    %s85 = sphi 0, %s69
    %s93 = sphi 0, %s95
    %s96 = sphi 0, %s93
    %s97 = sphi 0, %s96
    %s113 = sphi 0, %s97
    %s117 = sphi 0, %s117
    %s119 = sphi 0, %s117
    %s120 = sphi 0, %s119
    %s134 = sphi 0, %s120
    %s138 = sphi 0, %s138
    %s140 = sphi 0, %s138
    %s141 = sphi 0, %s140
    %s155 = sphi 0, %s141
    %s163 = sphi 0, %s165
    %s166 = sphi 0, %s163
    %s167 = sphi 0, %s166
    %s183 = sphi 0, %s167
    %s191 = sphi 0, %s193
    %s194 = sphi 0, %s191
    %s195 = sphi 0, %s194
    %s211 = sphi 0, %s195
  $region4: #{phase_afa_forward.3} parent=0 // loop_header_branch
    %16 = sbr.rel (%p14) target = $region8
  $region5: #{phase_afa_forward.3} parent=0 // loop_body
    %s18 = ssub.s32 %s13, 1
    %s19 = ssub.s32 %s13, 2
    %s26 = sadd.s32 1, %s21
    %p27 = scmp.ge.s32.totalorder %s26, 1
    %s28 = scalar_select %p27, 0, %s26
    %s29 = sadd.s32 1, %s20
    %s30 = scalar_select %p27, %s29, %s20
    %p31 = scmp.ge.s32.totalorder %s30, 2
    %s32 = scalar_select %p31, 0, %s30
    %s33 = ssub.s32 %s20, %s32
    %s34 = ssub.s32 %s21, %s28
    %s35 = sor.u32 %s33, %s34
    %p36 = scmp.eq.s32.totalorder %s35, 0
    %s38 = sadd.s32 %s37, 1
    %s39 = scalar_select %p36, %s37, %s38
    %p42 = pneg %p36
    %p43 = scmp.eq.s32.totalorder %s13, 1
    %p44 = por %p42, %p43
    %p45 = scmp.ne.s32.totalorder %s37, %s40
    %p46 = scmp.eq.s32.totalorder %s13, 0
    %p47 = por %p45, %p46
    %p48 = scmp.ne.s32.totalorder %s37, %s40
    %p49 = scmp.eq.s32.totalorder %s18, 1
    %p50 = por %p48, %p49
    %p51 = scmp.ne.s32.totalorder %s40, %s41
    %p52 = scmp.eq.s32.totalorder %s18, 0
    %p53 = por %p51, %p52
    %p54 = scmp.ne.s32.totalorder %s40, %s41
    %p55 = scmp.eq.s32.totalorder %s19, 1
    %p56 = por %p54, %p55
    %p58 = scmp.ne.s32.totalorder %s41, %s57
    %p59 = scmp.eq.s32.totalorder %s19, 0
    %p60 = por %p58, %p59
    %s61 = ssub.s32 %s20, %s32
    %s62 = ssub.s32 %s21, %s28
    %s63 = sor.u32 %s61, %s62
    %p64 = scmp.eq.s32.totalorder %s63, 0
    %s66 = sadd.s32 %s65, 1
    %s67 = scalar_select %p64, %s65, %s66
    %p70 = pneg %p64
    %p71 = scmp.eq.s32.totalorder %s13, 1
    %p72 = por %p70, %p71
    %p73 = scmp.ne.s32.totalorder %s65, %s68
    %p74 = scmp.eq.s32.totalorder %s13, 0
    %p75 = por %p73, %p74
    %p76 = scmp.ne.s32.totalorder %s65, %s68
    %p77 = scmp.eq.s32.totalorder %s18, 1
    %p78 = por %p76, %p77
    %p79 = scmp.ne.s32.totalorder %s68, %s69
    %p80 = scmp.eq.s32.totalorder %s18, 0
    %p81 = por %p79, %p80
    %p82 = scmp.ne.s32.totalorder %s68, %s69
    %p83 = scmp.eq.s32.totalorder %s19, 1
    %p84 = por %p82, %p83
    %p86 = scmp.ne.s32.totalorder %s69, %s85
    %p87 = scmp.eq.s32.totalorder %s19, 0
    %p88 = por %p86, %p87
    %s89 = ssub.s32 %s20, %s32
    %s90 = ssub.s32 %s21, %s28
    %s91 = sor.u32 %s89, %s90
    %p92 = scmp.eq.s32.totalorder %s91, 0
    %s94 = sadd.s32 %s93, 1
    %s95 = scalar_select %p92, %s93, %s94
    %p98 = pneg %p92
    %p99 = scmp.eq.s32.totalorder %s13, 1
    %p100 = por %p98, %p99
    %p101 = scmp.ne.s32.totalorder %s93, %s96
    %p102 = scmp.eq.s32.totalorder %s13, 0
    %p103 = por %p101, %p102
    %p104 = scmp.ne.s32.totalorder %s93, %s96
    %p105 = scmp.eq.s32.totalorder %s18, 1
    %p106 = por %p104, %p105
    %p107 = scmp.ne.s32.totalorder %s96, %s97
    %p108 = scmp.eq.s32.totalorder %s18, 0
    %p109 = por %p107, %p108
    %p110 = scmp.ne.s32.totalorder %s96, %s97
    %p111 = scmp.eq.s32.totalorder %s19, 1
    %p112 = por %p110, %p111
    %p114 = scmp.ne.s32.totalorder %s97, %s113
    %p115 = scmp.eq.s32.totalorder %s19, 0
    %p116 = por %p114, %p115
    %s118 = sadd.s32 %s117, 1
    %p121 = scmp.eq.s32.totalorder %s13, 1
    %p122 = scmp.ne.s32.totalorder %s117, %s119
    %p123 = scmp.eq.s32.totalorder %s13, 0
    %p124 = por %p122, %p123
    %p125 = scmp.ne.s32.totalorder %s117, %s119
    %p126 = scmp.eq.s32.totalorder %s18, 1
    %p127 = por %p125, %p126
    %p128 = scmp.ne.s32.totalorder %s119, %s120
    %p129 = scmp.eq.s32.totalorder %s18, 0
    %p130 = por %p128, %p129
    %p131 = scmp.ne.s32.totalorder %s119, %s120
    %p132 = scmp.eq.s32.totalorder %s19, 1
    %p133 = por %p131, %p132
    %p135 = scmp.ne.s32.totalorder %s120, %s134
    %p136 = scmp.eq.s32.totalorder %s19, 0
    %p137 = por %p135, %p136
    %s139 = sadd.s32 %s138, 1
    %p142 = scmp.eq.s32.totalorder %s13, 1
    %p143 = scmp.ne.s32.totalorder %s138, %s140
    %p144 = scmp.eq.s32.totalorder %s13, 0
    %p145 = por %p143, %p144
    %p146 = scmp.ne.s32.totalorder %s138, %s140
    %p147 = scmp.eq.s32.totalorder %s18, 1
    %p148 = por %p146, %p147
    %p149 = scmp.ne.s32.totalorder %s140, %s141
    %p150 = scmp.eq.s32.totalorder %s18, 0
    %p151 = por %p149, %p150
    %p152 = scmp.ne.s32.totalorder %s140, %s141
    %p153 = scmp.eq.s32.totalorder %s19, 1
    %p154 = por %p152, %p153
    %p156 = scmp.ne.s32.totalorder %s141, %s155
    %p157 = scmp.eq.s32.totalorder %s19, 0
    %p158 = por %p156, %p157
    %s159 = ssub.s32 %s20, %s32
    %s160 = ssub.s32 %s21, %s28
    %s161 = sor.u32 %s159, %s160
    %p162 = scmp.eq.s32.totalorder %s161, 0
    %s164 = sadd.s32 %s163, 1
    %s165 = scalar_select %p162, %s163, %s164
    %p168 = pneg %p162
    %p169 = scmp.eq.s32.totalorder %s13, 1
    %p170 = por %p168, %p169
    %p171 = scmp.ne.s32.totalorder %s163, %s166
    %p172 = scmp.eq.s32.totalorder %s13, 0
    %p173 = por %p171, %p172
    %p174 = scmp.ne.s32.totalorder %s163, %s166
    %p175 = scmp.eq.s32.totalorder %s18, 1
    %p176 = por %p174, %p175
    %p177 = scmp.ne.s32.totalorder %s166, %s167
    %p178 = scmp.eq.s32.totalorder %s18, 0
    %p179 = por %p177, %p178
    %p180 = scmp.ne.s32.totalorder %s166, %s167
    %p181 = scmp.eq.s32.totalorder %s19, 1
    %p182 = por %p180, %p181
    %p184 = scmp.ne.s32.totalorder %s167, %s183
    %p185 = scmp.eq.s32.totalorder %s19, 0
    %p186 = por %p184, %p185
    %s187 = ssub.s32 %s20, %s32
    %s188 = ssub.s32 %s21, %s28
    %s189 = sor.u32 %s187, %s188
    %p190 = scmp.eq.s32.totalorder %s189, 0
    %s192 = sadd.s32 %s191, 1
    %s193 = scalar_select %p190, %s191, %s192
    %p196 = pneg %p190
    %p197 = scmp.eq.s32.totalorder %s13, 1
    %p198 = por %p196, %p197
    %p199 = scmp.ne.s32.totalorder %s191, %s194
    %p200 = scmp.eq.s32.totalorder %s13, 0
    %p201 = por %p199, %p200
    %p202 = scmp.ne.s32.totalorder %s191, %s194
    %p203 = scmp.eq.s32.totalorder %s18, 1
    %p204 = por %p202, %p203
    %p205 = scmp.ne.s32.totalorder %s194, %s195
    %p206 = scmp.eq.s32.totalorder %s18, 0
    %p207 = por %p205, %p206
    %p208 = scmp.ne.s32.totalorder %s194, %s195
    %p209 = scmp.eq.s32.totalorder %s19, 1
    %p210 = por %p208, %p209
    %p212 = scmp.ne.s32.totalorder %s195, %s211
    %p213 = scmp.eq.s32.totalorder %s19, 0
    %p214 = por %p212, %p213
    %p215 = scmp.le.s32.totalorder 1, %s13
    %p216 = scmp.lt.s32.totalorder %s13, 3
    %p217 = pnand %p215, %p216
    %p218 = pneg %p217
    // Predicated region
    $region9: #{phase_afa_forward.3} parent=5 // pred_check
      _
    $region10: #{phase_afa_forward.3} parent=5 // pred_check_branch
      %220 = sbr.rel (%p217) target = $region12
    $region11: #{phase_afa_forward.3} parent=5 // pred_region
      %s221 = ssub.s32 %s13, 1
      // Predicated region
      $region13: #{phase_afa_forward.3} parent=11 // pred_check
        %p222 = pneg %p130
      $region14: #{phase_afa_forward.3} parent=11 // pred_check_branch
        %224 = sbr.rel (%p222) target = $region16
      $region15: #{phase_afa_forward.3} parent=11 // pred_region
        _
      $region16: #{phase_afa_forward.3} parent=11 // pred_fallthru
        _
      // Predicated region
      $region17: #{phase_afa_forward.3} parent=11 // pred_check
        %p225 = pneg %p151
      $region18: #{phase_afa_forward.3} parent=11 // pred_check_branch
        %227 = sbr.rel (%p225) target = $region20
      $region19: #{phase_afa_forward.3} parent=11 // pred_region
        _
      $region20: #{phase_afa_forward.3} parent=11 // pred_fallthru
        _
    $region12: #{phase_afa_forward.3} parent=5 // pred_fallthru
      _
    %p228 = scmp.lt.s32.totalorder %s13, 2
    // Predicated region
    $region21: #{phase_afa_forward.3} parent=5 // pred_check
      %p229 = pneg %p228
    $region22: #{phase_afa_forward.3} parent=5 // pred_check_branch
      %231 = sbr.rel (%p229) target = $region24
    $region23: #{phase_afa_forward.3} parent=5 // pred_region
      // Predicated region
      $region25: #{phase_afa_forward.3} parent=23 // pred_check
        %p232 = pneg %p47
      $region26: #{phase_afa_forward.3} parent=23 // pred_check_branch
        %234 = sbr.rel (%p232) target = $region28
      $region27: #{phase_afa_forward.3} parent=23 // pred_region
        %s235 = smul.u32 8, %s21
        %p236 = scmp.lt.s32.totalorder %s20, 1
        %s237 = scalar_select %p236, %s20, 1
        %p238 = scmp.lt.s32.totalorder %s235, 7
        %s239 = scalar_select %p238, %s235, 7
        %s240 = smul.addr %s237, 8
        %s241 = sadd.s32 %s239, %s240
        %s242 = smul.addr %s241, 8
        %s243 = scalar_lea.vmem %s0, %s242
        %s244 = smul.u32 8, %s21
      $region28: #{phase_afa_forward.3} parent=23 // pred_fallthru
        _
      // Predicated region
      $region29: #{phase_afa_forward.3} parent=23 // pred_check
        %p245 = pneg %p75
      $region30: #{phase_afa_forward.3} parent=23 // pred_check_branch
        %247 = sbr.rel (%p245) target = $region32
      $region31: #{phase_afa_forward.3} parent=23 // pred_region
        %s248 = smul.u32 8, %s21
        %p249 = scmp.lt.s32.totalorder %s20, 1
        %s250 = scalar_select %p249, %s20, 1
        %p251 = scmp.lt.s32.totalorder %s248, 7
        %s252 = scalar_select %p251, %s248, 7
        %s253 = smul.addr %s250, 8
        %s254 = sadd.s32 %s252, %s253
        %s255 = smul.addr %s254, 8
        %s256 = scalar_lea.vmem %s1, %s255
        %s257 = smul.u32 8, %s21
      $region32: #{phase_afa_forward.3} parent=23 // pred_fallthru
        _
      // Predicated region
      $region33: #{phase_afa_forward.3} parent=23 // pred_check
        %p258 = pneg %p103
      $region34: #{phase_afa_forward.3} parent=23 // pred_check_branch
        %260 = sbr.rel (%p258) target = $region36
      $region35: #{phase_afa_forward.3} parent=23 // pred_region
        %s261 = smul.u32 8, %s21
        %p262 = scmp.lt.s32.totalorder %s20, 1
        %s263 = scalar_select %p262, %s20, 1
        %p264 = scmp.lt.s32.totalorder %s261, 7
        %s265 = scalar_select %p264, %s261, 7
        %s266 = smul.addr %s263, 8
        %s267 = sadd.s32 %s265, %s266
        %s268 = smul.addr %s267, 8
        %s269 = scalar_lea.vmem %s2, %s268
        %s270 = smul.u32 8, %s21
      $region36: #{phase_afa_forward.3} parent=23 // pred_fallthru
        _
    $region24: #{phase_afa_forward.3} parent=5 // pred_fallthru
      _
    %p271 = scmp.le.s32.totalorder 1, %s13
    %p272 = scmp.lt.s32.totalorder %s13, 3
    %p273 = pnand %p271, %p272
    %p274 = pneg %p273
    // Predicated region
    $region37: #{phase_afa_forward.3} parent=5 // pred_check
      _
    $region38: #{phase_afa_forward.3} parent=5 // pred_check_branch
      %276 = sbr.rel (%p273) target = $region40
    $region39: #{phase_afa_forward.3} parent=5 // pred_region
      %s277 = ssub.s32 %s13, 1
      %s278 = smul.u32 8, %s23
      %p279 = scmp.lt.s32.totalorder %s22, 1
      %s280 = scalar_select %p279, %s22, 1
      %p281 = scmp.lt.s32.totalorder %s278, 7
      %s282 = scalar_select %p281, %s278, 7
      %s283 = smul.addr %s280, 8
      %s284 = sadd.s32 %s282, %s283
      %s285 = smul.addr %s284, 8
      %s286 = scalar_lea.vmem %s0, %s285
      %p287 = pneg %p53
      %p288 = pneg %p50
      %s289 = smul.u32 8, %s23
      %p290 = scmp.lt.s32.totalorder %s22, 1
      %s291 = scalar_select %p290, %s22, 1
      %p292 = scmp.lt.s32.totalorder %s289, 7
      %s293 = scalar_select %p292, %s289, 7
      %s294 = smul.addr %s291, 8
      %s295 = sadd.s32 %s293, %s294
      %s296 = smul.addr %s295, 8
      %s297 = scalar_lea.vmem %s1, %s296
      %p298 = pneg %p81
      %p299 = pneg %p78
      %s300 = smul.u32 8, %s23
      %p301 = scmp.lt.s32.totalorder %s22, 1
      %s302 = scalar_select %p301, %s22, 1
      %p303 = scmp.lt.s32.totalorder %s300, 7
      %s304 = scalar_select %p303, %s300, 7
      %s305 = smul.addr %s302, 8
      %s306 = sadd.s32 %s304, %s305
      %s307 = smul.addr %s306, 8
      %s308 = scalar_lea.vmem %s2, %s307
      %p309 = pneg %p109
      %p310 = pneg %p106
      %p311 = pneg %p130
      %p312 = pneg %p127
      %p313 = pneg %p151
      %p314 = pneg %p148
      %p315 = pneg %p179
      %p316 = pneg %p176
      %s317 = smul.u32 8, %s23
      %p318 = scmp.lt.s32.totalorder %s22, 1
      %s319 = scalar_select %p318, %s22, 1
      %p320 = scmp.lt.s32.totalorder %s317, 7
      %s321 = scalar_select %p320, %s317, 7
      %s322 = smul.addr %s319, 8
      %s323 = sadd.s32 %s321, %s322
      %s324 = smul.addr %s323, 8
      %s325 = scalar_lea.vmem %s5, %s324
      %p326 = pneg %p207
      %p327 = pneg %p204
      %s328 = smul.u32 8, %s23
      %p329 = scmp.lt.s32.totalorder %s22, 1
      %s330 = scalar_select %p329, %s22, 1
      %p331 = scmp.lt.s32.totalorder %s328, 7
      %s332 = scalar_select %p331, %s328, 7
      %s333 = smul.addr %s330, 8
      %s334 = sadd.s32 %s332, %s333
      %s335 = smul.addr %s334, 8
      %s336 = scalar_lea.vmem %s6, %s335
      %s337 = smul.u32 8, %s23
      %p338 = scmp.lt.s32.totalorder %s22, 1
      %s339 = scalar_select %p338, %s22, 1
      %p340 = scmp.lt.s32.totalorder %s337, 7
      %s341 = scalar_select %p340, %s337, 7
      %s342 = smul.addr %s339, 8
      %s343 = sadd.s32 %s341, %s342
      %s344 = smul.addr %s343, 8
      %s345 = scalar_lea.vmem %s0, %s344
      %s346 = smul.u32 8, %s23
      %s347 = smul.u32 8, %s23
      %p348 = scmp.lt.s32.totalorder %s22, 1
      %s349 = scalar_select %p348, %s22, 1
      %p350 = scmp.lt.s32.totalorder %s347, 7
      %s351 = scalar_select %p350, %s347, 7
      %s352 = smul.addr %s349, 8
      %s353 = sadd.s32 %s351, %s352
      %s354 = smul.addr %s353, 8
      %s355 = scalar_lea.vmem %s1, %s354
      %s356 = smul.u32 8, %s23
      %s357 = smul.u32 8, %s23
      %p358 = scmp.lt.s32.totalorder %s22, 1
      %s359 = scalar_select %p358, %s22, 1
      %p360 = scmp.lt.s32.totalorder %s357, 7
      %s361 = scalar_select %p360, %s357, 7
      %s362 = smul.addr %s359, 8
      %s363 = sadd.s32 %s361, %s362
      %s364 = smul.addr %s363, 8
      %s365 = scalar_lea.vmem %s2, %s364
      %s366 = smul.u32 8, %s23
      %s367 = smul.u32 8, %s23
      %p368 = scmp.lt.s32.totalorder %s22, 1
      %s369 = scalar_select %p368, %s22, 1
      %p370 = scmp.lt.s32.totalorder %s367, 7
      %s371 = scalar_select %p370, %s367, 7
      %s372 = smul.addr %s369, 8
      %s373 = sadd.s32 %s371, %s372
      %s374 = smul.addr %s373, 8
      %s375 = scalar_lea.vmem %s5, %s374
      %s376 = smul.u32 8, %s23
      %s377 = smul.u32 8, %s23
      %p378 = scmp.lt.s32.totalorder %s22, 1
      %s379 = scalar_select %p378, %s22, 1
      %p380 = scmp.lt.s32.totalorder %s377, 7
      %s381 = scalar_select %p380, %s377, 7
      %s382 = smul.addr %s379, 8
      %s383 = sadd.s32 %s381, %s382
      %s384 = smul.addr %s383, 8
      %s385 = scalar_lea.vmem %s6, %s384
      %s386 = smul.u32 8, %s23
      %v387 = vld [vmem:[%s345] sm:$0xff]
      %v388 = vld [vmem:[%s345 + $0x8] sm:$0xff]
      %v389 = vld [vmem:[%s345 + $0x10] sm:$0xff]
      %v390 = vld [vmem:[%s345 + $0x18] sm:$0xff]
      %v391 = vld [vmem:[%s345 + $0x20] sm:$0xff]
      %v392 = vld [vmem:[%s345 + $0x28] sm:$0xff]
      %v393 = vld [vmem:[%s345 + $0x30] sm:$0xff]
      %v394 = vld [vmem:[%s345 + $0x38] sm:$0xff]
      %v395 = vld [vmem:[%s355] sm:$0xff]
      %v396 = vld [vmem:[%s355 + $0x8] sm:$0xff]
      %v397 = vld [vmem:[%s355 + $0x10] sm:$0xff]
      %v398 = vld [vmem:[%s355 + $0x18] sm:$0xff]
      %v399 = vld [vmem:[%s355 + $0x20] sm:$0xff]
      %v400 = vld [vmem:[%s355 + $0x28] sm:$0xff]
      %v401 = vld [vmem:[%s355 + $0x30] sm:$0xff]
      %v402 = vld [vmem:[%s355 + $0x38] sm:$0xff]
      %v403 = vmul.f32 %v387, %v387
      %v404 = vmul.f32 %v388, %v388
      %v405 = vmul.f32 %v389, %v389
      %v406 = vmul.f32 %v390, %v390
      %v407 = vmul.f32 %v391, %v391
      %v408 = vmul.f32 %v392, %v392
      %v409 = vmul.f32 %v393, %v393
      %v410 = vmul.f32 %v394, %v394
      %v411 = vmul.f32 %v395, %v395
      %v412 = vmul.f32 %v396, %v396
      %v413 = vmul.f32 %v397, %v397
      %v414 = vmul.f32 %v398, %v398
      %v415 = vmul.f32 %v399, %v399
      %v416 = vmul.f32 %v400, %v400
      %v417 = vmul.f32 %v401, %v401
      %v418 = vmul.f32 %v402, %v402
      %v419 = vadd.f32 %v403, %v411
      %v420 = vadd.f32 %v404, %v412
      %v421 = vadd.f32 %v405, %v413
      %v422 = vadd.f32 %v406, %v414
      %v423 = vadd.f32 %v407, %v415
      %v424 = vadd.f32 %v408, %v416
      %v425 = vadd.f32 %v409, %v417
      %v426 = vadd.f32 %v410, %v418
      %v427 = vrsqrt.pop %v419
      %v428 = vmul.f32 %v419, %v427
      %vm429 = vcmp.eq.f32.partialorder %v419, inf
      %v430 = vsel %vm429, %v419, %v428
      %vm431 = vcmp.eq.f32.partialorder %v419, 0.0
      %v432 = vand.u32 %v419, 2147483648
      %v433 = vsel %vm431, %v432, %v430
      %v434 = vrsqrt.pop %v420
      %v435 = vmul.f32 %v420, %v434
      %vm436 = vcmp.eq.f32.partialorder %v420, inf
      %v437 = vsel %vm436, %v420, %v435
      %vm438 = vcmp.eq.f32.partialorder %v420, 0.0
      %v439 = vand.u32 %v420, 2147483648
      %v440 = vsel %vm438, %v439, %v437
      %v441 = vrsqrt.pop %v421
      %v442 = vmul.f32 %v421, %v441
      %vm443 = vcmp.eq.f32.partialorder %v421, inf
      %v444 = vsel %vm443, %v421, %v442
      %vm445 = vcmp.eq.f32.partialorder %v421, 0.0
      %v446 = vand.u32 %v421, 2147483648
      %v447 = vsel %vm445, %v446, %v444
      %v448 = vrsqrt.pop %v422
      %v449 = vmul.f32 %v422, %v448
      %vm450 = vcmp.eq.f32.partialorder %v422, inf
      %v451 = vsel %vm450, %v422, %v449
      %vm452 = vcmp.eq.f32.partialorder %v422, 0.0
      %v453 = vand.u32 %v422, 2147483648
      %v454 = vsel %vm452, %v453, %v451
      %v455 = vrsqrt.pop %v423
      %v456 = vmul.f32 %v423, %v455
      %vm457 = vcmp.eq.f32.partialorder %v423, inf
      %v458 = vsel %vm457, %v423, %v456
      %vm459 = vcmp.eq.f32.partialorder %v423, 0.0
      %v460 = vand.u32 %v423, 2147483648
      %v461 = vsel %vm459, %v460, %v458
      %v462 = vrsqrt.pop %v424
      %v463 = vmul.f32 %v424, %v462
      %vm464 = vcmp.eq.f32.partialorder %v424, inf
      %v465 = vsel %vm464, %v424, %v463
      %vm466 = vcmp.eq.f32.partialorder %v424, 0.0
      %v467 = vand.u32 %v424, 2147483648
      %v468 = vsel %vm466, %v467, %v465
      %v469 = vrsqrt.pop %v425
      %v470 = vmul.f32 %v425, %v469
      %vm471 = vcmp.eq.f32.partialorder %v425, inf
      %v472 = vsel %vm471, %v425, %v470
      %vm473 = vcmp.eq.f32.partialorder %v425, 0.0
      %v474 = vand.u32 %v425, 2147483648
      %v475 = vsel %vm473, %v474, %v472
      %v476 = vrsqrt.pop %v426
      %v477 = vmul.f32 %v426, %v476
      %vm478 = vcmp.eq.f32.partialorder %v426, inf
      %v479 = vsel %vm478, %v426, %v477
      %vm480 = vcmp.eq.f32.partialorder %v426, 0.0
      %v481 = vand.u32 %v426, 2147483648
      %v482 = vsel %vm480, %v481, %v479
      %s483 = smul.u32 %s23, 1024
      %v484 = vlaneseq
      %v485 = vand.u32 %v484, 127
      %v486 = vadd.s32 %v485, 128
      %v487 = vadd.s32 %v485, 256
      %v488 = vadd.s32 %v485, 384
      %v489 = vadd.s32 %v485, 512
      %v490 = vadd.s32 %v485, 640
      %v491 = vadd.s32 %v485, 768
      %v492 = vadd.s32 %v485, 896
      %v493 = vstv %s483
      %v494 = vadd.s32 %v493, %v485
      %v495 = vadd.s32 %v493, %v486
      %v496 = vadd.s32 %v493, %v487
      %v497 = vadd.s32 %v493, %v488
      %v498 = vadd.s32 %v493, %v489
      %v499 = vadd.s32 %v493, %v490
      %v500 = vadd.s32 %v493, %v491
      %v501 = vadd.s32 %v493, %v492
      %vm502 = vcmp.lt.s32.totalorder %v494, 32
      %vm503 = vcmp.lt.s32.totalorder %v495, 32
      %vm504 = vcmp.lt.s32.totalorder %v496, 32
      %vm505 = vcmp.lt.s32.totalorder %v497, 32
      %vm506 = vcmp.lt.s32.totalorder %v498, 32
      %vm507 = vcmp.lt.s32.totalorder %v499, 32
      %vm508 = vcmp.lt.s32.totalorder %v500, 32
      %vm509 = vcmp.lt.s32.totalorder %v501, 32
      %vm510 = vcmp.ge.s32.totalorder %v494, 992
      %vm511 = vcmp.ge.s32.totalorder %v495, 992
      %vm512 = vcmp.ge.s32.totalorder %v496, 992
      %vm513 = vcmp.ge.s32.totalorder %v497, 992
      %vm514 = vcmp.ge.s32.totalorder %v498, 992
      %vm515 = vcmp.ge.s32.totalorder %v499, 992
      %vm516 = vcmp.ge.s32.totalorder %v500, 992
      %vm517 = vcmp.ge.s32.totalorder %v501, 992
      %vm518 = vmor %vm502, %vm510
      %vm519 = vmor %vm503, %vm511
      %vm520 = vmor %vm504, %vm512
      %vm521 = vmor %vm505, %vm513
      %vm522 = vmor %vm506, %vm514
      %vm523 = vmor %vm507, %vm515
      %vm524 = vmor %vm508, %vm516
      %vm525 = vmor %vm509, %vm517
      %v526 = vand.u32 %v494, 31
      %v527 = vand.u32 %v495, 31
      %v528 = vand.u32 %v496, 31
      %v529 = vand.u32 %v497, 31
      %v530 = vand.u32 %v498, 31
      %v531 = vand.u32 %v499, 31
      %v532 = vand.u32 %v500, 31
      %v533 = vand.u32 %v501, 31
      %vm534 = vcmp.lt.s32.totalorder %v526, 1
      %vm535 = vcmp.lt.s32.totalorder %v527, 1
      %vm536 = vcmp.lt.s32.totalorder %v528, 1
      %vm537 = vcmp.lt.s32.totalorder %v529, 1
      %vm538 = vcmp.lt.s32.totalorder %v530, 1
      %vm539 = vcmp.lt.s32.totalorder %v531, 1
      %vm540 = vcmp.lt.s32.totalorder %v532, 1
      %vm541 = vcmp.lt.s32.totalorder %v533, 1
      %vm542 = vcmp.ge.s32.totalorder %v526, 31
      %vm543 = vcmp.ge.s32.totalorder %v527, 31
      %vm544 = vcmp.ge.s32.totalorder %v528, 31
      %vm545 = vcmp.ge.s32.totalorder %v529, 31
      %vm546 = vcmp.ge.s32.totalorder %v530, 31
      %vm547 = vcmp.ge.s32.totalorder %v531, 31
      %vm548 = vcmp.ge.s32.totalorder %v532, 31
      %vm549 = vcmp.ge.s32.totalorder %v533, 31
      %vm550 = vmor %vm534, %vm542
      %vm551 = vmor %vm535, %vm543
      %vm552 = vmor %vm536, %vm544
      %vm553 = vmor %vm537, %vm545
      %vm554 = vmor %vm538, %vm546
      %vm555 = vmor %vm539, %vm547
      %vm556 = vmor %vm540, %vm548
      %vm557 = vmor %vm541, %vm549
      %vm558 = vmand %vm518, %vm550
      %vm559 = vmand %vm519, %vm551
      %vm560 = vmand %vm520, %vm552
      %vm561 = vmand %vm521, %vm553
      %vm562 = vmand %vm522, %vm554
      %vm563 = vmand %vm523, %vm555
      %vm564 = vmand %vm524, %vm556
      %vm565 = vmand %vm525, %vm557
      %v566 = vsel %vm558, 1, 0
      %v567 = vsel %vm559, 1, 0
      %v568 = vsel %vm560, 1, 0
      %v569 = vsel %vm561, 1, 0
      %v570 = vsel %vm562, 1, 0
      %v571 = vsel %vm563, 1, 0
      %v572 = vsel %vm564, 1, 0
      %v573 = vsel %vm565, 1, 0
      %v574 = vcvt.s32.f32 %v566
      %v575 = vcvt.s32.f32 %v567
      %v576 = vcvt.s32.f32 %v568
      %v577 = vcvt.s32.f32 %v569
      %v578 = vcvt.s32.f32 %v570
      %v579 = vcvt.s32.f32 %v571
      %v580 = vcvt.s32.f32 %v572
      %v581 = vcvt.s32.f32 %v573
      %v582 = vmul.f32 %v433, %v574
      %v583 = vmul.f32 %v440, %v575
      %v584 = vmul.f32 %v447, %v576
      %v585 = vmul.f32 %v454, %v577
      %v586 = vmul.f32 %v461, %v578
      %v587 = vmul.f32 %v468, %v579
      %v588 = vmul.f32 %v475, %v580
      %v589 = vmul.f32 %v482, %v581
      %v590 = vsub.f32 %v433, %v582
      %v591 = vsub.f32 %v440, %v583
      %v592 = vsub.f32 %v447, %v584
      %v593 = vsub.f32 %v454, %v585
      %v594 = vsub.f32 %v461, %v586
      %v595 = vsub.f32 %v468, %v587
      %v596 = vsub.f32 %v475, %v588
      %v597 = vsub.f32 %v482, %v589
      %v598 = vld [vmem:[%s3] sm:$0xff]
      %vm599 = vcmask 64512
      %v601 = vsel %vm599, %v598, 0
      %603 = vmatprep.subr.mxu0 0.0
      %604 = vmatpush1.msra.mxu0 0.0
      %605 = vmatprep.subr.mxu0 0.0
      %606 = vmatpush1.msra.mxu0 0.0
      %607 = vmatprep.subr.mxu0 0.0
      %608 = vmatpush1.msra.mxu0 0.0
      %609 = vmatprep.subr.mxu0 0.0
      %610 = vmatpush1.msra.mxu0 0.0
      %611 = vmatprep.subr.mxu0 0.0
      %612 = vmatpush1.msra.mxu0 0.0
      %613 = vmatprep.subr.mxu0 0.0
      %614 = vmatpush1.msra.mxu0 0.0
      %615 = vmatprep.subr.mxu0 0.0
      %616 = vmatpush1.msra.mxu0 0.0
      %617 = vmatprep.subr.mxu0 0.0
      %618 = vmatpush1.msra.mxu0 0.0
      %619 = vmatprep.subr.mxu0 0.0
      %620 = vmatpush1.msra.mxu0 0.0
      %621 = vmatprep.subr.mxu0 0.0
      %622 = vmatpush1.msra.mxu0 0.0
      %623 = vmatprep.subr.mxu0 0.0
      %624 = vmatpush1.msra.mxu0 0.0
      %625 = vmatprep.subr.mxu0 0.0
      %626 = vmatpush1.msra.mxu0 0.0
      %627 = vmatprep.subr.mxu0 0.0
      %628 = vmatpush1.msra.mxu0 0.0
      %629 = vmatprep.subr.mxu0 0.0
      %630 = vmatpush1.msra.mxu0 0.0
      %631 = vmatprep.subr.mxu0 0.0
      %632 = vmatpush1.msra.mxu0 0.0
      %633 = vmatprep.subr.mxu0 %v583
      %634 = vmatpush1.msra.mxu0 %v582
      %635 = vmatprep.subr.mxu0 0.0
      %636 = vmatpush2.msra.mxu0 0.0
      %637 = vmatprep.subr.mxu0 0.0
      %638 = vmatpush2.msra.mxu0 0.0
      %639 = vmatprep.subr.mxu0 0.0
      %640 = vmatpush2.msra.mxu0 0.0
      %641 = vmatprep.subr.mxu0 0.0
      %642 = vmatpush2.msra.mxu0 0.0
      %643 = vmatprep.subr.mxu0 0.0
      %644 = vmatpush2.msra.mxu0 0.0
      %645 = vmatprep.subr.mxu0 0.0
      %646 = vmatpush2.msra.mxu0 0.0
      %647 = vmatprep.subr.mxu0 0.0
      %648 = vmatpush2.msra.mxu0 0.0
      %649 = vmatprep.subr.mxu0 0.0
      %650 = vmatpush2.msra.mxu0 0.0
      %651 = vmatprep.subr.mxu0 0.0
      %652 = vmatpush2.msra.mxu0 0.0
      %653 = vmatprep.subr.mxu0 0.0
      %654 = vmatpush2.msra.mxu0 0.0
      %655 = vmatprep.subr.mxu0 0.0
      %656 = vmatpush2.msra.mxu0 0.0
      %657 = vmatprep.subr.mxu0 0.0
      %658 = vmatpush2.msra.mxu0 0.0
      %659 = vmatprep.subr.mxu0 0.0
      %660 = vmatpush2.msra.mxu0 0.0
      %661 = vmatprep.subr.mxu0 0.0
      %662 = vmatpush2.msra.mxu0 0.0
      %663 = vmatprep.subr.mxu0 0.0
      %664 = vmatpush2.msra.mxu0 0.0
      %665 = vmatprep.subr.mxu0 0.0
      %666 = vmatpush2.msra.mxu0 0.0
      %667 = vmatprep.mubr.f32.mxu0 0.0
      %668 = vmatmul.mubr.f32.gmra.mxu0 %v601
      %v669 = vpop.f32.mrf.mxu0
      %v670 = vadd.f32 0.0, %v669
      %v671 = vpop.f32.mrf.mxu0
      %v672 = vadd.f32 0.0, %v671
      %673 = vdwg.mxu0
      %674 = vmatprep.subr.mxu0 0.0
      %675 = vmatpush1.msra.mxu0 0.0
      %676 = vmatprep.subr.mxu0 0.0
      %677 = vmatpush1.msra.mxu0 0.0
      %678 = vmatprep.subr.mxu0 0.0
      %679 = vmatpush1.msra.mxu0 0.0
      %680 = vmatprep.subr.mxu0 0.0
      %681 = vmatpush1.msra.mxu0 0.0
      %682 = vmatprep.subr.mxu0 0.0
      %683 = vmatpush1.msra.mxu0 0.0
      %684 = vmatprep.subr.mxu0 0.0
      %685 = vmatpush1.msra.mxu0 0.0
      %686 = vmatprep.subr.mxu0 0.0
      %687 = vmatpush1.msra.mxu0 0.0
      %688 = vmatprep.subr.mxu0 0.0
      %689 = vmatpush1.msra.mxu0 0.0
      %690 = vmatprep.subr.mxu0 0.0
      %691 = vmatpush1.msra.mxu0 0.0
      %692 = vmatprep.subr.mxu0 0.0
      %693 = vmatpush1.msra.mxu0 0.0
      %694 = vmatprep.subr.mxu0 0.0
      %695 = vmatpush1.msra.mxu0 0.0
      %696 = vmatprep.subr.mxu0 0.0
      %697 = vmatpush1.msra.mxu0 0.0
      %698 = vmatprep.subr.mxu0 0.0
      %699 = vmatpush1.msra.mxu0 0.0
      %700 = vmatprep.subr.mxu0 0.0
      %701 = vmatpush1.msra.mxu0 0.0
      %702 = vmatprep.subr.mxu0 0.0
      %703 = vmatpush1.msra.mxu0 0.0
      %704 = vmatprep.subr.mxu0 %v585
      %705 = vmatpush1.msra.mxu0 %v584
      %706 = vmatprep.subr.mxu0 0.0
      %707 = vmatpush2.msra.mxu0 0.0
      %708 = vmatprep.subr.mxu0 0.0
      %709 = vmatpush2.msra.mxu0 0.0
      %710 = vmatprep.subr.mxu0 0.0
      %711 = vmatpush2.msra.mxu0 0.0
      %712 = vmatprep.subr.mxu0 0.0
      %713 = vmatpush2.msra.mxu0 0.0
      %714 = vmatprep.subr.mxu0 0.0
      %715 = vmatpush2.msra.mxu0 0.0
      %716 = vmatprep.subr.mxu0 0.0
      %717 = vmatpush2.msra.mxu0 0.0
      %718 = vmatprep.subr.mxu0 0.0
      %719 = vmatpush2.msra.mxu0 0.0
      %720 = vmatprep.subr.mxu0 0.0
      %721 = vmatpush2.msra.mxu0 0.0
      %722 = vmatprep.subr.mxu0 0.0
      %723 = vmatpush2.msra.mxu0 0.0
      %724 = vmatprep.subr.mxu0 0.0
      %725 = vmatpush2.msra.mxu0 0.0
      %726 = vmatprep.subr.mxu0 0.0
      %727 = vmatpush2.msra.mxu0 0.0
      %728 = vmatprep.subr.mxu0 0.0
      %729 = vmatpush2.msra.mxu0 0.0
      %730 = vmatprep.subr.mxu0 0.0
      %731 = vmatpush2.msra.mxu0 0.0
      %732 = vmatprep.subr.mxu0 0.0
      %733 = vmatpush2.msra.mxu0 0.0
      %734 = vmatprep.subr.mxu0 0.0
      %735 = vmatpush2.msra.mxu0 0.0
      %736 = vmatprep.subr.mxu0 0.0
      %737 = vmatpush2.msra.mxu0 0.0
      %738 = vmatprep.mubr.f32.mxu0 0.0
      %739 = vmatmul.mubr.f32.gmra.mxu0 %v601
      %v740 = vpop.f32.mrf.mxu0
      %v741 = vadd.f32 0.0, %v740
      %v742 = vpop.f32.mrf.mxu0
      %v743 = vadd.f32 0.0, %v742
      %744 = vdwg.mxu0
      %745 = vmatprep.subr.mxu0 0.0
      %746 = vmatpush1.msra.mxu0 0.0
      %747 = vmatprep.subr.mxu0 0.0
      %748 = vmatpush1.msra.mxu0 0.0
      %749 = vmatprep.subr.mxu0 0.0
      %750 = vmatpush1.msra.mxu0 0.0
      %751 = vmatprep.subr.mxu0 0.0
      %752 = vmatpush1.msra.mxu0 0.0
      %753 = vmatprep.subr.mxu0 0.0
      %754 = vmatpush1.msra.mxu0 0.0
      %755 = vmatprep.subr.mxu0 0.0
      %756 = vmatpush1.msra.mxu0 0.0
      %757 = vmatprep.subr.mxu0 0.0
      %758 = vmatpush1.msra.mxu0 0.0
      %759 = vmatprep.subr.mxu0 0.0
      %760 = vmatpush1.msra.mxu0 0.0
      %761 = vmatprep.subr.mxu0 0.0
      %762 = vmatpush1.msra.mxu0 0.0
      %763 = vmatprep.subr.mxu0 0.0
      %764 = vmatpush1.msra.mxu0 0.0
      %765 = vmatprep.subr.mxu0 0.0
      %766 = vmatpush1.msra.mxu0 0.0
      %767 = vmatprep.subr.mxu0 0.0
      %768 = vmatpush1.msra.mxu0 0.0
      %769 = vmatprep.subr.mxu0 0.0
      %770 = vmatpush1.msra.mxu0 0.0
      %771 = vmatprep.subr.mxu0 0.0
      %772 = vmatpush1.msra.mxu0 0.0
      %773 = vmatprep.subr.mxu0 0.0
      %774 = vmatpush1.msra.mxu0 0.0
      %775 = vmatprep.subr.mxu0 %v587
      %776 = vmatpush1.msra.mxu0 %v586
      %777 = vmatprep.subr.mxu0 0.0
      %778 = vmatpush2.msra.mxu0 0.0
      %779 = vmatprep.subr.mxu0 0.0
      %780 = vmatpush2.msra.mxu0 0.0
      %781 = vmatprep.subr.mxu0 0.0
      %782 = vmatpush2.msra.mxu0 0.0
      %783 = vmatprep.subr.mxu0 0.0
      %784 = vmatpush2.msra.mxu0 0.0
      %785 = vmatprep.subr.mxu0 0.0
      %786 = vmatpush2.msra.mxu0 0.0
      %787 = vmatprep.subr.mxu0 0.0
      %788 = vmatpush2.msra.mxu0 0.0
      %789 = vmatprep.subr.mxu0 0.0
      %790 = vmatpush2.msra.mxu0 0.0
      %791 = vmatprep.subr.mxu0 0.0
      %792 = vmatpush2.msra.mxu0 0.0
      %793 = vmatprep.subr.mxu0 0.0
      %794 = vmatpush2.msra.mxu0 0.0
      %795 = vmatprep.subr.mxu0 0.0
      %796 = vmatpush2.msra.mxu0 0.0
      %797 = vmatprep.subr.mxu0 0.0
      %798 = vmatpush2.msra.mxu0 0.0
      %799 = vmatprep.subr.mxu0 0.0
      %800 = vmatpush2.msra.mxu0 0.0
      %801 = vmatprep.subr.mxu0 0.0
      %802 = vmatpush2.msra.mxu0 0.0
      %803 = vmatprep.subr.mxu0 0.0
      %804 = vmatpush2.msra.mxu0 0.0
      %805 = vmatprep.subr.mxu0 0.0
      %806 = vmatpush2.msra.mxu0 0.0
      %807 = vmatprep.subr.mxu0 0.0
      %808 = vmatpush2.msra.mxu0 0.0
      %809 = vmatprep.mubr.f32.mxu0 0.0
      %810 = vmatmul.mubr.f32.gmra.mxu0 %v601
      %v811 = vpop.f32.mrf.mxu0
      %v812 = vadd.f32 0.0, %v811
      %v813 = vpop.f32.mrf.mxu0
      %v814 = vadd.f32 0.0, %v813
      %815 = vdwg.mxu0
      %816 = vmatprep.subr.mxu0 0.0
      %817 = vmatpush1.msra.mxu0 0.0
      %818 = vmatprep.subr.mxu0 0.0
      %819 = vmatpush1.msra.mxu0 0.0
      %820 = vmatprep.subr.mxu0 0.0
      %821 = vmatpush1.msra.mxu0 0.0
      %822 = vmatprep.subr.mxu0 0.0
      %823 = vmatpush1.msra.mxu0 0.0
      %824 = vmatprep.subr.mxu0 0.0
      %825 = vmatpush1.msra.mxu0 0.0
      %826 = vmatprep.subr.mxu0 0.0
      %827 = vmatpush1.msra.mxu0 0.0
      %828 = vmatprep.subr.mxu0 0.0
      %829 = vmatpush1.msra.mxu0 0.0
      %830 = vmatprep.subr.mxu0 0.0
      %831 = vmatpush1.msra.mxu0 0.0
      %832 = vmatprep.subr.mxu0 0.0
      %833 = vmatpush1.msra.mxu0 0.0
      %834 = vmatprep.subr.mxu0 0.0
      %835 = vmatpush1.msra.mxu0 0.0
      %836 = vmatprep.subr.mxu0 0.0
      %837 = vmatpush1.msra.mxu0 0.0
      %838 = vmatprep.subr.mxu0 0.0
      %839 = vmatpush1.msra.mxu0 0.0
      %840 = vmatprep.subr.mxu0 0.0
      %841 = vmatpush1.msra.mxu0 0.0
      %842 = vmatprep.subr.mxu0 0.0
      %843 = vmatpush1.msra.mxu0 0.0
      %844 = vmatprep.subr.mxu0 0.0
      %845 = vmatpush1.msra.mxu0 0.0
      %846 = vmatprep.subr.mxu0 %v589
      %847 = vmatpush1.msra.mxu0 %v588
      %848 = vmatprep.subr.mxu0 0.0
      %849 = vmatpush2.msra.mxu0 0.0
      %850 = vmatprep.subr.mxu0 0.0
      %851 = vmatpush2.msra.mxu0 0.0
      %852 = vmatprep.subr.mxu0 0.0
      %853 = vmatpush2.msra.mxu0 0.0
      %854 = vmatprep.subr.mxu0 0.0
      %855 = vmatpush2.msra.mxu0 0.0
      %856 = vmatprep.subr.mxu0 0.0
      %857 = vmatpush2.msra.mxu0 0.0
      %858 = vmatprep.subr.mxu0 0.0
      %859 = vmatpush2.msra.mxu0 0.0
      %860 = vmatprep.subr.mxu0 0.0
      %861 = vmatpush2.msra.mxu0 0.0
      %862 = vmatprep.subr.mxu0 0.0
      %863 = vmatpush2.msra.mxu0 0.0
      %864 = vmatprep.subr.mxu0 0.0
      %865 = vmatpush2.msra.mxu0 0.0
      %866 = vmatprep.subr.mxu0 0.0
      %867 = vmatpush2.msra.mxu0 0.0
      %868 = vmatprep.subr.mxu0 0.0
      %869 = vmatpush2.msra.mxu0 0.0
      %870 = vmatprep.subr.mxu0 0.0
      %871 = vmatpush2.msra.mxu0 0.0
      %872 = vmatprep.subr.mxu0 0.0
      %873 = vmatpush2.msra.mxu0 0.0
      %874 = vmatprep.subr.mxu0 0.0
      %875 = vmatpush2.msra.mxu0 0.0
      %876 = vmatprep.subr.mxu0 0.0
      %877 = vmatpush2.msra.mxu0 0.0
      %878 = vmatprep.subr.mxu0 0.0
      %879 = vmatpush2.msra.mxu0 0.0
      %880 = vmatprep.mubr.f32.mxu0 0.0
      %881 = vmatmul.mubr.f32.gmra.mxu0 %v601
      %v882 = vpop.f32.mrf.mxu0
      %v883 = vadd.f32 0.0, %v882
      %v884 = vpop.f32.mrf.mxu0
      %v885 = vadd.f32 0.0, %v884
      %886 = vdwg.mxu0
      %v887 = vrot.slane %v670, 4
      %v888 = vmax.f32 %v670, %v887
      %v889 = vrot.slane %v888, 2
      %v890 = vmax.f32 %v888, %v889
      %v891 = vrot.slane %v890, 1
      %v892 = vmax.f32 %v890, %v891
      %v893 = vrot.slane %v672, 4
      %v894 = vmax.f32 %v672, %v893
      %v895 = vrot.slane %v894, 2
      %v896 = vmax.f32 %v894, %v895
      %v897 = vrot.slane %v896, 1
      %v898 = vmax.f32 %v896, %v897
      %v899 = vrot.slane %v741, 4
      %v900 = vmax.f32 %v741, %v899
      %v901 = vrot.slane %v900, 2
      %v902 = vmax.f32 %v900, %v901
      %v903 = vrot.slane %v902, 1
      %v904 = vmax.f32 %v902, %v903
      %v905 = vrot.slane %v743, 4
      %v906 = vmax.f32 %v743, %v905
      %v907 = vrot.slane %v906, 2
      %v908 = vmax.f32 %v906, %v907
      %v909 = vrot.slane %v908, 1
      %v910 = vmax.f32 %v908, %v909
      %v911 = vrot.slane %v812, 4
      %v912 = vmax.f32 %v812, %v911
      %v913 = vrot.slane %v912, 2
      %v914 = vmax.f32 %v912, %v913
      %v915 = vrot.slane %v914, 1
      %v916 = vmax.f32 %v914, %v915
      %v917 = vrot.slane %v814, 4
      %v918 = vmax.f32 %v814, %v917
      %v919 = vrot.slane %v918, 2
      %v920 = vmax.f32 %v918, %v919
      %v921 = vrot.slane %v920, 1
      %v922 = vmax.f32 %v920, %v921
      %v923 = vrot.slane %v883, 4
      %v924 = vmax.f32 %v883, %v923
      %v925 = vrot.slane %v924, 2
      %v926 = vmax.f32 %v924, %v925
      %v927 = vrot.slane %v926, 1
      %v928 = vmax.f32 %v926, %v927
      %v929 = vrot.slane %v885, 4
      %v930 = vmax.f32 %v885, %v929
      %v931 = vrot.slane %v930, 2
      %v932 = vmax.f32 %v930, %v931
      %v933 = vrot.slane %v932, 1
      %v934 = vmax.f32 %v932, %v933
      %v935 = vsub.f32 %v670, %v892
      %v936 = vsub.f32 %v672, %v898
      %v937 = vsub.f32 %v741, %v904
      %v938 = vsub.f32 %v743, %v910
      %v939 = vsub.f32 %v812, %v916
      %v940 = vsub.f32 %v814, %v922
      %v941 = vsub.f32 %v883, %v928
      %v942 = vsub.f32 %v885, %v934
      %v943 = vmul.f32 %v935, 1.442695
      %v944 = vpow.pop %v943
      %v945 = vmul.f32 %v936, 1.442695
      %v946 = vpow.pop %v945
      %v947 = vmul.f32 %v937, 1.442695
      %v948 = vpow.pop %v947
      %v949 = vmul.f32 %v938, 1.442695
      %v950 = vpow.pop %v949
      %v951 = vmul.f32 %v939, 1.442695
      %v952 = vpow.pop %v951
      %v953 = vmul.f32 %v940, 1.442695
      %v954 = vpow.pop %v953
      %v955 = vmul.f32 %v941, 1.442695
      %v956 = vpow.pop %v955
      %v957 = vmul.f32 %v942, 1.442695
      %v958 = vpow.pop %v957
      %v959 = vrot.slane %v944, 4
      %v960 = vadd.f32 %v944, %v959
      %v961 = vrot.slane %v960, 2
      %v962 = vadd.f32 %v960, %v961
      %v963 = vrot.slane %v962, 1
      %v964 = vadd.f32 %v962, %v963
      %v965 = vrot.slane %v946, 4
      %v966 = vadd.f32 %v946, %v965
      %v967 = vrot.slane %v966, 2
      %v968 = vadd.f32 %v966, %v967
      %v969 = vrot.slane %v968, 1
      %v970 = vadd.f32 %v968, %v969
      %v971 = vrot.slane %v948, 4
      %v972 = vadd.f32 %v948, %v971
      %v973 = vrot.slane %v972, 2
      %v974 = vadd.f32 %v972, %v973
      %v975 = vrot.slane %v974, 1
      %v976 = vadd.f32 %v974, %v975
      %v977 = vrot.slane %v950, 4
      %v978 = vadd.f32 %v950, %v977
      %v979 = vrot.slane %v978, 2
      %v980 = vadd.f32 %v978, %v979
      %v981 = vrot.slane %v980, 1
      %v982 = vadd.f32 %v980, %v981
      %v983 = vrot.slane %v952, 4
      %v984 = vadd.f32 %v952, %v983
      %v985 = vrot.slane %v984, 2
      %v986 = vadd.f32 %v984, %v985
      %v987 = vrot.slane %v986, 1
      %v988 = vadd.f32 %v986, %v987
      %v989 = vrot.slane %v954, 4
      %v990 = vadd.f32 %v954, %v989
      %v991 = vrot.slane %v990, 2
      %v992 = vadd.f32 %v990, %v991
      %v993 = vrot.slane %v992, 1
      %v994 = vadd.f32 %v992, %v993
      %v995 = vrot.slane %v956, 4
      %v996 = vadd.f32 %v956, %v995
      %v997 = vrot.slane %v996, 2
      %v998 = vadd.f32 %v996, %v997
      %v999 = vrot.slane %v998, 1
      %v1000 = vadd.f32 %v998, %v999
      %v1001 = vrot.slane %v958, 4
      %v1002 = vadd.f32 %v958, %v1001
      %v1003 = vrot.slane %v1002, 2
      %v1004 = vadd.f32 %v1002, %v1003
      %v1005 = vrot.slane %v1004, 1
      %v1006 = vadd.f32 %v1004, %v1005
      %v1007 = vrcp.pop %v964
      %v1008 = vrcp.pop %v970
      %v1009 = vrcp.pop %v976
      %v1010 = vrcp.pop %v982
      %v1011 = vrcp.pop %v988
      %v1012 = vrcp.pop %v994
      %v1013 = vrcp.pop %v1000
      %v1014 = vrcp.pop %v1006
      %v1015 = vmul.f32 %v944, %v1007
      %v1016 = vmul.f32 %v946, %v1008
      %v1017 = vmul.f32 %v948, %v1009
      %v1018 = vmul.f32 %v950, %v1010
      %v1019 = vmul.f32 %v952, %v1011
      %v1020 = vmul.f32 %v954, %v1012
      %v1021 = vmul.f32 %v956, %v1013
      %v1022 = vmul.f32 %v958, %v1014
      %v1023 = vld [vmem:[%s4] sm:$0xff]
      %v1025 = vsel %vm599, %v1023, 0
      %1027 = vmatprep.subr.mxu0 0.0
      %1028 = vmatpush1.msra.mxu0 0.0
      %1029 = vmatprep.subr.mxu0 0.0
      %1030 = vmatpush1.msra.mxu0 0.0
      %1031 = vmatprep.subr.mxu0 0.0
      %1032 = vmatpush1.msra.mxu0 0.0
      %1033 = vmatprep.subr.mxu0 0.0
      %1034 = vmatpush1.msra.mxu0 0.0
      %1035 = vmatprep.subr.mxu0 0.0
      %1036 = vmatpush1.msra.mxu0 0.0
      %1037 = vmatprep.subr.mxu0 0.0
      %1038 = vmatpush1.msra.mxu0 0.0
      %1039 = vmatprep.subr.mxu0 0.0
      %1040 = vmatpush1.msra.mxu0 0.0
      %1041 = vmatprep.subr.mxu0 0.0
      %1042 = vmatpush1.msra.mxu0 0.0
      %1043 = vmatprep.subr.mxu0 0.0
      %1044 = vmatpush1.msra.mxu0 0.0
      %1045 = vmatprep.subr.mxu0 0.0
      %1046 = vmatpush1.msra.mxu0 0.0
      %1047 = vmatprep.subr.mxu0 0.0
      %1048 = vmatpush1.msra.mxu0 0.0
      %1049 = vmatprep.subr.mxu0 0.0
      %1050 = vmatpush1.msra.mxu0 0.0
      %1051 = vmatprep.subr.mxu0 0.0
      %1052 = vmatpush1.msra.mxu0 0.0
      %1053 = vmatprep.subr.mxu0 0.0
      %1054 = vmatpush1.msra.mxu0 0.0
      %1055 = vmatprep.subr.mxu0 0.0
      %1056 = vmatpush1.msra.mxu0 0.0
      %1057 = vmatprep.subr.mxu0 %v591
      %1058 = vmatpush1.msra.mxu0 %v590
      %1059 = vmatprep.subr.mxu0 0.0
      %1060 = vmatpush2.msra.mxu0 0.0
      %1061 = vmatprep.subr.mxu0 0.0
      %1062 = vmatpush2.msra.mxu0 0.0
      %1063 = vmatprep.subr.mxu0 0.0
      %1064 = vmatpush2.msra.mxu0 0.0
      %1065 = vmatprep.subr.mxu0 0.0
      %1066 = vmatpush2.msra.mxu0 0.0
      %1067 = vmatprep.subr.mxu0 0.0
      %1068 = vmatpush2.msra.mxu0 0.0
      %1069 = vmatprep.subr.mxu0 0.0
      %1070 = vmatpush2.msra.mxu0 0.0
      %1071 = vmatprep.subr.mxu0 0.0
      %1072 = vmatpush2.msra.mxu0 0.0
      %1073 = vmatprep.subr.mxu0 0.0
      %1074 = vmatpush2.msra.mxu0 0.0
      %1075 = vmatprep.subr.mxu0 0.0
      %1076 = vmatpush2.msra.mxu0 0.0
      %1077 = vmatprep.subr.mxu0 0.0
      %1078 = vmatpush2.msra.mxu0 0.0
      %1079 = vmatprep.subr.mxu0 0.0
      %1080 = vmatpush2.msra.mxu0 0.0
      %1081 = vmatprep.subr.mxu0 0.0
      %1082 = vmatpush2.msra.mxu0 0.0
      %1083 = vmatprep.subr.mxu0 0.0
      %1084 = vmatpush2.msra.mxu0 0.0
      %1085 = vmatprep.subr.mxu0 0.0
      %1086 = vmatpush2.msra.mxu0 0.0
      %1087 = vmatprep.subr.mxu0 0.0
      %1088 = vmatpush2.msra.mxu0 0.0
      %1089 = vmatprep.subr.mxu0 0.0
      %1090 = vmatpush2.msra.mxu0 0.0
      %1091 = vmatprep.mubr.f32.mxu0 0.0
      %1092 = vmatmul.mubr.f32.gmra.mxu0 %v1025
      %v1093 = vpop.f32.mrf.mxu0
      %v1094 = vadd.f32 0.0, %v1093
      %v1095 = vpop.f32.mrf.mxu0
      %v1096 = vadd.f32 0.0, %v1095
      %1097 = vdwg.mxu0
      %1098 = vmatprep.subr.mxu0 0.0
      %1099 = vmatpush1.msra.mxu0 0.0
      %1100 = vmatprep.subr.mxu0 0.0
      %1101 = vmatpush1.msra.mxu0 0.0
      %1102 = vmatprep.subr.mxu0 0.0
      %1103 = vmatpush1.msra.mxu0 0.0
      %1104 = vmatprep.subr.mxu0 0.0
      %1105 = vmatpush1.msra.mxu0 0.0
      %1106 = vmatprep.subr.mxu0 0.0
      %1107 = vmatpush1.msra.mxu0 0.0
      %1108 = vmatprep.subr.mxu0 0.0
      %1109 = vmatpush1.msra.mxu0 0.0
      %1110 = vmatprep.subr.mxu0 0.0
      %1111 = vmatpush1.msra.mxu0 0.0
      %1112 = vmatprep.subr.mxu0 0.0
      %1113 = vmatpush1.msra.mxu0 0.0
      %1114 = vmatprep.subr.mxu0 0.0
      %1115 = vmatpush1.msra.mxu0 0.0
      %1116 = vmatprep.subr.mxu0 0.0
      %1117 = vmatpush1.msra.mxu0 0.0
      %1118 = vmatprep.subr.mxu0 0.0
      %1119 = vmatpush1.msra.mxu0 0.0
      %1120 = vmatprep.subr.mxu0 0.0
      %1121 = vmatpush1.msra.mxu0 0.0
      %1122 = vmatprep.subr.mxu0 0.0
      %1123 = vmatpush1.msra.mxu0 0.0
      %1124 = vmatprep.subr.mxu0 0.0
      %1125 = vmatpush1.msra.mxu0 0.0
      %1126 = vmatprep.subr.mxu0 0.0
      %1127 = vmatpush1.msra.mxu0 0.0
      %1128 = vmatprep.subr.mxu0 %v593
      %1129 = vmatpush1.msra.mxu0 %v592
      %1130 = vmatprep.subr.mxu0 0.0
      %1131 = vmatpush2.msra.mxu0 0.0
      %1132 = vmatprep.subr.mxu0 0.0
      %1133 = vmatpush2.msra.mxu0 0.0
      %1134 = vmatprep.subr.mxu0 0.0
      %1135 = vmatpush2.msra.mxu0 0.0
      %1136 = vmatprep.subr.mxu0 0.0
      %1137 = vmatpush2.msra.mxu0 0.0
      %1138 = vmatprep.subr.mxu0 0.0
      %1139 = vmatpush2.msra.mxu0 0.0
      %1140 = vmatprep.subr.mxu0 0.0
      %1141 = vmatpush2.msra.mxu0 0.0
      %1142 = vmatprep.subr.mxu0 0.0
      %1143 = vmatpush2.msra.mxu0 0.0
      %1144 = vmatprep.subr.mxu0 0.0
      %1145 = vmatpush2.msra.mxu0 0.0
      %1146 = vmatprep.subr.mxu0 0.0
      %1147 = vmatpush2.msra.mxu0 0.0
      %1148 = vmatprep.subr.mxu0 0.0
      %1149 = vmatpush2.msra.mxu0 0.0
      %1150 = vmatprep.subr.mxu0 0.0
      %1151 = vmatpush2.msra.mxu0 0.0
      %1152 = vmatprep.subr.mxu0 0.0
      %1153 = vmatpush2.msra.mxu0 0.0
      %1154 = vmatprep.subr.mxu0 0.0
      %1155 = vmatpush2.msra.mxu0 0.0
      %1156 = vmatprep.subr.mxu0 0.0
      %1157 = vmatpush2.msra.mxu0 0.0
      %1158 = vmatprep.subr.mxu0 0.0
      %1159 = vmatpush2.msra.mxu0 0.0
      %1160 = vmatprep.subr.mxu0 0.0
      %1161 = vmatpush2.msra.mxu0 0.0
      %1162 = vmatprep.mubr.f32.mxu0 0.0
      %1163 = vmatmul.mubr.f32.gmra.mxu0 %v1025
      %v1164 = vpop.f32.mrf.mxu0
      %v1165 = vadd.f32 0.0, %v1164
      %v1166 = vpop.f32.mrf.mxu0
      %v1167 = vadd.f32 0.0, %v1166
      %1168 = vdwg.mxu0
      %1169 = vmatprep.subr.mxu0 0.0
      %1170 = vmatpush1.msra.mxu0 0.0
      %1171 = vmatprep.subr.mxu0 0.0
      %1172 = vmatpush1.msra.mxu0 0.0
      %1173 = vmatprep.subr.mxu0 0.0
      %1174 = vmatpush1.msra.mxu0 0.0
      %1175 = vmatprep.subr.mxu0 0.0
      %1176 = vmatpush1.msra.mxu0 0.0
      %1177 = vmatprep.subr.mxu0 0.0
      %1178 = vmatpush1.msra.mxu0 0.0
      %1179 = vmatprep.subr.mxu0 0.0
      %1180 = vmatpush1.msra.mxu0 0.0
      %1181 = vmatprep.subr.mxu0 0.0
      %1182 = vmatpush1.msra.mxu0 0.0
      %1183 = vmatprep.subr.mxu0 0.0
      %1184 = vmatpush1.msra.mxu0 0.0
      %1185 = vmatprep.subr.mxu0 0.0
      %1186 = vmatpush1.msra.mxu0 0.0
      %1187 = vmatprep.subr.mxu0 0.0
      %1188 = vmatpush1.msra.mxu0 0.0
      %1189 = vmatprep.subr.mxu0 0.0
      %1190 = vmatpush1.msra.mxu0 0.0
      %1191 = vmatprep.subr.mxu0 0.0
      %1192 = vmatpush1.msra.mxu0 0.0
      %1193 = vmatprep.subr.mxu0 0.0
      %1194 = vmatpush1.msra.mxu0 0.0
      %1195 = vmatprep.subr.mxu0 0.0
      %1196 = vmatpush1.msra.mxu0 0.0
      %1197 = vmatprep.subr.mxu0 0.0
      %1198 = vmatpush1.msra.mxu0 0.0
      %1199 = vmatprep.subr.mxu0 %v595
      %1200 = vmatpush1.msra.mxu0 %v594
      %1201 = vmatprep.subr.mxu0 0.0
      %1202 = vmatpush2.msra.mxu0 0.0
      %1203 = vmatprep.subr.mxu0 0.0
      %1204 = vmatpush2.msra.mxu0 0.0
      %1205 = vmatprep.subr.mxu0 0.0
      %1206 = vmatpush2.msra.mxu0 0.0
      %1207 = vmatprep.subr.mxu0 0.0
      %1208 = vmatpush2.msra.mxu0 0.0
      %1209 = vmatprep.subr.mxu0 0.0
      %1210 = vmatpush2.msra.mxu0 0.0
      %1211 = vmatprep.subr.mxu0 0.0
      %1212 = vmatpush2.msra.mxu0 0.0
      %1213 = vmatprep.subr.mxu0 0.0
      %1214 = vmatpush2.msra.mxu0 0.0
      %1215 = vmatprep.subr.mxu0 0.0
      %1216 = vmatpush2.msra.mxu0 0.0
      %1217 = vmatprep.subr.mxu0 0.0
      %1218 = vmatpush2.msra.mxu0 0.0
      %1219 = vmatprep.subr.mxu0 0.0
      %1220 = vmatpush2.msra.mxu0 0.0
      %1221 = vmatprep.subr.mxu0 0.0
      %1222 = vmatpush2.msra.mxu0 0.0
      %1223 = vmatprep.subr.mxu0 0.0
      %1224 = vmatpush2.msra.mxu0 0.0
      %1225 = vmatprep.subr.mxu0 0.0
      %1226 = vmatpush2.msra.mxu0 0.0
      %1227 = vmatprep.subr.mxu0 0.0
      %1228 = vmatpush2.msra.mxu0 0.0
      %1229 = vmatprep.subr.mxu0 0.0
      %1230 = vmatpush2.msra.mxu0 0.0
      %1231 = vmatprep.subr.mxu0 0.0
      %1232 = vmatpush2.msra.mxu0 0.0
      %1233 = vmatprep.mubr.f32.mxu0 0.0
      %1234 = vmatmul.mubr.f32.gmra.mxu0 %v1025
      %v1235 = vpop.f32.mrf.mxu0
      %v1236 = vadd.f32 0.0, %v1235
      %v1237 = vpop.f32.mrf.mxu0
      %v1238 = vadd.f32 0.0, %v1237
      %1239 = vdwg.mxu0
      %1240 = vmatprep.subr.mxu0 0.0
      %1241 = vmatpush1.msra.mxu0 0.0
      %1242 = vmatprep.subr.mxu0 0.0
      %1243 = vmatpush1.msra.mxu0 0.0
      %1244 = vmatprep.subr.mxu0 0.0
      %1245 = vmatpush1.msra.mxu0 0.0
      %1246 = vmatprep.subr.mxu0 0.0
      %1247 = vmatpush1.msra.mxu0 0.0
      %1248 = vmatprep.subr.mxu0 0.0
      %1249 = vmatpush1.msra.mxu0 0.0
      %1250 = vmatprep.subr.mxu0 0.0
      %1251 = vmatpush1.msra.mxu0 0.0
      %1252 = vmatprep.subr.mxu0 0.0
      %1253 = vmatpush1.msra.mxu0 0.0
      %1254 = vmatprep.subr.mxu0 0.0
      %1255 = vmatpush1.msra.mxu0 0.0
      %1256 = vmatprep.subr.mxu0 0.0
      %1257 = vmatpush1.msra.mxu0 0.0
      %1258 = vmatprep.subr.mxu0 0.0
      %1259 = vmatpush1.msra.mxu0 0.0
      %1260 = vmatprep.subr.mxu0 0.0
      %1261 = vmatpush1.msra.mxu0 0.0
      %1262 = vmatprep.subr.mxu0 0.0
      %1263 = vmatpush1.msra.mxu0 0.0
      %1264 = vmatprep.subr.mxu0 0.0
      %1265 = vmatpush1.msra.mxu0 0.0
      %1266 = vmatprep.subr.mxu0 0.0
      %1267 = vmatpush1.msra.mxu0 0.0
      %1268 = vmatprep.subr.mxu0 0.0
      %1269 = vmatpush1.msra.mxu0 0.0
      %1270 = vmatprep.subr.mxu0 %v597
      %1271 = vmatpush1.msra.mxu0 %v596
      %1272 = vmatprep.subr.mxu0 0.0
      %1273 = vmatpush2.msra.mxu0 0.0
      %1274 = vmatprep.subr.mxu0 0.0
      %1275 = vmatpush2.msra.mxu0 0.0
      %1276 = vmatprep.subr.mxu0 0.0
      %1277 = vmatpush2.msra.mxu0 0.0
      %1278 = vmatprep.subr.mxu0 0.0
      %1279 = vmatpush2.msra.mxu0 0.0
      %1280 = vmatprep.subr.mxu0 0.0
      %1281 = vmatpush2.msra.mxu0 0.0
      %1282 = vmatprep.subr.mxu0 0.0
      %1283 = vmatpush2.msra.mxu0 0.0
      %1284 = vmatprep.subr.mxu0 0.0
      %1285 = vmatpush2.msra.mxu0 0.0
      %1286 = vmatprep.subr.mxu0 0.0
      %1287 = vmatpush2.msra.mxu0 0.0
      %1288 = vmatprep.subr.mxu0 0.0
      %1289 = vmatpush2.msra.mxu0 0.0
      %1290 = vmatprep.subr.mxu0 0.0
      %1291 = vmatpush2.msra.mxu0 0.0
      %1292 = vmatprep.subr.mxu0 0.0
      %1293 = vmatpush2.msra.mxu0 0.0
      %1294 = vmatprep.subr.mxu0 0.0
      %1295 = vmatpush2.msra.mxu0 0.0
      %1296 = vmatprep.subr.mxu0 0.0
      %1297 = vmatpush2.msra.mxu0 0.0
      %1298 = vmatprep.subr.mxu0 0.0
      %1299 = vmatpush2.msra.mxu0 0.0
      %1300 = vmatprep.subr.mxu0 0.0
      %1301 = vmatpush2.msra.mxu0 0.0
      %1302 = vmatprep.subr.mxu0 0.0
      %1303 = vmatpush2.msra.mxu0 0.0
      %1304 = vmatprep.mubr.f32.mxu0 0.0
      %1305 = vmatmul.mubr.f32.gmra.mxu0 %v1025
      %v1306 = vpop.f32.mrf.mxu0
      %v1307 = vadd.f32 0.0, %v1306
      %v1308 = vpop.f32.mrf.mxu0
      %v1309 = vadd.f32 0.0, %v1308
      %1310 = vdwg.mxu0
      %v1311 = vrot.slane %v1094, 4
      %v1312 = vmax.f32 %v1094, %v1311
      %v1313 = vrot.slane %v1312, 2
      %v1314 = vmax.f32 %v1312, %v1313
      %v1315 = vrot.slane %v1314, 1
      %v1316 = vmax.f32 %v1314, %v1315
      %v1317 = vrot.slane %v1096, 4
      %v1318 = vmax.f32 %v1096, %v1317
      %v1319 = vrot.slane %v1318, 2
      %v1320 = vmax.f32 %v1318, %v1319
      %v1321 = vrot.slane %v1320, 1
      %v1322 = vmax.f32 %v1320, %v1321
      %v1323 = vrot.slane %v1165, 4
      %v1324 = vmax.f32 %v1165, %v1323
      %v1325 = vrot.slane %v1324, 2
      %v1326 = vmax.f32 %v1324, %v1325
      %v1327 = vrot.slane %v1326, 1
      %v1328 = vmax.f32 %v1326, %v1327
      %v1329 = vrot.slane %v1167, 4
      %v1330 = vmax.f32 %v1167, %v1329
      %v1331 = vrot.slane %v1330, 2
      %v1332 = vmax.f32 %v1330, %v1331
      %v1333 = vrot.slane %v1332, 1
      %v1334 = vmax.f32 %v1332, %v1333
      %v1335 = vrot.slane %v1236, 4
      %v1336 = vmax.f32 %v1236, %v1335
      %v1337 = vrot.slane %v1336, 2
      %v1338 = vmax.f32 %v1336, %v1337
      %v1339 = vrot.slane %v1338, 1
      %v1340 = vmax.f32 %v1338, %v1339
      %v1341 = vrot.slane %v1238, 4
      %v1342 = vmax.f32 %v1238, %v1341
      %v1343 = vrot.slane %v1342, 2
      %v1344 = vmax.f32 %v1342, %v1343
      %v1345 = vrot.slane %v1344, 1
      %v1346 = vmax.f32 %v1344, %v1345
      %v1347 = vrot.slane %v1307, 4
      %v1348 = vmax.f32 %v1307, %v1347
      %v1349 = vrot.slane %v1348, 2
      %v1350 = vmax.f32 %v1348, %v1349
      %v1351 = vrot.slane %v1350, 1
      %v1352 = vmax.f32 %v1350, %v1351
      %v1353 = vrot.slane %v1309, 4
      %v1354 = vmax.f32 %v1309, %v1353
      %v1355 = vrot.slane %v1354, 2
      %v1356 = vmax.f32 %v1354, %v1355
      %v1357 = vrot.slane %v1356, 1
      %v1358 = vmax.f32 %v1356, %v1357
      %v1359 = vsub.f32 %v1094, %v1316
      %v1360 = vsub.f32 %v1096, %v1322
      %v1361 = vsub.f32 %v1165, %v1328
      %v1362 = vsub.f32 %v1167, %v1334
      %v1363 = vsub.f32 %v1236, %v1340
      %v1364 = vsub.f32 %v1238, %v1346
      %v1365 = vsub.f32 %v1307, %v1352
      %v1366 = vsub.f32 %v1309, %v1358
      %v1367 = vmul.f32 %v1359, 1.442695
      %v1368 = vpow.pop %v1367
      %v1369 = vmul.f32 %v1360, 1.442695
      %v1370 = vpow.pop %v1369
      %v1371 = vmul.f32 %v1361, 1.442695
      %v1372 = vpow.pop %v1371
      %v1373 = vmul.f32 %v1362, 1.442695
      %v1374 = vpow.pop %v1373
      %v1375 = vmul.f32 %v1363, 1.442695
      %v1376 = vpow.pop %v1375
      %v1377 = vmul.f32 %v1364, 1.442695
      %v1378 = vpow.pop %v1377
      %v1379 = vmul.f32 %v1365, 1.442695
      %v1380 = vpow.pop %v1379
      %v1381 = vmul.f32 %v1366, 1.442695
      %v1382 = vpow.pop %v1381
      %v1383 = vrot.slane %v1368, 4
      %v1384 = vadd.f32 %v1368, %v1383
      %v1385 = vrot.slane %v1384, 2
      %v1386 = vadd.f32 %v1384, %v1385
      %v1387 = vrot.slane %v1386, 1
      %v1388 = vadd.f32 %v1386, %v1387
      %v1389 = vrot.slane %v1370, 4
      %v1390 = vadd.f32 %v1370, %v1389
      %v1391 = vrot.slane %v1390, 2
      %v1392 = vadd.f32 %v1390, %v1391
      %v1393 = vrot.slane %v1392, 1
      %v1394 = vadd.f32 %v1392, %v1393
      %v1395 = vrot.slane %v1372, 4
      %v1396 = vadd.f32 %v1372, %v1395
      %v1397 = vrot.slane %v1396, 2
      %v1398 = vadd.f32 %v1396, %v1397
      %v1399 = vrot.slane %v1398, 1
      %v1400 = vadd.f32 %v1398, %v1399
      %v1401 = vrot.slane %v1374, 4
      %v1402 = vadd.f32 %v1374, %v1401
      %v1403 = vrot.slane %v1402, 2
      %v1404 = vadd.f32 %v1402, %v1403
      %v1405 = vrot.slane %v1404, 1
      %v1406 = vadd.f32 %v1404, %v1405
      %v1407 = vrot.slane %v1376, 4
      %v1408 = vadd.f32 %v1376, %v1407
      %v1409 = vrot.slane %v1408, 2
      %v1410 = vadd.f32 %v1408, %v1409
      %v1411 = vrot.slane %v1410, 1
      %v1412 = vadd.f32 %v1410, %v1411
      %v1413 = vrot.slane %v1378, 4
      %v1414 = vadd.f32 %v1378, %v1413
      %v1415 = vrot.slane %v1414, 2
      %v1416 = vadd.f32 %v1414, %v1415
      %v1417 = vrot.slane %v1416, 1
      %v1418 = vadd.f32 %v1416, %v1417
      %v1419 = vrot.slane %v1380, 4
      %v1420 = vadd.f32 %v1380, %v1419
      %v1421 = vrot.slane %v1420, 2
      %v1422 = vadd.f32 %v1420, %v1421
      %v1423 = vrot.slane %v1422, 1
      %v1424 = vadd.f32 %v1422, %v1423
      %v1425 = vrot.slane %v1382, 4
      %v1426 = vadd.f32 %v1382, %v1425
      %v1427 = vrot.slane %v1426, 2
      %v1428 = vadd.f32 %v1426, %v1427
      %v1429 = vrot.slane %v1428, 1
      %v1430 = vadd.f32 %v1428, %v1429
      %v1431 = vrcp.pop %v1388
      %v1432 = vrcp.pop %v1394
      %v1433 = vrcp.pop %v1400
      %v1434 = vrcp.pop %v1406
      %v1435 = vrcp.pop %v1412
      %v1436 = vrcp.pop %v1418
      %v1437 = vrcp.pop %v1424
      %v1438 = vrcp.pop %v1430
      %v1439 = vmul.f32 %v1368, %v1431
      %v1440 = vmul.f32 %v1370, %v1432
      %v1441 = vmul.f32 %v1372, %v1433
      %v1442 = vmul.f32 %v1374, %v1434
      %v1443 = vmul.f32 %v1376, %v1435
      %v1444 = vmul.f32 %v1378, %v1436
      %v1445 = vmul.f32 %v1380, %v1437
      %v1446 = vmul.f32 %v1382, %v1438
      %v1447 = vmul.f32 %v1015, %v582
      %v1448 = vmul.f32 %v1016, %v583
      %v1449 = vmul.f32 %v1017, %v584
      %v1450 = vmul.f32 %v1018, %v585
      %v1451 = vmul.f32 %v1019, %v586
      %v1452 = vmul.f32 %v1020, %v587
      %v1453 = vmul.f32 %v1021, %v588
      %v1454 = vmul.f32 %v1022, %v589
      %v1455 = vmul.f32 %v1439, %v590
      %v1456 = vmul.f32 %v1440, %v591
      %v1457 = vmul.f32 %v1441, %v592
      %v1458 = vmul.f32 %v1442, %v593
      %v1459 = vmul.f32 %v1443, %v594
      %v1460 = vmul.f32 %v1444, %v595
      %v1461 = vmul.f32 %v1445, %v596
      %v1462 = vmul.f32 %v1446, %v597
      %v1463 = vadd.f32 %v1447, %v1455
      %v1464 = vadd.f32 %v1448, %v1456
      %v1465 = vadd.f32 %v1449, %v1457
      %v1466 = vadd.f32 %v1450, %v1458
      %v1467 = vadd.f32 %v1451, %v1459
      %v1468 = vadd.f32 %v1452, %v1460
      %v1469 = vadd.f32 %v1453, %v1461
      %v1470 = vadd.f32 %v1454, %v1462
      %v1471 = vld [vmem:[%s365] sm:$0xff]
      %v1472 = vld [vmem:[%s365 + $0x8] sm:$0xff]
      %v1473 = vld [vmem:[%s365 + $0x10] sm:$0xff]
      %v1474 = vld [vmem:[%s365 + $0x18] sm:$0xff]
      %v1475 = vld [vmem:[%s365 + $0x20] sm:$0xff]
      %v1476 = vld [vmem:[%s365 + $0x28] sm:$0xff]
      %v1477 = vld [vmem:[%s365 + $0x30] sm:$0xff]
      %v1478 = vld [vmem:[%s365 + $0x38] sm:$0xff]
      %v1479 = vand.u32 2147483647, %v1471
      %vm1480 = vcmp.le.f32.partialorder %v1479, 0.7853982
      %vm1481 = vcmp.lt.s32.totalorder %v1471, 0
      %v1482 = vand.u32 %v1471, 2139095040
      %v1483 = vshrl.u32 %v1482, 23
      %v1484 = vsub.s32 %v1483, 127
      %v1485 = vand.u32 2147483647, %v1471
      %v1486 = vand.u32 %v1485, 8388607
      %v1487 = vor.u32 %v1486, 8388608
      %v1488 = vsub.s32 0, %v1487
      %v1489 = vadd.s32 %v1484, 1
      %vm1490 = vcmp.gt.s32.totalorder %v1489, 0
      %v1491 = vsel %vm1490, %v1489, 0
      %v1492 = vshrl.u32 %v1491, 5
      %v1493 = vand.u32 %v1491, 31
      %v1494 = vsub.s32 32, %v1493
      %v1495 = vshrl.u32 683565275, %v1494
      %v1496 = vshll.u32 683565275, %v1493
      %v1497 = vshrl.u32 2475754826, %v1494
      %v1498 = vor.u32 %v1496, %v1497
      %v1499 = vshll.u32 2475754826, %v1493
      %v1500 = vshrl.u32 2131351028, %v1494
      %v1501 = vor.u32 %v1499, %v1500
      %v1502 = vshll.u32 2131351028, %v1493
      %v1503 = vshrl.u32 2102212464, %v1494
      %v1504 = vor.u32 %v1502, %v1503
      %v1505 = vshll.u32 2102212464, %v1493
      %v1506 = vshrl.u32 920167782, %v1494
      %v1507 = vor.u32 %v1505, %v1506
      %v1508 = vshll.u32 920167782, %v1493
      %v1509 = vshrl.u32 1326507024, %v1494
      %v1510 = vor.u32 %v1508, %v1509
      %vm1511 = vcmp.lt.s32.totalorder %v1492, 1
      %vm1512 = vcmp.lt.s32.totalorder %v1492, 2
      %vm1513 = vcmp.lt.s32.totalorder %v1492, 3
      %vm1514 = vcmp.lt.s32.totalorder %v1492, 4
      %v1515 = vsel %vm1511, %v1495, %v1498
      %v1516 = vsel %vm1514, %v1504, 2102212464
      %v1517 = vsel %vm1513, %v1501, %v1516
      %v1518 = vsel %vm1512, %v1515, %v1517
      %v1519 = vsel %vm1511, %v1498, %v1501
      %v1520 = vsel %vm1514, %v1507, 920167782
      %v1521 = vsel %vm1513, %v1504, %v1520
      %v1522 = vsel %vm1512, %v1519, %v1521
      %v1523 = vsel %vm1511, %v1501, %v1504
      %v1524 = vsel %vm1514, %v1510, 1326507024
      %v1525 = vsel %vm1513, %v1507, %v1524
      %v1526 = vsel %vm1512, %v1523, %v1525
      %v1527 = vshll.u32 %v1487, 8
      %v1528 = vmul.u32.u64.compose %v1527, %v1526
      %v1529 = vextract.low.u32 %v1528
      %v1530 = vextract.high.u32 %v1528
      %v1531 = vmul.u32.u64.compose %v1527, %v1522
      %v1532 = vextract.low.u32 %v1531
      %v1533 = vextract.high.u32 %v1531
      %v1534 = vmul.u32 %v1527, %v1518
      %v1535 = vadd.s32 %v1530, %v1532
      %vm1536 = vc.u32 %v1530, %v1532
      %v1537 = vadd.s32 %v1533, 1
      %v1538 = vsel %vm1536, %v1537, %v1533
      %v1539 = vadd.s32 %v1534, %v1538
      %v1540 = vadd.s32 %v1539, 536870912
      %v1541 = vshrl.u32 %v1540, 30
      %v1542 = vshll.u32 %v1541, 30
      %v1543 = vsub.s32 %v1539, %v1542
      %vm1544 = vcmp.lt.s32.totalorder %v1543, 0
      %v1545 = vsub.s32 0, %v1543
      %v1546 = vsel %vm1544, %v1545, %v1543
      %v1547 = vclz %v1546
      %v1548 = vsub.s32 %v1547, 2
      %vm1549 = vcmp.gt.s32.totalorder 0, %v1548
      %v1550 = vsel %vm1549, 0, %v1548
      %v1551 = vsub.s32 32, %v1550
      %v1552 = vshll.u32 %v1543, %v1550
      %v1553 = vshrl.u32 %v1535, %v1551
      %v1554 = vor.u32 %v1552, %v1553
      %v1555 = vsub.s32 4294967266, %v1550
      %v1556 = vadd.s32 %v1555, 127
      %v1557 = vshll.u32 %v1556, 23
      %v1558 = vor.u32 4788187, %v1557
      %v1559 = vand.u32 2147483647, %v1558
      %v1561 = vcvt.s32.f32 %v1554
      %v1562 = vmul.f32 %v1561, %v1559
      %v1563 = vxor.u32 %v1562, 2147483648
      %v1564 = vsel %vm1481, %v1563, %v1562
      %v1565 = vsub.s32 4, %v1541
      %v1566 = vsel %vm1481, %v1565, %v1541
      %v1567 = vsel %vm1480, %v1471, %v1564
      %v1568 = vsel %vm1480, 0, %v1566
      %v1569 = vcosq.f32.pop %v1567
      %v1570 = vsinq.f32.pop %v1567
      %vm1571 = vweird.f32 %v1471
      %v1572 = vand.u32 %v1568, 3
      %vm1573 = vcmp.lt.s32.totalorder %v1572, 2
      %vm1574 = vcmp.eq.s32.totalorder %v1572, 0
      %v1575 = vxor.u32 %v1570, 2147483648
      %v1576 = vsel %vm1574, %v1569, %v1575
      %vm1577 = vcmp.eq.s32.totalorder %v1572, 2
      %v1578 = vxor.u32 %v1569, 2147483648
      %v1579 = vsel %vm1577, %v1578, %v1570
      %v1580 = vsel %vm1573, %v1576, %v1579
      %v1581 = vsel %vm1571, nan, %v1580
      %v1582 = vand.u32 2147483647, %v1472
      %vm1583 = vcmp.le.f32.partialorder %v1582, 0.7853982
      %vm1584 = vcmp.lt.s32.totalorder %v1472, 0
      %v1585 = vand.u32 %v1472, 2139095040
      %v1586 = vshrl.u32 %v1585, 23
      %v1587 = vsub.s32 %v1586, 127
      %v1588 = vand.u32 2147483647, %v1472
      %v1589 = vand.u32 %v1588, 8388607
      %v1590 = vor.u32 %v1589, 8388608
      %v1591 = vsub.s32 0, %v1590
      %v1592 = vadd.s32 %v1587, 1
      %vm1593 = vcmp.gt.s32.totalorder %v1592, 0
      %v1594 = vsel %vm1593, %v1592, 0
      %v1595 = vshrl.u32 %v1594, 5
      %v1596 = vand.u32 %v1594, 31
      %v1597 = vsub.s32 32, %v1596
      %v1598 = vshrl.u32 683565275, %v1597
      %v1599 = vshll.u32 683565275, %v1596
      %v1600 = vshrl.u32 2475754826, %v1597
      %v1601 = vor.u32 %v1599, %v1600
      %v1602 = vshll.u32 2475754826, %v1596
      %v1603 = vshrl.u32 2131351028, %v1597
      %v1604 = vor.u32 %v1602, %v1603
      %v1605 = vshll.u32 2131351028, %v1596
      %v1606 = vshrl.u32 2102212464, %v1597
      %v1607 = vor.u32 %v1605, %v1606
      %v1608 = vshll.u32 2102212464, %v1596
      %v1609 = vshrl.u32 920167782, %v1597
      %v1610 = vor.u32 %v1608, %v1609
      %v1611 = vshll.u32 920167782, %v1596
      %v1612 = vshrl.u32 1326507024, %v1597
      %v1613 = vor.u32 %v1611, %v1612
      %vm1614 = vcmp.lt.s32.totalorder %v1595, 1
      %vm1615 = vcmp.lt.s32.totalorder %v1595, 2
      %vm1616 = vcmp.lt.s32.totalorder %v1595, 3
      %vm1617 = vcmp.lt.s32.totalorder %v1595, 4
      %v1618 = vsel %vm1614, %v1598, %v1601
      %v1619 = vsel %vm1617, %v1607, 2102212464
      %v1620 = vsel %vm1616, %v1604, %v1619
      %v1621 = vsel %vm1615, %v1618, %v1620
      %v1622 = vsel %vm1614, %v1601, %v1604
      %v1623 = vsel %vm1617, %v1610, 920167782
      %v1624 = vsel %vm1616, %v1607, %v1623
      %v1625 = vsel %vm1615, %v1622, %v1624
      %v1626 = vsel %vm1614, %v1604, %v1607
      %v1627 = vsel %vm1617, %v1613, 1326507024
      %v1628 = vsel %vm1616, %v1610, %v1627
      %v1629 = vsel %vm1615, %v1626, %v1628
      %v1630 = vshll.u32 %v1590, 8
      %v1631 = vmul.u32.u64.compose %v1630, %v1629
      %v1632 = vextract.low.u32 %v1631
      %v1633 = vextract.high.u32 %v1631
      %v1634 = vmul.u32.u64.compose %v1630, %v1625
      %v1635 = vextract.low.u32 %v1634
      %v1636 = vextract.high.u32 %v1634
      %v1637 = vmul.u32 %v1630, %v1621
      %v1638 = vadd.s32 %v1633, %v1635
      %vm1639 = vc.u32 %v1633, %v1635
      %v1640 = vadd.s32 %v1636, 1
      %v1641 = vsel %vm1639, %v1640, %v1636
      %v1642 = vadd.s32 %v1637, %v1641
      %v1643 = vadd.s32 %v1642, 536870912
      %v1644 = vshrl.u32 %v1643, 30
      %v1645 = vshll.u32 %v1644, 30
      %v1646 = vsub.s32 %v1642, %v1645
      %vm1647 = vcmp.lt.s32.totalorder %v1646, 0
      %v1648 = vsub.s32 0, %v1646
      %v1649 = vsel %vm1647, %v1648, %v1646
      %v1650 = vclz %v1649
      %v1651 = vsub.s32 %v1650, 2
      %vm1652 = vcmp.gt.s32.totalorder 0, %v1651
      %v1653 = vsel %vm1652, 0, %v1651
      %v1654 = vsub.s32 32, %v1653
      %v1655 = vshll.u32 %v1646, %v1653
      %v1656 = vshrl.u32 %v1638, %v1654
      %v1657 = vor.u32 %v1655, %v1656
      %v1658 = vsub.s32 4294967266, %v1653
      %v1659 = vadd.s32 %v1658, 127
      %v1660 = vshll.u32 %v1659, 23
      %v1661 = vor.u32 4788187, %v1660
      %v1662 = vand.u32 2147483647, %v1661
      %v1664 = vcvt.s32.f32 %v1657
      %v1665 = vmul.f32 %v1664, %v1662
      %v1666 = vxor.u32 %v1665, 2147483648
      %v1667 = vsel %vm1584, %v1666, %v1665
      %v1668 = vsub.s32 4, %v1644
      %v1669 = vsel %vm1584, %v1668, %v1644
      %v1670 = vsel %vm1583, %v1472, %v1667
      %v1671 = vsel %vm1583, 0, %v1669
      %v1672 = vcosq.f32.pop %v1670
      %v1673 = vsinq.f32.pop %v1670
      %vm1674 = vweird.f32 %v1472
      %v1675 = vand.u32 %v1671, 3
      %vm1676 = vcmp.lt.s32.totalorder %v1675, 2
      %vm1677 = vcmp.eq.s32.totalorder %v1675, 0
      %v1678 = vxor.u32 %v1673, 2147483648
      %v1679 = vsel %vm1677, %v1672, %v1678
      %vm1680 = vcmp.eq.s32.totalorder %v1675, 2
      %v1681 = vxor.u32 %v1672, 2147483648
      %v1682 = vsel %vm1680, %v1681, %v1673
      %v1683 = vsel %vm1676, %v1679, %v1682
      %v1684 = vsel %vm1674, nan, %v1683
      %v1685 = vand.u32 2147483647, %v1473
      %vm1686 = vcmp.le.f32.partialorder %v1685, 0.7853982
      %vm1687 = vcmp.lt.s32.totalorder %v1473, 0
      %v1688 = vand.u32 %v1473, 2139095040
      %v1689 = vshrl.u32 %v1688, 23
      %v1690 = vsub.s32 %v1689, 127
      %v1691 = vand.u32 2147483647, %v1473
      %v1692 = vand.u32 %v1691, 8388607
      %v1693 = vor.u32 %v1692, 8388608
      %v1694 = vsub.s32 0, %v1693
      %v1695 = vadd.s32 %v1690, 1
      %vm1696 = vcmp.gt.s32.totalorder %v1695, 0
      %v1697 = vsel %vm1696, %v1695, 0
      %v1698 = vshrl.u32 %v1697, 5
      %v1699 = vand.u32 %v1697, 31
      %v1700 = vsub.s32 32, %v1699
      %v1701 = vshrl.u32 683565275, %v1700
      %v1702 = vshll.u32 683565275, %v1699
      %v1703 = vshrl.u32 2475754826, %v1700
      %v1704 = vor.u32 %v1702, %v1703
      %v1705 = vshll.u32 2475754826, %v1699
      %v1706 = vshrl.u32 2131351028, %v1700
      %v1707 = vor.u32 %v1705, %v1706
      %v1708 = vshll.u32 2131351028, %v1699
      %v1709 = vshrl.u32 2102212464, %v1700
      %v1710 = vor.u32 %v1708, %v1709
      %v1711 = vshll.u32 2102212464, %v1699
      %v1712 = vshrl.u32 920167782, %v1700
      %v1713 = vor.u32 %v1711, %v1712
      %v1714 = vshll.u32 920167782, %v1699
      %v1715 = vshrl.u32 1326507024, %v1700
      %v1716 = vor.u32 %v1714, %v1715
      %vm1717 = vcmp.lt.s32.totalorder %v1698, 1
      %vm1718 = vcmp.lt.s32.totalorder %v1698, 2
      %vm1719 = vcmp.lt.s32.totalorder %v1698, 3
      %vm1720 = vcmp.lt.s32.totalorder %v1698, 4
      %v1721 = vsel %vm1717, %v1701, %v1704
      %v1722 = vsel %vm1720, %v1710, 2102212464
      %v1723 = vsel %vm1719, %v1707, %v1722
      %v1724 = vsel %vm1718, %v1721, %v1723
      %v1725 = vsel %vm1717, %v1704, %v1707
      %v1726 = vsel %vm1720, %v1713, 920167782
      %v1727 = vsel %vm1719, %v1710, %v1726
      %v1728 = vsel %vm1718, %v1725, %v1727
      %v1729 = vsel %vm1717, %v1707, %v1710
      %v1730 = vsel %vm1720, %v1716, 1326507024
      %v1731 = vsel %vm1719, %v1713, %v1730
      %v1732 = vsel %vm1718, %v1729, %v1731
      %v1733 = vshll.u32 %v1693, 8
      %v1734 = vmul.u32.u64.compose %v1733, %v1732
      %v1735 = vextract.low.u32 %v1734
      %v1736 = vextract.high.u32 %v1734
      %v1737 = vmul.u32.u64.compose %v1733, %v1728
      %v1738 = vextract.low.u32 %v1737
      %v1739 = vextract.high.u32 %v1737
      %v1740 = vmul.u32 %v1733, %v1724
      %v1741 = vadd.s32 %v1736, %v1738
      %vm1742 = vc.u32 %v1736, %v1738
      %v1743 = vadd.s32 %v1739, 1
      %v1744 = vsel %vm1742, %v1743, %v1739
      %v1745 = vadd.s32 %v1740, %v1744
      %v1746 = vadd.s32 %v1745, 536870912
      %v1747 = vshrl.u32 %v1746, 30
      %v1748 = vshll.u32 %v1747, 30
      %v1749 = vsub.s32 %v1745, %v1748
      %vm1750 = vcmp.lt.s32.totalorder %v1749, 0
      %v1751 = vsub.s32 0, %v1749
      %v1752 = vsel %vm1750, %v1751, %v1749
      %v1753 = vclz %v1752
      %v1754 = vsub.s32 %v1753, 2
      %vm1755 = vcmp.gt.s32.totalorder 0, %v1754
      %v1756 = vsel %vm1755, 0, %v1754
      %v1757 = vsub.s32 32, %v1756
      %v1758 = vshll.u32 %v1749, %v1756
      %v1759 = vshrl.u32 %v1741, %v1757
      %v1760 = vor.u32 %v1758, %v1759
      %v1761 = vsub.s32 4294967266, %v1756
      %v1762 = vadd.s32 %v1761, 127
      %v1763 = vshll.u32 %v1762, 23
      %v1764 = vor.u32 4788187, %v1763
      %v1765 = vand.u32 2147483647, %v1764
      %v1767 = vcvt.s32.f32 %v1760
      %v1768 = vmul.f32 %v1767, %v1765
      %v1769 = vxor.u32 %v1768, 2147483648
      %v1770 = vsel %vm1687, %v1769, %v1768
      %v1771 = vsub.s32 4, %v1747
      %v1772 = vsel %vm1687, %v1771, %v1747
      %v1773 = vsel %vm1686, %v1473, %v1770
      %v1774 = vsel %vm1686, 0, %v1772
      %v1775 = vcosq.f32.pop %v1773
      %v1776 = vsinq.f32.pop %v1773
      %vm1777 = vweird.f32 %v1473
      %v1778 = vand.u32 %v1774, 3
      %vm1779 = vcmp.lt.s32.totalorder %v1778, 2
      %vm1780 = vcmp.eq.s32.totalorder %v1778, 0
      %v1781 = vxor.u32 %v1776, 2147483648
      %v1782 = vsel %vm1780, %v1775, %v1781
      %vm1783 = vcmp.eq.s32.totalorder %v1778, 2
      %v1784 = vxor.u32 %v1775, 2147483648
      %v1785 = vsel %vm1783, %v1784, %v1776
      %v1786 = vsel %vm1779, %v1782, %v1785
      %v1787 = vsel %vm1777, nan, %v1786
      %v1788 = vand.u32 2147483647, %v1474
      %vm1789 = vcmp.le.f32.partialorder %v1788, 0.7853982
      %vm1790 = vcmp.lt.s32.totalorder %v1474, 0
      %v1791 = vand.u32 %v1474, 2139095040
      %v1792 = vshrl.u32 %v1791, 23
      %v1793 = vsub.s32 %v1792, 127
      %v1794 = vand.u32 2147483647, %v1474
      %v1795 = vand.u32 %v1794, 8388607
      %v1796 = vor.u32 %v1795, 8388608
      %v1797 = vsub.s32 0, %v1796
      %v1798 = vadd.s32 %v1793, 1
      %vm1799 = vcmp.gt.s32.totalorder %v1798, 0
      %v1800 = vsel %vm1799, %v1798, 0
      %v1801 = vshrl.u32 %v1800, 5
      %v1802 = vand.u32 %v1800, 31
      %v1803 = vsub.s32 32, %v1802
      %v1804 = vshrl.u32 683565275, %v1803
      %v1805 = vshll.u32 683565275, %v1802
      %v1806 = vshrl.u32 2475754826, %v1803
      %v1807 = vor.u32 %v1805, %v1806
      %v1808 = vshll.u32 2475754826, %v1802
      %v1809 = vshrl.u32 2131351028, %v1803
      %v1810 = vor.u32 %v1808, %v1809
      %v1811 = vshll.u32 2131351028, %v1802
      %v1812 = vshrl.u32 2102212464, %v1803
      %v1813 = vor.u32 %v1811, %v1812
      %v1814 = vshll.u32 2102212464, %v1802
      %v1815 = vshrl.u32 920167782, %v1803
      %v1816 = vor.u32 %v1814, %v1815
      %v1817 = vshll.u32 920167782, %v1802
      %v1818 = vshrl.u32 1326507024, %v1803
      %v1819 = vor.u32 %v1817, %v1818
      %vm1820 = vcmp.lt.s32.totalorder %v1801, 1
      %vm1821 = vcmp.lt.s32.totalorder %v1801, 2
      %vm1822 = vcmp.lt.s32.totalorder %v1801, 3
      %vm1823 = vcmp.lt.s32.totalorder %v1801, 4
      %v1824 = vsel %vm1820, %v1804, %v1807
      %v1825 = vsel %vm1823, %v1813, 2102212464
      %v1826 = vsel %vm1822, %v1810, %v1825
      %v1827 = vsel %vm1821, %v1824, %v1826
      %v1828 = vsel %vm1820, %v1807, %v1810
      %v1829 = vsel %vm1823, %v1816, 920167782
      %v1830 = vsel %vm1822, %v1813, %v1829
      %v1831 = vsel %vm1821, %v1828, %v1830
      %v1832 = vsel %vm1820, %v1810, %v1813
      %v1833 = vsel %vm1823, %v1819, 1326507024
      %v1834 = vsel %vm1822, %v1816, %v1833
      %v1835 = vsel %vm1821, %v1832, %v1834
      %v1836 = vshll.u32 %v1796, 8
      %v1837 = vmul.u32.u64.compose %v1836, %v1835
      %v1838 = vextract.low.u32 %v1837
      %v1839 = vextract.high.u32 %v1837
      %v1840 = vmul.u32.u64.compose %v1836, %v1831
      %v1841 = vextract.low.u32 %v1840
      %v1842 = vextract.high.u32 %v1840
      %v1843 = vmul.u32 %v1836, %v1827
      %v1844 = vadd.s32 %v1839, %v1841
      %vm1845 = vc.u32 %v1839, %v1841
      %v1846 = vadd.s32 %v1842, 1
      %v1847 = vsel %vm1845, %v1846, %v1842
      %v1848 = vadd.s32 %v1843, %v1847
      %v1849 = vadd.s32 %v1848, 536870912
      %v1850 = vshrl.u32 %v1849, 30
      %v1851 = vshll.u32 %v1850, 30
      %v1852 = vsub.s32 %v1848, %v1851
      %vm1853 = vcmp.lt.s32.totalorder %v1852, 0
      %v1854 = vsub.s32 0, %v1852
      %v1855 = vsel %vm1853, %v1854, %v1852
      %v1856 = vclz %v1855
      %v1857 = vsub.s32 %v1856, 2
      %vm1858 = vcmp.gt.s32.totalorder 0, %v1857
      %v1859 = vsel %vm1858, 0, %v1857
      %v1860 = vsub.s32 32, %v1859
      %v1861 = vshll.u32 %v1852, %v1859
      %v1862 = vshrl.u32 %v1844, %v1860
      %v1863 = vor.u32 %v1861, %v1862
      %v1864 = vsub.s32 4294967266, %v1859
      %v1865 = vadd.s32 %v1864, 127
      %v1866 = vshll.u32 %v1865, 23
      %v1867 = vor.u32 4788187, %v1866
      %v1868 = vand.u32 2147483647, %v1867
      %v1870 = vcvt.s32.f32 %v1863
      %v1871 = vmul.f32 %v1870, %v1868
      %v1872 = vxor.u32 %v1871, 2147483648
      %v1873 = vsel %vm1790, %v1872, %v1871
      %v1874 = vsub.s32 4, %v1850
      %v1875 = vsel %vm1790, %v1874, %v1850
      %v1876 = vsel %vm1789, %v1474, %v1873
      %v1877 = vsel %vm1789, 0, %v1875
      %v1878 = vcosq.f32.pop %v1876
      %v1879 = vsinq.f32.pop %v1876
      %vm1880 = vweird.f32 %v1474
      %v1881 = vand.u32 %v1877, 3
      %vm1882 = vcmp.lt.s32.totalorder %v1881, 2
      %vm1883 = vcmp.eq.s32.totalorder %v1881, 0
      %v1884 = vxor.u32 %v1879, 2147483648
      %v1885 = vsel %vm1883, %v1878, %v1884
      %vm1886 = vcmp.eq.s32.totalorder %v1881, 2
      %v1887 = vxor.u32 %v1878, 2147483648
      %v1888 = vsel %vm1886, %v1887, %v1879
      %v1889 = vsel %vm1882, %v1885, %v1888
      %v1890 = vsel %vm1880, nan, %v1889
      %v1891 = vand.u32 2147483647, %v1475
      %vm1892 = vcmp.le.f32.partialorder %v1891, 0.7853982
      %vm1893 = vcmp.lt.s32.totalorder %v1475, 0
      %v1894 = vand.u32 %v1475, 2139095040
      %v1895 = vshrl.u32 %v1894, 23
      %v1896 = vsub.s32 %v1895, 127
      %v1897 = vand.u32 2147483647, %v1475
      %v1898 = vand.u32 %v1897, 8388607
      %v1899 = vor.u32 %v1898, 8388608
      %v1900 = vsub.s32 0, %v1899
      %v1901 = vadd.s32 %v1896, 1
      %vm1902 = vcmp.gt.s32.totalorder %v1901, 0
      %v1903 = vsel %vm1902, %v1901, 0
      %v1904 = vshrl.u32 %v1903, 5
      %v1905 = vand.u32 %v1903, 31
      %v1906 = vsub.s32 32, %v1905
      %v1907 = vshrl.u32 683565275, %v1906
      %v1908 = vshll.u32 683565275, %v1905
      %v1909 = vshrl.u32 2475754826, %v1906
      %v1910 = vor.u32 %v1908, %v1909
      %v1911 = vshll.u32 2475754826, %v1905
      %v1912 = vshrl.u32 2131351028, %v1906
      %v1913 = vor.u32 %v1911, %v1912
      %v1914 = vshll.u32 2131351028, %v1905
      %v1915 = vshrl.u32 2102212464, %v1906
      %v1916 = vor.u32 %v1914, %v1915
      %v1917 = vshll.u32 2102212464, %v1905
      %v1918 = vshrl.u32 920167782, %v1906
      %v1919 = vor.u32 %v1917, %v1918
      %v1920 = vshll.u32 920167782, %v1905
      %v1921 = vshrl.u32 1326507024, %v1906
      %v1922 = vor.u32 %v1920, %v1921
      %vm1923 = vcmp.lt.s32.totalorder %v1904, 1
      %vm1924 = vcmp.lt.s32.totalorder %v1904, 2
      %vm1925 = vcmp.lt.s32.totalorder %v1904, 3
      %vm1926 = vcmp.lt.s32.totalorder %v1904, 4
      %v1927 = vsel %vm1923, %v1907, %v1910
      %v1928 = vsel %vm1926, %v1916, 2102212464
      %v1929 = vsel %vm1925, %v1913, %v1928
      %v1930 = vsel %vm1924, %v1927, %v1929
      %v1931 = vsel %vm1923, %v1910, %v1913
      %v1932 = vsel %vm1926, %v1919, 920167782
      %v1933 = vsel %vm1925, %v1916, %v1932
      %v1934 = vsel %vm1924, %v1931, %v1933
      %v1935 = vsel %vm1923, %v1913, %v1916
      %v1936 = vsel %vm1926, %v1922, 1326507024
      %v1937 = vsel %vm1925, %v1919, %v1936
      %v1938 = vsel %vm1924, %v1935, %v1937
      %v1939 = vshll.u32 %v1899, 8
      %v1940 = vmul.u32.u64.compose %v1939, %v1938
      %v1941 = vextract.low.u32 %v1940
      %v1942 = vextract.high.u32 %v1940
      %v1943 = vmul.u32.u64.compose %v1939, %v1934
      %v1944 = vextract.low.u32 %v1943
      %v1945 = vextract.high.u32 %v1943
      %v1946 = vmul.u32 %v1939, %v1930
      %v1947 = vadd.s32 %v1942, %v1944
      %vm1948 = vc.u32 %v1942, %v1944
      %v1949 = vadd.s32 %v1945, 1
      %v1950 = vsel %vm1948, %v1949, %v1945
      %v1951 = vadd.s32 %v1946, %v1950
      %v1952 = vadd.s32 %v1951, 536870912
      %v1953 = vshrl.u32 %v1952, 30
      %v1954 = vshll.u32 %v1953, 30
      %v1955 = vsub.s32 %v1951, %v1954
      %vm1956 = vcmp.lt.s32.totalorder %v1955, 0
      %v1957 = vsub.s32 0, %v1955
      %v1958 = vsel %vm1956, %v1957, %v1955
      %v1959 = vclz %v1958
      %v1960 = vsub.s32 %v1959, 2
      %vm1961 = vcmp.gt.s32.totalorder 0, %v1960
      %v1962 = vsel %vm1961, 0, %v1960
      %v1963 = vsub.s32 32, %v1962
      %v1964 = vshll.u32 %v1955, %v1962
      %v1965 = vshrl.u32 %v1947, %v1963
      %v1966 = vor.u32 %v1964, %v1965
      %v1967 = vsub.s32 4294967266, %v1962
      %v1968 = vadd.s32 %v1967, 127
      %v1969 = vshll.u32 %v1968, 23
      %v1970 = vor.u32 4788187, %v1969
      %v1971 = vand.u32 2147483647, %v1970
      %v1973 = vcvt.s32.f32 %v1966
      %v1974 = vmul.f32 %v1973, %v1971
      %v1975 = vxor.u32 %v1974, 2147483648
      %v1976 = vsel %vm1893, %v1975, %v1974
      %v1977 = vsub.s32 4, %v1953
      %v1978 = vsel %vm1893, %v1977, %v1953
      %v1979 = vsel %vm1892, %v1475, %v1976
      %v1980 = vsel %vm1892, 0, %v1978
      %v1981 = vcosq.f32.pop %v1979
      %v1982 = vsinq.f32.pop %v1979
      %vm1983 = vweird.f32 %v1475
      %v1984 = vand.u32 %v1980, 3
      %vm1985 = vcmp.lt.s32.totalorder %v1984, 2
      %vm1986 = vcmp.eq.s32.totalorder %v1984, 0
      %v1987 = vxor.u32 %v1982, 2147483648
      %v1988 = vsel %vm1986, %v1981, %v1987
      %vm1989 = vcmp.eq.s32.totalorder %v1984, 2
      %v1990 = vxor.u32 %v1981, 2147483648
      %v1991 = vsel %vm1989, %v1990, %v1982
      %v1992 = vsel %vm1985, %v1988, %v1991
      %v1993 = vsel %vm1983, nan, %v1992
      %v1994 = vand.u32 2147483647, %v1476
      %vm1995 = vcmp.le.f32.partialorder %v1994, 0.7853982
      %vm1996 = vcmp.lt.s32.totalorder %v1476, 0
      %v1997 = vand.u32 %v1476, 2139095040
      %v1998 = vshrl.u32 %v1997, 23
      %v1999 = vsub.s32 %v1998, 127
      %v2000 = vand.u32 2147483647, %v1476
      %v2001 = vand.u32 %v2000, 8388607
      %v2002 = vor.u32 %v2001, 8388608
      %v2003 = vsub.s32 0, %v2002
      %v2004 = vadd.s32 %v1999, 1
      %vm2005 = vcmp.gt.s32.totalorder %v2004, 0
      %v2006 = vsel %vm2005, %v2004, 0
      %v2007 = vshrl.u32 %v2006, 5
      %v2008 = vand.u32 %v2006, 31
      %v2009 = vsub.s32 32, %v2008
      %v2010 = vshrl.u32 683565275, %v2009
      %v2011 = vshll.u32 683565275, %v2008
      %v2012 = vshrl.u32 2475754826, %v2009
      %v2013 = vor.u32 %v2011, %v2012
      %v2014 = vshll.u32 2475754826, %v2008
      %v2015 = vshrl.u32 2131351028, %v2009
      %v2016 = vor.u32 %v2014, %v2015
      %v2017 = vshll.u32 2131351028, %v2008
      %v2018 = vshrl.u32 2102212464, %v2009
      %v2019 = vor.u32 %v2017, %v2018
      %v2020 = vshll.u32 2102212464, %v2008
      %v2021 = vshrl.u32 920167782, %v2009
      %v2022 = vor.u32 %v2020, %v2021
      %v2023 = vshll.u32 920167782, %v2008
      %v2024 = vshrl.u32 1326507024, %v2009
      %v2025 = vor.u32 %v2023, %v2024
      %vm2026 = vcmp.lt.s32.totalorder %v2007, 1
      %vm2027 = vcmp.lt.s32.totalorder %v2007, 2
      %vm2028 = vcmp.lt.s32.totalorder %v2007, 3
      %vm2029 = vcmp.lt.s32.totalorder %v2007, 4
      %v2030 = vsel %vm2026, %v2010, %v2013
      %v2031 = vsel %vm2029, %v2019, 2102212464
      %v2032 = vsel %vm2028, %v2016, %v2031
      %v2033 = vsel %vm2027, %v2030, %v2032
      %v2034 = vsel %vm2026, %v2013, %v2016
      %v2035 = vsel %vm2029, %v2022, 920167782
      %v2036 = vsel %vm2028, %v2019, %v2035
      %v2037 = vsel %vm2027, %v2034, %v2036
      %v2038 = vsel %vm2026, %v2016, %v2019
      %v2039 = vsel %vm2029, %v2025, 1326507024
      %v2040 = vsel %vm2028, %v2022, %v2039
      %v2041 = vsel %vm2027, %v2038, %v2040
      %v2042 = vshll.u32 %v2002, 8
      %v2043 = vmul.u32.u64.compose %v2042, %v2041
      %v2044 = vextract.low.u32 %v2043
      %v2045 = vextract.high.u32 %v2043
      %v2046 = vmul.u32.u64.compose %v2042, %v2037
      %v2047 = vextract.low.u32 %v2046
      %v2048 = vextract.high.u32 %v2046
      %v2049 = vmul.u32 %v2042, %v2033
      %v2050 = vadd.s32 %v2045, %v2047
      %vm2051 = vc.u32 %v2045, %v2047
      %v2052 = vadd.s32 %v2048, 1
      %v2053 = vsel %vm2051, %v2052, %v2048
      %v2054 = vadd.s32 %v2049, %v2053
      %v2055 = vadd.s32 %v2054, 536870912
      %v2056 = vshrl.u32 %v2055, 30
      %v2057 = vshll.u32 %v2056, 30
      %v2058 = vsub.s32 %v2054, %v2057
      %vm2059 = vcmp.lt.s32.totalorder %v2058, 0
      %v2060 = vsub.s32 0, %v2058
      %v2061 = vsel %vm2059, %v2060, %v2058
      %v2062 = vclz %v2061
      %v2063 = vsub.s32 %v2062, 2
      %vm2064 = vcmp.gt.s32.totalorder 0, %v2063
      %v2065 = vsel %vm2064, 0, %v2063
      %v2066 = vsub.s32 32, %v2065
      %v2067 = vshll.u32 %v2058, %v2065
      %v2068 = vshrl.u32 %v2050, %v2066
      %v2069 = vor.u32 %v2067, %v2068
      %v2070 = vsub.s32 4294967266, %v2065
      %v2071 = vadd.s32 %v2070, 127
      %v2072 = vshll.u32 %v2071, 23
      %v2073 = vor.u32 4788187, %v2072
      %v2074 = vand.u32 2147483647, %v2073
      %v2076 = vcvt.s32.f32 %v2069
      %v2077 = vmul.f32 %v2076, %v2074
      %v2078 = vxor.u32 %v2077, 2147483648
      %v2079 = vsel %vm1996, %v2078, %v2077
      %v2080 = vsub.s32 4, %v2056
      %v2081 = vsel %vm1996, %v2080, %v2056
      %v2082 = vsel %vm1995, %v1476, %v2079
      %v2083 = vsel %vm1995, 0, %v2081
      %v2084 = vcosq.f32.pop %v2082
      %v2085 = vsinq.f32.pop %v2082
      %vm2086 = vweird.f32 %v1476
      %v2087 = vand.u32 %v2083, 3
      %vm2088 = vcmp.lt.s32.totalorder %v2087, 2
      %vm2089 = vcmp.eq.s32.totalorder %v2087, 0
      %v2090 = vxor.u32 %v2085, 2147483648
      %v2091 = vsel %vm2089, %v2084, %v2090
      %vm2092 = vcmp.eq.s32.totalorder %v2087, 2
      %v2093 = vxor.u32 %v2084, 2147483648
      %v2094 = vsel %vm2092, %v2093, %v2085
      %v2095 = vsel %vm2088, %v2091, %v2094
      %v2096 = vsel %vm2086, nan, %v2095
      %v2097 = vand.u32 2147483647, %v1477
      %vm2098 = vcmp.le.f32.partialorder %v2097, 0.7853982
      %vm2099 = vcmp.lt.s32.totalorder %v1477, 0
      %v2100 = vand.u32 %v1477, 2139095040
      %v2101 = vshrl.u32 %v2100, 23
      %v2102 = vsub.s32 %v2101, 127
      %v2103 = vand.u32 2147483647, %v1477
      %v2104 = vand.u32 %v2103, 8388607
      %v2105 = vor.u32 %v2104, 8388608
      %v2106 = vsub.s32 0, %v2105
      %v2107 = vadd.s32 %v2102, 1
      %vm2108 = vcmp.gt.s32.totalorder %v2107, 0
      %v2109 = vsel %vm2108, %v2107, 0
      %v2110 = vshrl.u32 %v2109, 5
      %v2111 = vand.u32 %v2109, 31
      %v2112 = vsub.s32 32, %v2111
      %v2113 = vshrl.u32 683565275, %v2112
      %v2114 = vshll.u32 683565275, %v2111
      %v2115 = vshrl.u32 2475754826, %v2112
      %v2116 = vor.u32 %v2114, %v2115
      %v2117 = vshll.u32 2475754826, %v2111
      %v2118 = vshrl.u32 2131351028, %v2112
      %v2119 = vor.u32 %v2117, %v2118
      %v2120 = vshll.u32 2131351028, %v2111
      %v2121 = vshrl.u32 2102212464, %v2112
      %v2122 = vor.u32 %v2120, %v2121
      %v2123 = vshll.u32 2102212464, %v2111
      %v2124 = vshrl.u32 920167782, %v2112
      %v2125 = vor.u32 %v2123, %v2124
      %v2126 = vshll.u32 920167782, %v2111
      %v2127 = vshrl.u32 1326507024, %v2112
      %v2128 = vor.u32 %v2126, %v2127
      %vm2129 = vcmp.lt.s32.totalorder %v2110, 1
      %vm2130 = vcmp.lt.s32.totalorder %v2110, 2
      %vm2131 = vcmp.lt.s32.totalorder %v2110, 3
      %vm2132 = vcmp.lt.s32.totalorder %v2110, 4
      %v2133 = vsel %vm2129, %v2113, %v2116
      %v2134 = vsel %vm2132, %v2122, 2102212464
      %v2135 = vsel %vm2131, %v2119, %v2134
      %v2136 = vsel %vm2130, %v2133, %v2135
      %v2137 = vsel %vm2129, %v2116, %v2119
      %v2138 = vsel %vm2132, %v2125, 920167782
      %v2139 = vsel %vm2131, %v2122, %v2138
      %v2140 = vsel %vm2130, %v2137, %v2139
      %v2141 = vsel %vm2129, %v2119, %v2122
      %v2142 = vsel %vm2132, %v2128, 1326507024
      %v2143 = vsel %vm2131, %v2125, %v2142
      %v2144 = vsel %vm2130, %v2141, %v2143
      %v2145 = vshll.u32 %v2105, 8
      %v2146 = vmul.u32.u64.compose %v2145, %v2144
      %v2147 = vextract.low.u32 %v2146
      %v2148 = vextract.high.u32 %v2146
      %v2149 = vmul.u32.u64.compose %v2145, %v2140
      %v2150 = vextract.low.u32 %v2149
      %v2151 = vextract.high.u32 %v2149
      %v2152 = vmul.u32 %v2145, %v2136
      %v2153 = vadd.s32 %v2148, %v2150
      %vm2154 = vc.u32 %v2148, %v2150
      %v2155 = vadd.s32 %v2151, 1
      %v2156 = vsel %vm2154, %v2155, %v2151
      %v2157 = vadd.s32 %v2152, %v2156
      %v2158 = vadd.s32 %v2157, 536870912
      %v2159 = vshrl.u32 %v2158, 30
      %v2160 = vshll.u32 %v2159, 30
      %v2161 = vsub.s32 %v2157, %v2160
      %vm2162 = vcmp.lt.s32.totalorder %v2161, 0
      %v2163 = vsub.s32 0, %v2161
      %v2164 = vsel %vm2162, %v2163, %v2161
      %v2165 = vclz %v2164
      %v2166 = vsub.s32 %v2165, 2
      %vm2167 = vcmp.gt.s32.totalorder 0, %v2166
      %v2168 = vsel %vm2167, 0, %v2166
      %v2169 = vsub.s32 32, %v2168
      %v2170 = vshll.u32 %v2161, %v2168
      %v2171 = vshrl.u32 %v2153, %v2169
      %v2172 = vor.u32 %v2170, %v2171
      %v2173 = vsub.s32 4294967266, %v2168
      %v2174 = vadd.s32 %v2173, 127
      %v2175 = vshll.u32 %v2174, 23
      %v2176 = vor.u32 4788187, %v2175
      %v2177 = vand.u32 2147483647, %v2176
      %v2179 = vcvt.s32.f32 %v2172
      %v2180 = vmul.f32 %v2179, %v2177
      %v2181 = vxor.u32 %v2180, 2147483648
      %v2182 = vsel %vm2099, %v2181, %v2180
      %v2183 = vsub.s32 4, %v2159
      %v2184 = vsel %vm2099, %v2183, %v2159
      %v2185 = vsel %vm2098, %v1477, %v2182
      %v2186 = vsel %vm2098, 0, %v2184
      %v2187 = vcosq.f32.pop %v2185
      %v2188 = vsinq.f32.pop %v2185
      %vm2189 = vweird.f32 %v1477
      %v2190 = vand.u32 %v2186, 3
      %vm2191 = vcmp.lt.s32.totalorder %v2190, 2
      %vm2192 = vcmp.eq.s32.totalorder %v2190, 0
      %v2193 = vxor.u32 %v2188, 2147483648
      %v2194 = vsel %vm2192, %v2187, %v2193
      %vm2195 = vcmp.eq.s32.totalorder %v2190, 2
      %v2196 = vxor.u32 %v2187, 2147483648
      %v2197 = vsel %vm2195, %v2196, %v2188
      %v2198 = vsel %vm2191, %v2194, %v2197
      %v2199 = vsel %vm2189, nan, %v2198
      %v2200 = vand.u32 2147483647, %v1478
      %vm2201 = vcmp.le.f32.partialorder %v2200, 0.7853982
      %vm2202 = vcmp.lt.s32.totalorder %v1478, 0
      %v2203 = vand.u32 %v1478, 2139095040
      %v2204 = vshrl.u32 %v2203, 23
      %v2205 = vsub.s32 %v2204, 127
      %v2206 = vand.u32 2147483647, %v1478
      %v2207 = vand.u32 %v2206, 8388607
      %v2208 = vor.u32 %v2207, 8388608
      %v2209 = vsub.s32 0, %v2208
      %v2210 = vadd.s32 %v2205, 1
      %vm2211 = vcmp.gt.s32.totalorder %v2210, 0
      %v2212 = vsel %vm2211, %v2210, 0
      %v2213 = vshrl.u32 %v2212, 5
      %v2214 = vand.u32 %v2212, 31
      %v2215 = vsub.s32 32, %v2214
      %v2216 = vshrl.u32 683565275, %v2215
      %v2217 = vshll.u32 683565275, %v2214
      %v2218 = vshrl.u32 2475754826, %v2215
      %v2219 = vor.u32 %v2217, %v2218
      %v2220 = vshll.u32 2475754826, %v2214
      %v2221 = vshrl.u32 2131351028, %v2215
      %v2222 = vor.u32 %v2220, %v2221
      %v2223 = vshll.u32 2131351028, %v2214
      %v2224 = vshrl.u32 2102212464, %v2215
      %v2225 = vor.u32 %v2223, %v2224
      %v2226 = vshll.u32 2102212464, %v2214
      %v2227 = vshrl.u32 920167782, %v2215
      %v2228 = vor.u32 %v2226, %v2227
      %v2229 = vshll.u32 920167782, %v2214
      %v2230 = vshrl.u32 1326507024, %v2215
      %v2231 = vor.u32 %v2229, %v2230
      %vm2232 = vcmp.lt.s32.totalorder %v2213, 1
      %vm2233 = vcmp.lt.s32.totalorder %v2213, 2
      %vm2234 = vcmp.lt.s32.totalorder %v2213, 3
      %vm2235 = vcmp.lt.s32.totalorder %v2213, 4
      %v2236 = vsel %vm2232, %v2216, %v2219
      %v2237 = vsel %vm2235, %v2225, 2102212464
      %v2238 = vsel %vm2234, %v2222, %v2237
      %v2239 = vsel %vm2233, %v2236, %v2238
      %v2240 = vsel %vm2232, %v2219, %v2222
      %v2241 = vsel %vm2235, %v2228, 920167782
      %v2242 = vsel %vm2234, %v2225, %v2241
      %v2243 = vsel %vm2233, %v2240, %v2242
      %v2244 = vsel %vm2232, %v2222, %v2225
      %v2245 = vsel %vm2235, %v2231, 1326507024
      %v2246 = vsel %vm2234, %v2228, %v2245
      %v2247 = vsel %vm2233, %v2244, %v2246
      %v2248 = vshll.u32 %v2208, 8
      %v2249 = vmul.u32.u64.compose %v2248, %v2247
      %v2250 = vextract.low.u32 %v2249
      %v2251 = vextract.high.u32 %v2249
      %v2252 = vmul.u32.u64.compose %v2248, %v2243
      %v2253 = vextract.low.u32 %v2252
      %v2254 = vextract.high.u32 %v2252
      %v2255 = vmul.u32 %v2248, %v2239
      %v2256 = vadd.s32 %v2251, %v2253
      %vm2257 = vc.u32 %v2251, %v2253
      %v2258 = vadd.s32 %v2254, 1
      %v2259 = vsel %vm2257, %v2258, %v2254
      %v2260 = vadd.s32 %v2255, %v2259
      %v2261 = vadd.s32 %v2260, 536870912
      %v2262 = vshrl.u32 %v2261, 30
      %v2263 = vshll.u32 %v2262, 30
      %v2264 = vsub.s32 %v2260, %v2263
      %vm2265 = vcmp.lt.s32.totalorder %v2264, 0
      %v2266 = vsub.s32 0, %v2264
      %v2267 = vsel %vm2265, %v2266, %v2264
      %v2268 = vclz %v2267
      %v2269 = vsub.s32 %v2268, 2
      %vm2270 = vcmp.gt.s32.totalorder 0, %v2269
      %v2271 = vsel %vm2270, 0, %v2269
      %v2272 = vsub.s32 32, %v2271
      %v2273 = vshll.u32 %v2264, %v2271
      %v2274 = vshrl.u32 %v2256, %v2272
      %v2275 = vor.u32 %v2273, %v2274
      %v2276 = vsub.s32 4294967266, %v2271
      %v2277 = vadd.s32 %v2276, 127
      %v2278 = vshll.u32 %v2277, 23
      %v2279 = vor.u32 4788187, %v2278
      %v2280 = vand.u32 2147483647, %v2279
      %v2282 = vcvt.s32.f32 %v2275
      %v2283 = vmul.f32 %v2282, %v2280
      %v2284 = vxor.u32 %v2283, 2147483648
      %v2285 = vsel %vm2202, %v2284, %v2283
      %v2286 = vsub.s32 4, %v2262
      %v2287 = vsel %vm2202, %v2286, %v2262
      %v2288 = vsel %vm2201, %v1478, %v2285
      %v2289 = vsel %vm2201, 0, %v2287
      %v2290 = vcosq.f32.pop %v2288
      %v2291 = vsinq.f32.pop %v2288
      %vm2292 = vweird.f32 %v1478
      %v2293 = vand.u32 %v2289, 3
      %vm2294 = vcmp.lt.s32.totalorder %v2293, 2
      %vm2295 = vcmp.eq.s32.totalorder %v2293, 0
      %v2296 = vxor.u32 %v2291, 2147483648
      %v2297 = vsel %vm2295, %v2290, %v2296
      %vm2298 = vcmp.eq.s32.totalorder %v2293, 2
      %v2299 = vxor.u32 %v2290, 2147483648
      %v2300 = vsel %vm2298, %v2299, %v2291
      %v2301 = vsel %vm2294, %v2297, %v2300
      %v2302 = vsel %vm2292, nan, %v2301
      %v2303 = vmul.f32 %v1463, %v1581
      %v2304 = vmul.f32 %v1464, %v1684
      %v2305 = vmul.f32 %v1465, %v1787
      %v2306 = vmul.f32 %v1466, %v1890
      %v2307 = vmul.f32 %v1467, %v1993
      %v2308 = vmul.f32 %v1468, %v2096
      %v2309 = vmul.f32 %v1469, %v2199
      %v2310 = vmul.f32 %v1470, %v2302
      %2311 = vst [vmem:[%s375] sm:$0xff] %v2303
      %2312 = vst [vmem:[%s375 + $0x8] sm:$0xff] %v2304
      %2313 = vst [vmem:[%s375 + $0x10] sm:$0xff] %v2305
      %2314 = vst [vmem:[%s375 + $0x18] sm:$0xff] %v2306
      %2315 = vst [vmem:[%s375 + $0x20] sm:$0xff] %v2307
      %2316 = vst [vmem:[%s375 + $0x28] sm:$0xff] %v2308
      %2317 = vst [vmem:[%s375 + $0x30] sm:$0xff] %v2309
      %2318 = vst [vmem:[%s375 + $0x38] sm:$0xff] %v2310
      %v2319 = vand.u32 2147483647, %v1471
      %vm2320 = vcmp.le.f32.partialorder %v2319, 0.7853982
      %vm2321 = vcmp.lt.s32.totalorder %v1471, 0
      %v2322 = vand.u32 %v1471, 2139095040
      %v2323 = vshrl.u32 %v2322, 23
      %v2324 = vsub.s32 %v2323, 127
      %v2325 = vand.u32 2147483647, %v1471
      %v2326 = vand.u32 %v2325, 8388607
      %v2327 = vor.u32 %v2326, 8388608
      %v2328 = vsub.s32 0, %v2327
      %v2329 = vadd.s32 %v2324, 1
      %vm2330 = vcmp.gt.s32.totalorder %v2329, 0
      %v2331 = vsel %vm2330, %v2329, 0
      %v2332 = vshrl.u32 %v2331, 5
      %v2333 = vand.u32 %v2331, 31
      %v2334 = vsub.s32 32, %v2333
      %v2335 = vshrl.u32 683565275, %v2334
      %v2336 = vshll.u32 683565275, %v2333
      %v2337 = vshrl.u32 2475754826, %v2334
      %v2338 = vor.u32 %v2336, %v2337
      %v2339 = vshll.u32 2475754826, %v2333
      %v2340 = vshrl.u32 2131351028, %v2334
      %v2341 = vor.u32 %v2339, %v2340
      %v2342 = vshll.u32 2131351028, %v2333
      %v2343 = vshrl.u32 2102212464, %v2334
      %v2344 = vor.u32 %v2342, %v2343
      %v2345 = vshll.u32 2102212464, %v2333
      %v2346 = vshrl.u32 920167782, %v2334
      %v2347 = vor.u32 %v2345, %v2346
      %v2348 = vshll.u32 920167782, %v2333
      %v2349 = vshrl.u32 1326507024, %v2334
      %v2350 = vor.u32 %v2348, %v2349
      %vm2351 = vcmp.lt.s32.totalorder %v2332, 1
      %vm2352 = vcmp.lt.s32.totalorder %v2332, 2
      %vm2353 = vcmp.lt.s32.totalorder %v2332, 3
      %vm2354 = vcmp.lt.s32.totalorder %v2332, 4
      %v2355 = vsel %vm2351, %v2335, %v2338
      %v2356 = vsel %vm2354, %v2344, 2102212464
      %v2357 = vsel %vm2353, %v2341, %v2356
      %v2358 = vsel %vm2352, %v2355, %v2357
      %v2359 = vsel %vm2351, %v2338, %v2341
      %v2360 = vsel %vm2354, %v2347, 920167782
      %v2361 = vsel %vm2353, %v2344, %v2360
      %v2362 = vsel %vm2352, %v2359, %v2361
      %v2363 = vsel %vm2351, %v2341, %v2344
      %v2364 = vsel %vm2354, %v2350, 1326507024
      %v2365 = vsel %vm2353, %v2347, %v2364
      %v2366 = vsel %vm2352, %v2363, %v2365
      %v2367 = vshll.u32 %v2327, 8
      %v2368 = vmul.u32.u64.compose %v2367, %v2366
      %v2369 = vextract.low.u32 %v2368
      %v2370 = vextract.high.u32 %v2368
      %v2371 = vmul.u32.u64.compose %v2367, %v2362
      %v2372 = vextract.low.u32 %v2371
      %v2373 = vextract.high.u32 %v2371
      %v2374 = vmul.u32 %v2367, %v2358
      %v2375 = vadd.s32 %v2370, %v2372
      %vm2376 = vc.u32 %v2370, %v2372
      %v2377 = vadd.s32 %v2373, 1
      %v2378 = vsel %vm2376, %v2377, %v2373
      %v2379 = vadd.s32 %v2374, %v2378
      %v2380 = vadd.s32 %v2379, 536870912
      %v2381 = vshrl.u32 %v2380, 30
      %v2382 = vshll.u32 %v2381, 30
      %v2383 = vsub.s32 %v2379, %v2382
      %vm2384 = vcmp.lt.s32.totalorder %v2383, 0
      %v2385 = vsub.s32 0, %v2383
      %v2386 = vsel %vm2384, %v2385, %v2383
      %v2387 = vclz %v2386
      %v2388 = vsub.s32 %v2387, 2
      %vm2389 = vcmp.gt.s32.totalorder 0, %v2388
      %v2390 = vsel %vm2389, 0, %v2388
      %v2391 = vsub.s32 32, %v2390
      %v2392 = vshll.u32 %v2383, %v2390
      %v2393 = vshrl.u32 %v2375, %v2391
      %v2394 = vor.u32 %v2392, %v2393
      %v2395 = vsub.s32 4294967266, %v2390
      %v2396 = vadd.s32 %v2395, 127
      %v2397 = vshll.u32 %v2396, 23
      %v2398 = vor.u32 4788187, %v2397
      %v2399 = vand.u32 2147483647, %v2398
      %v2401 = vcvt.s32.f32 %v2394
      %v2402 = vmul.f32 %v2401, %v2399
      %v2403 = vxor.u32 %v2402, 2147483648
      %v2404 = vsel %vm2321, %v2403, %v2402
      %v2405 = vsub.s32 4, %v2381
      %v2406 = vsel %vm2321, %v2405, %v2381
      %v2407 = vsel %vm2320, %v1471, %v2404
      %v2408 = vsel %vm2320, 0, %v2406
      %v2409 = vcosq.f32.pop %v2407
      %v2410 = vsinq.f32.pop %v2407
      %vm2411 = vweird.f32 %v1471
      %v2412 = vadd.s32 %v2408, 3
      %v2413 = vand.u32 %v2412, 3
      %vm2414 = vcmp.lt.s32.totalorder %v2413, 2
      %vm2415 = vcmp.eq.s32.totalorder %v2413, 0
      %v2416 = vxor.u32 %v2410, 2147483648
      %v2417 = vsel %vm2415, %v2409, %v2416
      %vm2418 = vcmp.eq.s32.totalorder %v2413, 2
      %v2419 = vxor.u32 %v2409, 2147483648
      %v2420 = vsel %vm2418, %v2419, %v2410
      %v2421 = vsel %vm2414, %v2417, %v2420
      %v2422 = vsel %vm2411, nan, %v2421
      %v2423 = vand.u32 2147483647, %v1472
      %vm2424 = vcmp.le.f32.partialorder %v2423, 0.7853982
      %vm2425 = vcmp.lt.s32.totalorder %v1472, 0
      %v2426 = vand.u32 %v1472, 2139095040
      %v2427 = vshrl.u32 %v2426, 23
      %v2428 = vsub.s32 %v2427, 127
      %v2429 = vand.u32 2147483647, %v1472
      %v2430 = vand.u32 %v2429, 8388607
      %v2431 = vor.u32 %v2430, 8388608
      %v2432 = vsub.s32 0, %v2431
      %v2433 = vadd.s32 %v2428, 1
      %vm2434 = vcmp.gt.s32.totalorder %v2433, 0
      %v2435 = vsel %vm2434, %v2433, 0
      %v2436 = vshrl.u32 %v2435, 5
      %v2437 = vand.u32 %v2435, 31
      %v2438 = vsub.s32 32, %v2437
      %v2439 = vshrl.u32 683565275, %v2438
      %v2440 = vshll.u32 683565275, %v2437
      %v2441 = vshrl.u32 2475754826, %v2438
      %v2442 = vor.u32 %v2440, %v2441
      %v2443 = vshll.u32 2475754826, %v2437
      %v2444 = vshrl.u32 2131351028, %v2438
      %v2445 = vor.u32 %v2443, %v2444
      %v2446 = vshll.u32 2131351028, %v2437
      %v2447 = vshrl.u32 2102212464, %v2438
      %v2448 = vor.u32 %v2446, %v2447
      %v2449 = vshll.u32 2102212464, %v2437
      %v2450 = vshrl.u32 920167782, %v2438
      %v2451 = vor.u32 %v2449, %v2450
      %v2452 = vshll.u32 920167782, %v2437
      %v2453 = vshrl.u32 1326507024, %v2438
      %v2454 = vor.u32 %v2452, %v2453
      %vm2455 = vcmp.lt.s32.totalorder %v2436, 1
      %vm2456 = vcmp.lt.s32.totalorder %v2436, 2
      %vm2457 = vcmp.lt.s32.totalorder %v2436, 3
      %vm2458 = vcmp.lt.s32.totalorder %v2436, 4
      %v2459 = vsel %vm2455, %v2439, %v2442
      %v2460 = vsel %vm2458, %v2448, 2102212464
      %v2461 = vsel %vm2457, %v2445, %v2460
      %v2462 = vsel %vm2456, %v2459, %v2461
      %v2463 = vsel %vm2455, %v2442, %v2445
      %v2464 = vsel %vm2458, %v2451, 920167782
      %v2465 = vsel %vm2457, %v2448, %v2464
      %v2466 = vsel %vm2456, %v2463, %v2465
      %v2467 = vsel %vm2455, %v2445, %v2448
      %v2468 = vsel %vm2458, %v2454, 1326507024
      %v2469 = vsel %vm2457, %v2451, %v2468
      %v2470 = vsel %vm2456, %v2467, %v2469
      %v2471 = vshll.u32 %v2431, 8
      %v2472 = vmul.u32.u64.compose %v2471, %v2470
      %v2473 = vextract.low.u32 %v2472
      %v2474 = vextract.high.u32 %v2472
      %v2475 = vmul.u32.u64.compose %v2471, %v2466
      %v2476 = vextract.low.u32 %v2475
      %v2477 = vextract.high.u32 %v2475
      %v2478 = vmul.u32 %v2471, %v2462
      %v2479 = vadd.s32 %v2474, %v2476
      %vm2480 = vc.u32 %v2474, %v2476
      %v2481 = vadd.s32 %v2477, 1
      %v2482 = vsel %vm2480, %v2481, %v2477
      %v2483 = vadd.s32 %v2478, %v2482
      %v2484 = vadd.s32 %v2483, 536870912
      %v2485 = vshrl.u32 %v2484, 30
      %v2486 = vshll.u32 %v2485, 30
      %v2487 = vsub.s32 %v2483, %v2486
      %vm2488 = vcmp.lt.s32.totalorder %v2487, 0
      %v2489 = vsub.s32 0, %v2487
      %v2490 = vsel %vm2488, %v2489, %v2487
      %v2491 = vclz %v2490
      %v2492 = vsub.s32 %v2491, 2
      %vm2493 = vcmp.gt.s32.totalorder 0, %v2492
      %v2494 = vsel %vm2493, 0, %v2492
      %v2495 = vsub.s32 32, %v2494
      %v2496 = vshll.u32 %v2487, %v2494
      %v2497 = vshrl.u32 %v2479, %v2495
      %v2498 = vor.u32 %v2496, %v2497
      %v2499 = vsub.s32 4294967266, %v2494
      %v2500 = vadd.s32 %v2499, 127
      %v2501 = vshll.u32 %v2500, 23
      %v2502 = vor.u32 4788187, %v2501
      %v2503 = vand.u32 2147483647, %v2502
      %v2505 = vcvt.s32.f32 %v2498
      %v2506 = vmul.f32 %v2505, %v2503
      %v2507 = vxor.u32 %v2506, 2147483648
      %v2508 = vsel %vm2425, %v2507, %v2506
      %v2509 = vsub.s32 4, %v2485
      %v2510 = vsel %vm2425, %v2509, %v2485
      %v2511 = vsel %vm2424, %v1472, %v2508
      %v2512 = vsel %vm2424, 0, %v2510
      %v2513 = vcosq.f32.pop %v2511
      %v2514 = vsinq.f32.pop %v2511
      %vm2515 = vweird.f32 %v1472
      %v2516 = vadd.s32 %v2512, 3
      %v2517 = vand.u32 %v2516, 3
      %vm2518 = vcmp.lt.s32.totalorder %v2517, 2
      %vm2519 = vcmp.eq.s32.totalorder %v2517, 0
      %v2520 = vxor.u32 %v2514, 2147483648
      %v2521 = vsel %vm2519, %v2513, %v2520
      %vm2522 = vcmp.eq.s32.totalorder %v2517, 2
      %v2523 = vxor.u32 %v2513, 2147483648
      %v2524 = vsel %vm2522, %v2523, %v2514
      %v2525 = vsel %vm2518, %v2521, %v2524
      %v2526 = vsel %vm2515, nan, %v2525
      %v2527 = vand.u32 2147483647, %v1473
      %vm2528 = vcmp.le.f32.partialorder %v2527, 0.7853982
      %vm2529 = vcmp.lt.s32.totalorder %v1473, 0
      %v2530 = vand.u32 %v1473, 2139095040
      %v2531 = vshrl.u32 %v2530, 23
      %v2532 = vsub.s32 %v2531, 127
      %v2533 = vand.u32 2147483647, %v1473
      %v2534 = vand.u32 %v2533, 8388607
      %v2535 = vor.u32 %v2534, 8388608
      %v2536 = vsub.s32 0, %v2535
      %v2537 = vadd.s32 %v2532, 1
      %vm2538 = vcmp.gt.s32.totalorder %v2537, 0
      %v2539 = vsel %vm2538, %v2537, 0
      %v2540 = vshrl.u32 %v2539, 5
      %v2541 = vand.u32 %v2539, 31
      %v2542 = vsub.s32 32, %v2541
      %v2543 = vshrl.u32 683565275, %v2542
      %v2544 = vshll.u32 683565275, %v2541
      %v2545 = vshrl.u32 2475754826, %v2542
      %v2546 = vor.u32 %v2544, %v2545
      %v2547 = vshll.u32 2475754826, %v2541
      %v2548 = vshrl.u32 2131351028, %v2542
      %v2549 = vor.u32 %v2547, %v2548
      %v2550 = vshll.u32 2131351028, %v2541
      %v2551 = vshrl.u32 2102212464, %v2542
      %v2552 = vor.u32 %v2550, %v2551
      %v2553 = vshll.u32 2102212464, %v2541
      %v2554 = vshrl.u32 920167782, %v2542
      %v2555 = vor.u32 %v2553, %v2554
      %v2556 = vshll.u32 920167782, %v2541
      %v2557 = vshrl.u32 1326507024, %v2542
      %v2558 = vor.u32 %v2556, %v2557
      %vm2559 = vcmp.lt.s32.totalorder %v2540, 1
      %vm2560 = vcmp.lt.s32.totalorder %v2540, 2
      %vm2561 = vcmp.lt.s32.totalorder %v2540, 3
      %vm2562 = vcmp.lt.s32.totalorder %v2540, 4
      %v2563 = vsel %vm2559, %v2543, %v2546
      %v2564 = vsel %vm2562, %v2552, 2102212464
      %v2565 = vsel %vm2561, %v2549, %v2564
      %v2566 = vsel %vm2560, %v2563, %v2565
      %v2567 = vsel %vm2559, %v2546, %v2549
      %v2568 = vsel %vm2562, %v2555, 920167782
      %v2569 = vsel %vm2561, %v2552, %v2568
      %v2570 = vsel %vm2560, %v2567, %v2569
      %v2571 = vsel %vm2559, %v2549, %v2552
      %v2572 = vsel %vm2562, %v2558, 1326507024
      %v2573 = vsel %vm2561, %v2555, %v2572
      %v2574 = vsel %vm2560, %v2571, %v2573
      %v2575 = vshll.u32 %v2535, 8
      %v2576 = vmul.u32.u64.compose %v2575, %v2574
      %v2577 = vextract.low.u32 %v2576
      %v2578 = vextract.high.u32 %v2576
      %v2579 = vmul.u32.u64.compose %v2575, %v2570
      %v2580 = vextract.low.u32 %v2579
      %v2581 = vextract.high.u32 %v2579
      %v2582 = vmul.u32 %v2575, %v2566
      %v2583 = vadd.s32 %v2578, %v2580
      %vm2584 = vc.u32 %v2578, %v2580
      %v2585 = vadd.s32 %v2581, 1
      %v2586 = vsel %vm2584, %v2585, %v2581
      %v2587 = vadd.s32 %v2582, %v2586
      %v2588 = vadd.s32 %v2587, 536870912
      %v2589 = vshrl.u32 %v2588, 30
      %v2590 = vshll.u32 %v2589, 30
      %v2591 = vsub.s32 %v2587, %v2590
      %vm2592 = vcmp.lt.s32.totalorder %v2591, 0
      %v2593 = vsub.s32 0, %v2591
      %v2594 = vsel %vm2592, %v2593, %v2591
      %v2595 = vclz %v2594
      %v2596 = vsub.s32 %v2595, 2
      %vm2597 = vcmp.gt.s32.totalorder 0, %v2596
      %v2598 = vsel %vm2597, 0, %v2596
      %v2599 = vsub.s32 32, %v2598
      %v2600 = vshll.u32 %v2591, %v2598
      %v2601 = vshrl.u32 %v2583, %v2599
      %v2602 = vor.u32 %v2600, %v2601
      %v2603 = vsub.s32 4294967266, %v2598
      %v2604 = vadd.s32 %v2603, 127
      %v2605 = vshll.u32 %v2604, 23
      %v2606 = vor.u32 4788187, %v2605
      %v2607 = vand.u32 2147483647, %v2606
      %v2609 = vcvt.s32.f32 %v2602
      %v2610 = vmul.f32 %v2609, %v2607
      %v2611 = vxor.u32 %v2610, 2147483648
      %v2612 = vsel %vm2529, %v2611, %v2610
      %v2613 = vsub.s32 4, %v2589
      %v2614 = vsel %vm2529, %v2613, %v2589
      %v2615 = vsel %vm2528, %v1473, %v2612
      %v2616 = vsel %vm2528, 0, %v2614
      %v2617 = vcosq.f32.pop %v2615
      %v2618 = vsinq.f32.pop %v2615
      %vm2619 = vweird.f32 %v1473
      %v2620 = vadd.s32 %v2616, 3
      %v2621 = vand.u32 %v2620, 3
      %vm2622 = vcmp.lt.s32.totalorder %v2621, 2
      %vm2623 = vcmp.eq.s32.totalorder %v2621, 0
      %v2624 = vxor.u32 %v2618, 2147483648
      %v2625 = vsel %vm2623, %v2617, %v2624
      %vm2626 = vcmp.eq.s32.totalorder %v2621, 2
      %v2627 = vxor.u32 %v2617, 2147483648
      %v2628 = vsel %vm2626, %v2627, %v2618
      %v2629 = vsel %vm2622, %v2625, %v2628
      %v2630 = vsel %vm2619, nan, %v2629
      %v2631 = vand.u32 2147483647, %v1474
      %vm2632 = vcmp.le.f32.partialorder %v2631, 0.7853982
      %vm2633 = vcmp.lt.s32.totalorder %v1474, 0
      %v2634 = vand.u32 %v1474, 2139095040
      %v2635 = vshrl.u32 %v2634, 23
      %v2636 = vsub.s32 %v2635, 127
      %v2637 = vand.u32 2147483647, %v1474
      %v2638 = vand.u32 %v2637, 8388607
      %v2639 = vor.u32 %v2638, 8388608
      %v2640 = vsub.s32 0, %v2639
      %v2641 = vadd.s32 %v2636, 1
      %vm2642 = vcmp.gt.s32.totalorder %v2641, 0
      %v2643 = vsel %vm2642, %v2641, 0
      %v2644 = vshrl.u32 %v2643, 5
      %v2645 = vand.u32 %v2643, 31
      %v2646 = vsub.s32 32, %v2645
      %v2647 = vshrl.u32 683565275, %v2646
      %v2648 = vshll.u32 683565275, %v2645
      %v2649 = vshrl.u32 2475754826, %v2646
      %v2650 = vor.u32 %v2648, %v2649
      %v2651 = vshll.u32 2475754826, %v2645
      %v2652 = vshrl.u32 2131351028, %v2646
      %v2653 = vor.u32 %v2651, %v2652
      %v2654 = vshll.u32 2131351028, %v2645
      %v2655 = vshrl.u32 2102212464, %v2646
      %v2656 = vor.u32 %v2654, %v2655
      %v2657 = vshll.u32 2102212464, %v2645
      %v2658 = vshrl.u32 920167782, %v2646
      %v2659 = vor.u32 %v2657, %v2658
      %v2660 = vshll.u32 920167782, %v2645
      %v2661 = vshrl.u32 1326507024, %v2646
      %v2662 = vor.u32 %v2660, %v2661
      %vm2663 = vcmp.lt.s32.totalorder %v2644, 1
      %vm2664 = vcmp.lt.s32.totalorder %v2644, 2
      %vm2665 = vcmp.lt.s32.totalorder %v2644, 3
      %vm2666 = vcmp.lt.s32.totalorder %v2644, 4
      %v2667 = vsel %vm2663, %v2647, %v2650
      %v2668 = vsel %vm2666, %v2656, 2102212464
      %v2669 = vsel %vm2665, %v2653, %v2668
      %v2670 = vsel %vm2664, %v2667, %v2669
      %v2671 = vsel %vm2663, %v2650, %v2653
      %v2672 = vsel %vm2666, %v2659, 920167782
      %v2673 = vsel %vm2665, %v2656, %v2672
      %v2674 = vsel %vm2664, %v2671, %v2673
      %v2675 = vsel %vm2663, %v2653, %v2656
      %v2676 = vsel %vm2666, %v2662, 1326507024
      %v2677 = vsel %vm2665, %v2659, %v2676
      %v2678 = vsel %vm2664, %v2675, %v2677
      %v2679 = vshll.u32 %v2639, 8
      %v2680 = vmul.u32.u64.compose %v2679, %v2678
      %v2681 = vextract.low.u32 %v2680
      %v2682 = vextract.high.u32 %v2680
      %v2683 = vmul.u32.u64.compose %v2679, %v2674
      %v2684 = vextract.low.u32 %v2683
      %v2685 = vextract.high.u32 %v2683
      %v2686 = vmul.u32 %v2679, %v2670
      %v2687 = vadd.s32 %v2682, %v2684
      %vm2688 = vc.u32 %v2682, %v2684
      %v2689 = vadd.s32 %v2685, 1
      %v2690 = vsel %vm2688, %v2689, %v2685
      %v2691 = vadd.s32 %v2686, %v2690
      %v2692 = vadd.s32 %v2691, 536870912
      %v2693 = vshrl.u32 %v2692, 30
      %v2694 = vshll.u32 %v2693, 30
      %v2695 = vsub.s32 %v2691, %v2694
      %vm2696 = vcmp.lt.s32.totalorder %v2695, 0
      %v2697 = vsub.s32 0, %v2695
      %v2698 = vsel %vm2696, %v2697, %v2695
      %v2699 = vclz %v2698
      %v2700 = vsub.s32 %v2699, 2
      %vm2701 = vcmp.gt.s32.totalorder 0, %v2700
      %v2702 = vsel %vm2701, 0, %v2700
      %v2703 = vsub.s32 32, %v2702
      %v2704 = vshll.u32 %v2695, %v2702
      %v2705 = vshrl.u32 %v2687, %v2703
      %v2706 = vor.u32 %v2704, %v2705
      %v2707 = vsub.s32 4294967266, %v2702
      %v2708 = vadd.s32 %v2707, 127
      %v2709 = vshll.u32 %v2708, 23
      %v2710 = vor.u32 4788187, %v2709
      %v2711 = vand.u32 2147483647, %v2710
      %v2713 = vcvt.s32.f32 %v2706
      %v2714 = vmul.f32 %v2713, %v2711
      %v2715 = vxor.u32 %v2714, 2147483648
      %v2716 = vsel %vm2633, %v2715, %v2714
      %v2717 = vsub.s32 4, %v2693
      %v2718 = vsel %vm2633, %v2717, %v2693
      %v2719 = vsel %vm2632, %v1474, %v2716
      %v2720 = vsel %vm2632, 0, %v2718
      %v2721 = vcosq.f32.pop %v2719
      %v2722 = vsinq.f32.pop %v2719
      %vm2723 = vweird.f32 %v1474
      %v2724 = vadd.s32 %v2720, 3
      %v2725 = vand.u32 %v2724, 3
      %vm2726 = vcmp.lt.s32.totalorder %v2725, 2
      %vm2727 = vcmp.eq.s32.totalorder %v2725, 0
      %v2728 = vxor.u32 %v2722, 2147483648
      %v2729 = vsel %vm2727, %v2721, %v2728
      %vm2730 = vcmp.eq.s32.totalorder %v2725, 2
      %v2731 = vxor.u32 %v2721, 2147483648
      %v2732 = vsel %vm2730, %v2731, %v2722
      %v2733 = vsel %vm2726, %v2729, %v2732
      %v2734 = vsel %vm2723, nan, %v2733
      %v2735 = vand.u32 2147483647, %v1475
      %vm2736 = vcmp.le.f32.partialorder %v2735, 0.7853982
      %vm2737 = vcmp.lt.s32.totalorder %v1475, 0
      %v2738 = vand.u32 %v1475, 2139095040
      %v2739 = vshrl.u32 %v2738, 23
      %v2740 = vsub.s32 %v2739, 127
      %v2741 = vand.u32 2147483647, %v1475
      %v2742 = vand.u32 %v2741, 8388607
      %v2743 = vor.u32 %v2742, 8388608
      %v2744 = vsub.s32 0, %v2743
      %v2745 = vadd.s32 %v2740, 1
      %vm2746 = vcmp.gt.s32.totalorder %v2745, 0
      %v2747 = vsel %vm2746, %v2745, 0
      %v2748 = vshrl.u32 %v2747, 5
      %v2749 = vand.u32 %v2747, 31
      %v2750 = vsub.s32 32, %v2749
      %v2751 = vshrl.u32 683565275, %v2750
      %v2752 = vshll.u32 683565275, %v2749
      %v2753 = vshrl.u32 2475754826, %v2750
      %v2754 = vor.u32 %v2752, %v2753
      %v2755 = vshll.u32 2475754826, %v2749
      %v2756 = vshrl.u32 2131351028, %v2750
      %v2757 = vor.u32 %v2755, %v2756
      %v2758 = vshll.u32 2131351028, %v2749
      %v2759 = vshrl.u32 2102212464, %v2750
      %v2760 = vor.u32 %v2758, %v2759
      %v2761 = vshll.u32 2102212464, %v2749
      %v2762 = vshrl.u32 920167782, %v2750
      %v2763 = vor.u32 %v2761, %v2762
      %v2764 = vshll.u32 920167782, %v2749
      %v2765 = vshrl.u32 1326507024, %v2750
      %v2766 = vor.u32 %v2764, %v2765
      %vm2767 = vcmp.lt.s32.totalorder %v2748, 1
      %vm2768 = vcmp.lt.s32.totalorder %v2748, 2
      %vm2769 = vcmp.lt.s32.totalorder %v2748, 3
      %vm2770 = vcmp.lt.s32.totalorder %v2748, 4
      %v2771 = vsel %vm2767, %v2751, %v2754
      %v2772 = vsel %vm2770, %v2760, 2102212464
      %v2773 = vsel %vm2769, %v2757, %v2772
      %v2774 = vsel %vm2768, %v2771, %v2773
      %v2775 = vsel %vm2767, %v2754, %v2757
      %v2776 = vsel %vm2770, %v2763, 920167782
      %v2777 = vsel %vm2769, %v2760, %v2776
      %v2778 = vsel %vm2768, %v2775, %v2777
      %v2779 = vsel %vm2767, %v2757, %v2760
      %v2780 = vsel %vm2770, %v2766, 1326507024
      %v2781 = vsel %vm2769, %v2763, %v2780
      %v2782 = vsel %vm2768, %v2779, %v2781
      %v2783 = vshll.u32 %v2743, 8
      %v2784 = vmul.u32.u64.compose %v2783, %v2782
      %v2785 = vextract.low.u32 %v2784
      %v2786 = vextract.high.u32 %v2784
      %v2787 = vmul.u32.u64.compose %v2783, %v2778
      %v2788 = vextract.low.u32 %v2787
      %v2789 = vextract.high.u32 %v2787
      %v2790 = vmul.u32 %v2783, %v2774
      %v2791 = vadd.s32 %v2786, %v2788
      %vm2792 = vc.u32 %v2786, %v2788
      %v2793 = vadd.s32 %v2789, 1
      %v2794 = vsel %vm2792, %v2793, %v2789
      %v2795 = vadd.s32 %v2790, %v2794
      %v2796 = vadd.s32 %v2795, 536870912
      %v2797 = vshrl.u32 %v2796, 30
      %v2798 = vshll.u32 %v2797, 30
      %v2799 = vsub.s32 %v2795, %v2798
      %vm2800 = vcmp.lt.s32.totalorder %v2799, 0
      %v2801 = vsub.s32 0, %v2799
      %v2802 = vsel %vm2800, %v2801, %v2799
      %v2803 = vclz %v2802
      %v2804 = vsub.s32 %v2803, 2
      %vm2805 = vcmp.gt.s32.totalorder 0, %v2804
      %v2806 = vsel %vm2805, 0, %v2804
      %v2807 = vsub.s32 32, %v2806
      %v2808 = vshll.u32 %v2799, %v2806
      %v2809 = vshrl.u32 %v2791, %v2807
      %v2810 = vor.u32 %v2808, %v2809
      %v2811 = vsub.s32 4294967266, %v2806
      %v2812 = vadd.s32 %v2811, 127
      %v2813 = vshll.u32 %v2812, 23
      %v2814 = vor.u32 4788187, %v2813
      %v2815 = vand.u32 2147483647, %v2814
      %v2817 = vcvt.s32.f32 %v2810
      %v2818 = vmul.f32 %v2817, %v2815
      %v2819 = vxor.u32 %v2818, 2147483648
      %v2820 = vsel %vm2737, %v2819, %v2818
      %v2821 = vsub.s32 4, %v2797
      %v2822 = vsel %vm2737, %v2821, %v2797
      %v2823 = vsel %vm2736, %v1475, %v2820
      %v2824 = vsel %vm2736, 0, %v2822
      %v2825 = vcosq.f32.pop %v2823
      %v2826 = vsinq.f32.pop %v2823
      %vm2827 = vweird.f32 %v1475
      %v2828 = vadd.s32 %v2824, 3
      %v2829 = vand.u32 %v2828, 3
      %vm2830 = vcmp.lt.s32.totalorder %v2829, 2
      %vm2831 = vcmp.eq.s32.totalorder %v2829, 0
      %v2832 = vxor.u32 %v2826, 2147483648
      %v2833 = vsel %vm2831, %v2825, %v2832
      %vm2834 = vcmp.eq.s32.totalorder %v2829, 2
      %v2835 = vxor.u32 %v2825, 2147483648
      %v2836 = vsel %vm2834, %v2835, %v2826
      %v2837 = vsel %vm2830, %v2833, %v2836
      %v2838 = vsel %vm2827, nan, %v2837
      %v2839 = vand.u32 2147483647, %v1476
      %vm2840 = vcmp.le.f32.partialorder %v2839, 0.7853982
      %vm2841 = vcmp.lt.s32.totalorder %v1476, 0
      %v2842 = vand.u32 %v1476, 2139095040
      %v2843 = vshrl.u32 %v2842, 23
      %v2844 = vsub.s32 %v2843, 127
      %v2845 = vand.u32 2147483647, %v1476
      %v2846 = vand.u32 %v2845, 8388607
      %v2847 = vor.u32 %v2846, 8388608
      %v2848 = vsub.s32 0, %v2847
      %v2849 = vadd.s32 %v2844, 1
      %vm2850 = vcmp.gt.s32.totalorder %v2849, 0
      %v2851 = vsel %vm2850, %v2849, 0
      %v2852 = vshrl.u32 %v2851, 5
      %v2853 = vand.u32 %v2851, 31
      %v2854 = vsub.s32 32, %v2853
      %v2855 = vshrl.u32 683565275, %v2854
      %v2856 = vshll.u32 683565275, %v2853
      %v2857 = vshrl.u32 2475754826, %v2854
      %v2858 = vor.u32 %v2856, %v2857
      %v2859 = vshll.u32 2475754826, %v2853
      %v2860 = vshrl.u32 2131351028, %v2854
      %v2861 = vor.u32 %v2859, %v2860
      %v2862 = vshll.u32 2131351028, %v2853
      %v2863 = vshrl.u32 2102212464, %v2854
      %v2864 = vor.u32 %v2862, %v2863
      %v2865 = vshll.u32 2102212464, %v2853
      %v2866 = vshrl.u32 920167782, %v2854
      %v2867 = vor.u32 %v2865, %v2866
      %v2868 = vshll.u32 920167782, %v2853
      %v2869 = vshrl.u32 1326507024, %v2854
      %v2870 = vor.u32 %v2868, %v2869
      %vm2871 = vcmp.lt.s32.totalorder %v2852, 1
      %vm2872 = vcmp.lt.s32.totalorder %v2852, 2
      %vm2873 = vcmp.lt.s32.totalorder %v2852, 3
      %vm2874 = vcmp.lt.s32.totalorder %v2852, 4
      %v2875 = vsel %vm2871, %v2855, %v2858
      %v2876 = vsel %vm2874, %v2864, 2102212464
      %v2877 = vsel %vm2873, %v2861, %v2876
      %v2878 = vsel %vm2872, %v2875, %v2877
      %v2879 = vsel %vm2871, %v2858, %v2861
      %v2880 = vsel %vm2874, %v2867, 920167782
      %v2881 = vsel %vm2873, %v2864, %v2880
      %v2882 = vsel %vm2872, %v2879, %v2881
      %v2883 = vsel %vm2871, %v2861, %v2864
      %v2884 = vsel %vm2874, %v2870, 1326507024
      %v2885 = vsel %vm2873, %v2867, %v2884
      %v2886 = vsel %vm2872, %v2883, %v2885
      %v2887 = vshll.u32 %v2847, 8
      %v2888 = vmul.u32.u64.compose %v2887, %v2886
      %v2889 = vextract.low.u32 %v2888
      %v2890 = vextract.high.u32 %v2888
      %v2891 = vmul.u32.u64.compose %v2887, %v2882
      %v2892 = vextract.low.u32 %v2891
      %v2893 = vextract.high.u32 %v2891
      %v2894 = vmul.u32 %v2887, %v2878
      %v2895 = vadd.s32 %v2890, %v2892
      %vm2896 = vc.u32 %v2890, %v2892
      %v2897 = vadd.s32 %v2893, 1
      %v2898 = vsel %vm2896, %v2897, %v2893
      %v2899 = vadd.s32 %v2894, %v2898
      %v2900 = vadd.s32 %v2899, 536870912
      %v2901 = vshrl.u32 %v2900, 30
      %v2902 = vshll.u32 %v2901, 30
      %v2903 = vsub.s32 %v2899, %v2902
      %vm2904 = vcmp.lt.s32.totalorder %v2903, 0
      %v2905 = vsub.s32 0, %v2903
      %v2906 = vsel %vm2904, %v2905, %v2903
      %v2907 = vclz %v2906
      %v2908 = vsub.s32 %v2907, 2
      %vm2909 = vcmp.gt.s32.totalorder 0, %v2908
      %v2910 = vsel %vm2909, 0, %v2908
      %v2911 = vsub.s32 32, %v2910
      %v2912 = vshll.u32 %v2903, %v2910
      %v2913 = vshrl.u32 %v2895, %v2911
      %v2914 = vor.u32 %v2912, %v2913
      %v2915 = vsub.s32 4294967266, %v2910
      %v2916 = vadd.s32 %v2915, 127
      %v2917 = vshll.u32 %v2916, 23
      %v2918 = vor.u32 4788187, %v2917
      %v2919 = vand.u32 2147483647, %v2918
      %v2921 = vcvt.s32.f32 %v2914
      %v2922 = vmul.f32 %v2921, %v2919
      %v2923 = vxor.u32 %v2922, 2147483648
      %v2924 = vsel %vm2841, %v2923, %v2922
      %v2925 = vsub.s32 4, %v2901
      %v2926 = vsel %vm2841, %v2925, %v2901
      %v2927 = vsel %vm2840, %v1476, %v2924
      %v2928 = vsel %vm2840, 0, %v2926
      %v2929 = vcosq.f32.pop %v2927
      %v2930 = vsinq.f32.pop %v2927
      %vm2931 = vweird.f32 %v1476
      %v2932 = vadd.s32 %v2928, 3
      %v2933 = vand.u32 %v2932, 3
      %vm2934 = vcmp.lt.s32.totalorder %v2933, 2
      %vm2935 = vcmp.eq.s32.totalorder %v2933, 0
      %v2936 = vxor.u32 %v2930, 2147483648
      %v2937 = vsel %vm2935, %v2929, %v2936
      %vm2938 = vcmp.eq.s32.totalorder %v2933, 2
      %v2939 = vxor.u32 %v2929, 2147483648
      %v2940 = vsel %vm2938, %v2939, %v2930
      %v2941 = vsel %vm2934, %v2937, %v2940
      %v2942 = vsel %vm2931, nan, %v2941
      %v2943 = vand.u32 2147483647, %v1477
      %vm2944 = vcmp.le.f32.partialorder %v2943, 0.7853982
      %vm2945 = vcmp.lt.s32.totalorder %v1477, 0
      %v2946 = vand.u32 %v1477, 2139095040
      %v2947 = vshrl.u32 %v2946, 23
      %v2948 = vsub.s32 %v2947, 127
      %v2949 = vand.u32 2147483647, %v1477
      %v2950 = vand.u32 %v2949, 8388607
      %v2951 = vor.u32 %v2950, 8388608
      %v2952 = vsub.s32 0, %v2951
      %v2953 = vadd.s32 %v2948, 1
      %vm2954 = vcmp.gt.s32.totalorder %v2953, 0
      %v2955 = vsel %vm2954, %v2953, 0
      %v2956 = vshrl.u32 %v2955, 5
      %v2957 = vand.u32 %v2955, 31
      %v2958 = vsub.s32 32, %v2957
      %v2959 = vshrl.u32 683565275, %v2958
      %v2960 = vshll.u32 683565275, %v2957
      %v2961 = vshrl.u32 2475754826, %v2958
      %v2962 = vor.u32 %v2960, %v2961
      %v2963 = vshll.u32 2475754826, %v2957
      %v2964 = vshrl.u32 2131351028, %v2958
      %v2965 = vor.u32 %v2963, %v2964
      %v2966 = vshll.u32 2131351028, %v2957
      %v2967 = vshrl.u32 2102212464, %v2958
      %v2968 = vor.u32 %v2966, %v2967
      %v2969 = vshll.u32 2102212464, %v2957
      %v2970 = vshrl.u32 920167782, %v2958
      %v2971 = vor.u32 %v2969, %v2970
      %v2972 = vshll.u32 920167782, %v2957
      %v2973 = vshrl.u32 1326507024, %v2958
      %v2974 = vor.u32 %v2972, %v2973
      %vm2975 = vcmp.lt.s32.totalorder %v2956, 1
      %vm2976 = vcmp.lt.s32.totalorder %v2956, 2
      %vm2977 = vcmp.lt.s32.totalorder %v2956, 3
      %vm2978 = vcmp.lt.s32.totalorder %v2956, 4
      %v2979 = vsel %vm2975, %v2959, %v2962
      %v2980 = vsel %vm2978, %v2968, 2102212464
      %v2981 = vsel %vm2977, %v2965, %v2980
      %v2982 = vsel %vm2976, %v2979, %v2981
      %v2983 = vsel %vm2975, %v2962, %v2965
      %v2984 = vsel %vm2978, %v2971, 920167782
      %v2985 = vsel %vm2977, %v2968, %v2984
      %v2986 = vsel %vm2976, %v2983, %v2985
      %v2987 = vsel %vm2975, %v2965, %v2968
      %v2988 = vsel %vm2978, %v2974, 1326507024
      %v2989 = vsel %vm2977, %v2971, %v2988
      %v2990 = vsel %vm2976, %v2987, %v2989
      %v2991 = vshll.u32 %v2951, 8
      %v2992 = vmul.u32.u64.compose %v2991, %v2990
      %v2993 = vextract.low.u32 %v2992
      %v2994 = vextract.high.u32 %v2992
      %v2995 = vmul.u32.u64.compose %v2991, %v2986
      %v2996 = vextract.low.u32 %v2995
      %v2997 = vextract.high.u32 %v2995
      %v2998 = vmul.u32 %v2991, %v2982
      %v2999 = vadd.s32 %v2994, %v2996
      %vm3000 = vc.u32 %v2994, %v2996
      %v3001 = vadd.s32 %v2997, 1
      %v3002 = vsel %vm3000, %v3001, %v2997
      %v3003 = vadd.s32 %v2998, %v3002
      %v3004 = vadd.s32 %v3003, 536870912
      %v3005 = vshrl.u32 %v3004, 30
      %v3006 = vshll.u32 %v3005, 30
      %v3007 = vsub.s32 %v3003, %v3006
      %vm3008 = vcmp.lt.s32.totalorder %v3007, 0
      %v3009 = vsub.s32 0, %v3007
      %v3010 = vsel %vm3008, %v3009, %v3007
      %v3011 = vclz %v3010
      %v3012 = vsub.s32 %v3011, 2
      %vm3013 = vcmp.gt.s32.totalorder 0, %v3012
      %v3014 = vsel %vm3013, 0, %v3012
      %v3015 = vsub.s32 32, %v3014
      %v3016 = vshll.u32 %v3007, %v3014
      %v3017 = vshrl.u32 %v2999, %v3015
      %v3018 = vor.u32 %v3016, %v3017
      %v3019 = vsub.s32 4294967266, %v3014
      %v3020 = vadd.s32 %v3019, 127
      %v3021 = vshll.u32 %v3020, 23
      %v3022 = vor.u32 4788187, %v3021
      %v3023 = vand.u32 2147483647, %v3022
      %v3025 = vcvt.s32.f32 %v3018
      %v3026 = vmul.f32 %v3025, %v3023
      %v3027 = vxor.u32 %v3026, 2147483648
      %v3028 = vsel %vm2945, %v3027, %v3026
      %v3029 = vsub.s32 4, %v3005
      %v3030 = vsel %vm2945, %v3029, %v3005
      %v3031 = vsel %vm2944, %v1477, %v3028
      %v3032 = vsel %vm2944, 0, %v3030
      %v3033 = vcosq.f32.pop %v3031
      %v3034 = vsinq.f32.pop %v3031
      %vm3035 = vweird.f32 %v1477
      %v3036 = vadd.s32 %v3032, 3
      %v3037 = vand.u32 %v3036, 3
      %vm3038 = vcmp.lt.s32.totalorder %v3037, 2
      %vm3039 = vcmp.eq.s32.totalorder %v3037, 0
      %v3040 = vxor.u32 %v3034, 2147483648
      %v3041 = vsel %vm3039, %v3033, %v3040
      %vm3042 = vcmp.eq.s32.totalorder %v3037, 2
      %v3043 = vxor.u32 %v3033, 2147483648
      %v3044 = vsel %vm3042, %v3043, %v3034
      %v3045 = vsel %vm3038, %v3041, %v3044
      %v3046 = vsel %vm3035, nan, %v3045
      %v3047 = vand.u32 2147483647, %v1478
      %vm3048 = vcmp.le.f32.partialorder %v3047, 0.7853982
      %vm3049 = vcmp.lt.s32.totalorder %v1478, 0
      %v3050 = vand.u32 %v1478, 2139095040
      %v3051 = vshrl.u32 %v3050, 23
      %v3052 = vsub.s32 %v3051, 127
      %v3053 = vand.u32 2147483647, %v1478
      %v3054 = vand.u32 %v3053, 8388607
      %v3055 = vor.u32 %v3054, 8388608
      %v3056 = vsub.s32 0, %v3055
      %v3057 = vadd.s32 %v3052, 1
      %vm3058 = vcmp.gt.s32.totalorder %v3057, 0
      %v3059 = vsel %vm3058, %v3057, 0
      %v3060 = vshrl.u32 %v3059, 5
      %v3061 = vand.u32 %v3059, 31
      %v3062 = vsub.s32 32, %v3061
      %v3063 = vshrl.u32 683565275, %v3062
      %v3064 = vshll.u32 683565275, %v3061
      %v3065 = vshrl.u32 2475754826, %v3062
      %v3066 = vor.u32 %v3064, %v3065
      %v3067 = vshll.u32 2475754826, %v3061
      %v3068 = vshrl.u32 2131351028, %v3062
      %v3069 = vor.u32 %v3067, %v3068
      %v3070 = vshll.u32 2131351028, %v3061
      %v3071 = vshrl.u32 2102212464, %v3062
      %v3072 = vor.u32 %v3070, %v3071
      %v3073 = vshll.u32 2102212464, %v3061
      %v3074 = vshrl.u32 920167782, %v3062
      %v3075 = vor.u32 %v3073, %v3074
      %v3076 = vshll.u32 920167782, %v3061
      %v3077 = vshrl.u32 1326507024, %v3062
      %v3078 = vor.u32 %v3076, %v3077
      %vm3079 = vcmp.lt.s32.totalorder %v3060, 1
      %vm3080 = vcmp.lt.s32.totalorder %v3060, 2
      %vm3081 = vcmp.lt.s32.totalorder %v3060, 3
      %vm3082 = vcmp.lt.s32.totalorder %v3060, 4
      %v3083 = vsel %vm3079, %v3063, %v3066
      %v3084 = vsel %vm3082, %v3072, 2102212464
      %v3085 = vsel %vm3081, %v3069, %v3084
      %v3086 = vsel %vm3080, %v3083, %v3085
      %v3087 = vsel %vm3079, %v3066, %v3069
      %v3088 = vsel %vm3082, %v3075, 920167782
      %v3089 = vsel %vm3081, %v3072, %v3088
      %v3090 = vsel %vm3080, %v3087, %v3089
      %v3091 = vsel %vm3079, %v3069, %v3072
      %v3092 = vsel %vm3082, %v3078, 1326507024
      %v3093 = vsel %vm3081, %v3075, %v3092
      %v3094 = vsel %vm3080, %v3091, %v3093
      %v3095 = vshll.u32 %v3055, 8
      %v3096 = vmul.u32.u64.compose %v3095, %v3094
      %v3097 = vextract.low.u32 %v3096
      %v3098 = vextract.high.u32 %v3096
      %v3099 = vmul.u32.u64.compose %v3095, %v3090
      %v3100 = vextract.low.u32 %v3099
      %v3101 = vextract.high.u32 %v3099
      %v3102 = vmul.u32 %v3095, %v3086
      %v3103 = vadd.s32 %v3098, %v3100
      %vm3104 = vc.u32 %v3098, %v3100
      %v3105 = vadd.s32 %v3101, 1
      %v3106 = vsel %vm3104, %v3105, %v3101
      %v3107 = vadd.s32 %v3102, %v3106
      %v3108 = vadd.s32 %v3107, 536870912
      %v3109 = vshrl.u32 %v3108, 30
      %v3110 = vshll.u32 %v3109, 30
      %v3111 = vsub.s32 %v3107, %v3110
      %vm3112 = vcmp.lt.s32.totalorder %v3111, 0
      %v3113 = vsub.s32 0, %v3111
      %v3114 = vsel %vm3112, %v3113, %v3111
      %v3115 = vclz %v3114
      %v3116 = vsub.s32 %v3115, 2
      %vm3117 = vcmp.gt.s32.totalorder 0, %v3116
      %v3118 = vsel %vm3117, 0, %v3116
      %v3119 = vsub.s32 32, %v3118
      %v3120 = vshll.u32 %v3111, %v3118
      %v3121 = vshrl.u32 %v3103, %v3119
      %v3122 = vor.u32 %v3120, %v3121
      %v3123 = vsub.s32 4294967266, %v3118
      %v3124 = vadd.s32 %v3123, 127
      %v3125 = vshll.u32 %v3124, 23
      %v3126 = vor.u32 4788187, %v3125
      %v3127 = vand.u32 2147483647, %v3126
      %v3129 = vcvt.s32.f32 %v3122
      %v3130 = vmul.f32 %v3129, %v3127
      %v3131 = vxor.u32 %v3130, 2147483648
      %v3132 = vsel %vm3049, %v3131, %v3130
      %v3133 = vsub.s32 4, %v3109
      %v3134 = vsel %vm3049, %v3133, %v3109
      %v3135 = vsel %vm3048, %v1478, %v3132
      %v3136 = vsel %vm3048, 0, %v3134
      %v3137 = vcosq.f32.pop %v3135
      %v3138 = vsinq.f32.pop %v3135
      %vm3139 = vweird.f32 %v1478
      %v3140 = vadd.s32 %v3136, 3
      %v3141 = vand.u32 %v3140, 3
      %vm3142 = vcmp.lt.s32.totalorder %v3141, 2
      %vm3143 = vcmp.eq.s32.totalorder %v3141, 0
      %v3144 = vxor.u32 %v3138, 2147483648
      %v3145 = vsel %vm3143, %v3137, %v3144
      %vm3146 = vcmp.eq.s32.totalorder %v3141, 2
      %v3147 = vxor.u32 %v3137, 2147483648
      %v3148 = vsel %vm3146, %v3147, %v3138
      %v3149 = vsel %vm3142, %v3145, %v3148
      %v3150 = vsel %vm3139, nan, %v3149
      %v3151 = vmul.f32 %v1463, %v2422
      %v3152 = vmul.f32 %v1464, %v2526
      %v3153 = vmul.f32 %v1465, %v2630
      %v3154 = vmul.f32 %v1466, %v2734
      %v3155 = vmul.f32 %v1467, %v2838
      %v3156 = vmul.f32 %v1468, %v2942
      %v3157 = vmul.f32 %v1469, %v3046
      %v3158 = vmul.f32 %v1470, %v3150
      %3159 = vst [vmem:[%s385] sm:$0xff] %v3151
      %3160 = vst [vmem:[%s385 + $0x8] sm:$0xff] %v3152
      %3161 = vst [vmem:[%s385 + $0x10] sm:$0xff] %v3153
      %3162 = vst [vmem:[%s385 + $0x18] sm:$0xff] %v3154
      %3163 = vst [vmem:[%s385 + $0x20] sm:$0xff] %v3155
      %3164 = vst [vmem:[%s385 + $0x28] sm:$0xff] %v3156
      %3165 = vst [vmem:[%s385 + $0x30] sm:$0xff] %v3157
      %3166 = vst [vmem:[%s385 + $0x38] sm:$0xff] %v3158
      %s3167 = smul.u32 8, %s23
      %p3168 = scmp.lt.s32.totalorder %s22, 1
      %s3169 = scalar_select %p3168, %s22, 1
      %p3170 = scmp.lt.s32.totalorder %s3167, 7
      %s3171 = scalar_select %p3170, %s3167, 7
      %s3172 = smul.addr %s3169, 8
      %s3173 = sadd.s32 %s3171, %s3172
      %s3174 = smul.addr %s3173, 8
      %s3175 = scalar_lea.vmem %s5, %s3174
      %s3176 = smul.u32 8, %s23
      %p3177 = scmp.lt.s32.totalorder %s22, 1
      %s3178 = scalar_select %p3177, %s22, 1
      %p3179 = scmp.lt.s32.totalorder %s3176, 7
      %s3180 = scalar_select %p3179, %s3176, 7
      %s3181 = smul.addr %s3178, 8
      %s3182 = sadd.s32 %s3180, %s3181
      %s3183 = smul.addr %s3182, 8
      %s3184 = scalar_lea.vmem %s6, %s3183
      // Predicated region
      $region41: #{phase_afa_forward.3} parent=39 // pred_check
        %p3185 = pneg %p176
      $region42: #{phase_afa_forward.3} parent=39 // pred_check_branch
        %3187 = sbr.rel (%p3185) target = $region44
      $region43: #{phase_afa_forward.3} parent=39 // pred_region
        %s3188 = smul.u32 8, %s23
      $region44: #{phase_afa_forward.3} parent=39 // pred_fallthru
        _
      // Predicated region
      $region45: #{phase_afa_forward.3} parent=39 // pred_check
        %p3189 = pneg %p204
      $region46: #{phase_afa_forward.3} parent=39 // pred_check_branch
        %3191 = sbr.rel (%p3189) target = $region48
      $region47: #{phase_afa_forward.3} parent=39 // pred_region
        %s3192 = smul.u32 8, %s23
      $region48: #{phase_afa_forward.3} parent=39 // pred_fallthru
        _
    $region40: #{phase_afa_forward.3} parent=5 // pred_fallthru
      _
    %p3193 = scmp.le.s32.totalorder 2, %s13
    // Predicated region
    $region49: #{phase_afa_forward.3} parent=5 // pred_check
      %p3194 = pneg %p3193
    $region50: #{phase_afa_forward.3} parent=5 // pred_check_branch
      %3196 = sbr.rel (%p3194) target = $region52
    $region51: #{phase_afa_forward.3} parent=5 // pred_region
      %s3197 = ssub.s32 %s13, 2
      // Predicated region
      $region53: #{phase_afa_forward.3} parent=51 // pred_check
        %p3198 = pneg %p182
      $region54: #{phase_afa_forward.3} parent=51 // pred_check_branch
        %3200 = sbr.rel (%p3198) target = $region56
      $region55: #{phase_afa_forward.3} parent=51 // pred_region
        %s3201 = smul.u32 8, %s25
        %p3202 = scmp.lt.s32.totalorder %s24, 1
        %s3203 = scalar_select %p3202, %s24, 1
        %p3204 = scmp.lt.s32.totalorder %s3201, 7
        %s3205 = scalar_select %p3204, %s3201, 7
        %s3206 = smul.addr %s3203, 8
        %s3207 = sadd.s32 %s3205, %s3206
        %s3208 = smul.addr %s3207, 8
        %s3209 = scalar_lea.vmem %s5, %s3208
      $region56: #{phase_afa_forward.3} parent=51 // pred_fallthru
        _
      // Predicated region
      $region57: #{phase_afa_forward.3} parent=51 // pred_check
        %p3210 = pneg %p210
      $region58: #{phase_afa_forward.3} parent=51 // pred_check_branch
        %3212 = sbr.rel (%p3210) target = $region60
      $region59: #{phase_afa_forward.3} parent=51 // pred_region
        %s3213 = smul.u32 8, %s25
        %p3214 = scmp.lt.s32.totalorder %s24, 1
        %s3215 = scalar_select %p3214, %s24, 1
        %p3216 = scmp.lt.s32.totalorder %s3213, 7
        %s3217 = scalar_select %p3216, %s3213, 7
        %s3218 = smul.addr %s3215, 8
        %s3219 = sadd.s32 %s3217, %s3218
        %s3220 = smul.addr %s3219, 8
        %s3221 = scalar_lea.vmem %s6, %s3220
      $region60: #{phase_afa_forward.3} parent=51 // pred_fallthru
        _
    $region52: #{phase_afa_forward.3} parent=5 // pred_fallthru
      _
  $region6: #{phase_afa_forward.3} parent=0 // loop_footer
    %s17 = sadd.s32 1, %s13
  $region7: #{phase_afa_forward.3} parent=0 // loop_footer_branch
    %12 = sbr.rel target = $region3
  $region8: #{phase_afa_forward.3} parent=0 // loop_exit
    _

</llo_original>
